<compile_context>
chip_gen: v7x
topology: tpu7x:2x2x1
jax: 0.10.0
libtpu: 0.0.40
codegen_flags: <defaults>
</compile_context>

<pallas_src>
import functools
import math

import numpy as np
import jax
import jax.numpy as jnp
from jax.experimental import pallas as pl
from jax.experimental.pallas import tpu as pltpu

_BN_SCALE = 1.0 / math.sqrt(1.0 + 1e-5)   # eval-mode BatchNorm2d with default stats


# ----------------------------- fused Pallas kernel -----------------------------

def _embedding_block_kernel(x_ref, w1_ref, b1_ref, w2_ref, b2_ref, watt_ref,
                            pool_ref, interp_ref, shift_ref, gmax_ref, o_ref):
    f32 = jnp.float32
    bf16 = jnp.bfloat16
    cout = w2_ref.shape[1]
    hw = x_ref.shape[2]

    x = x_ref[0]                                   # (Cin, H*W), f32
    x_b = x.astype(bf16)

    # ---- conv1: 1x1 conv (+bias, BN scale folded) + ReLU : one MXU matmul ----
    h1 = jnp.dot(w1_ref[...], x_b, preferred_element_type=f32) + b1_ref[...]
    h1 = jnp.maximum(h1, 0.0)                      # (planes, H*W)

    # ---- attention branch (SpatialAttentionBlock_P on adaptive-avg-pooled x) ----
    l = jnp.dot(x, pool_ref[...], preferred_element_type=f32)        # (Cin, P*P)
    cam = jnp.mean(watt_ref[...] * l[None, :, :], axis=1)            # (classes, P*P)
    cam = cam - jnp.min(cam, axis=1, keepdims=True)
    cmax = jnp.max(cam, axis=1, keepdims=True)
    cam = cam / jnp.where(cmax > 0.0, cmax, 1.0)   # reference NaNs on constant CAM
    y1 = jnp.mean(cam, axis=0, keepdims=True)                        # (1, P*P)

    # ---- nearest-neighbour upsample (selection matmul) and modulation ----
    up = jnp.dot(y1, interp_ref[...], preferred_element_type=f32)    # (1, H*W)
    y = up * h1                                                      # (planes, H*W)

    # ---- shared 3x3 conv2 (+BN scale folded, ReLU): nine tap-shift matmuls ----
    def conv2(s_f32):
        s_b = s_f32.astype(bf16)
        acc = jnp.zeros((cout, hw), f32)
        for t in range(9):                                           # static unroll
            sh = jnp.dot(s_b, shift_ref[t], preferred_element_type=f32)
            acc = acc + jnp.dot(w2_ref[t], sh.astype(bf16),
                                preferred_element_type=f32)
        return jnp.maximum(acc + b2_ref[...], 0.0)

    s = x + y
    z = conv2(s)
    e = conv2(s + z)
    out = conv2(s + z + e)

    # ---- 2x2 stride-2 max-pool via 4 exact 0/1 selection matmuls; Dropout = id ----
    m = jnp.dot(out, gmax_ref[0], preferred_element_type=f32)
    for k in range(1, 4):
        m = jnp.maximum(m, jnp.dot(out, gmax_ref[k], preferred_element_type=f32))
    o_ref[0] = m.astype(o_ref.dtype)


# ----------------------------- host-side operator matrices -----------------------------

def _adaptive_pool_matrix(h, w, p):
    """(H*W, P*P) averaging matrix matching F.adaptive_avg_pool2d."""
    m = np.zeros((h * w, p * p), np.float32)
    for oi in range(p):
        hs, he = (oi * h) // p, -((-(oi + 1) * h) // p)
        for oj in range(p):
            ws, we = (oj * w) // p, -((-(oj + 1) * w) // p)
            val = 1.0 / ((he - hs) * (we - ws))
            for i in range(hs, he):
                for j in range(ws, we):
                    m[i * w + j, oi * p + oj] = val
    return m


def _nearest_interp_matrix(p, h, w):
    """(P*P, H*W) selection matrix matching F.interpolate(mode='nearest')."""
    m = np.zeros((p * p, h * w), np.float32)
    for i in range(h):
        si = min((i * p) // h, p - 1)
        for j in range(w):
            sj = min((j * p) // w, p - 1)
            m[si * p + sj, i * w + j] = 1.0
    return m


def _shift_matrices(h, w):
    """(9, H*W, H*W) zero-padded shift matrices for the 3x3 conv taps."""
    m = np.zeros((9, h * w, h * w), np.float32)
    for di in range(3):
        for dj in range(3):
            t = di * 3 + dj
            for i in range(h):
                si = i + di - 1
                if si < 0 or si >= h:
                    continue
                for j in range(w):
                    sj = j + dj - 1
                    if 0 <= sj < w:
                        m[t, si * w + sj, i * w + j] = 1.0
    return m


def _maxpool_gather_matrices(h, w):
    """(4, H*W, Ho*Wo) selection matrices for the 2x2/2 max-pool windows."""
    ho, wo = h // 2, w // 2
    m = np.zeros((4, h * w, ho * wo), np.float32)
    for di in range(2):
        for dj in range(2):
            k = di * 2 + dj
            for oi in range(ho):
                for oj in range(wo):
                    m[k, (2 * oi + di) * w + (2 * oj + dj), oi * wo + oj] = 1.0
    return m


# ----------------------------- wrapper -----------------------------

def _full_spec(shape):
    zeros = (0,) * len(shape)
    return pl.BlockSpec(shape, lambda *_: zeros)


def embedding_block_forward(x_nchw, params, w_att, *, pool_size, classes):
    """EmbeddingBlock.forward(x, w, pool_size, classes) — inference semantics."""
    n, cin, h, wd = x_nchw.shape
    planes = params['w1'].shape[0]
    assert cin == planes, "x + y in the reference requires inplanes == planes"
    hw = h * wd
    ho, wo = h // 2, wd // 2
    pp = pool_size * pool_size

    x = x_nchw.reshape(n, cin, hw).astype(jnp.float32)

    s = _BN_SCALE   # BN(eval, default stats) folded into conv weights/bias
    w1 = (params['w1'].reshape(planes, cin) * s).astype(jnp.bfloat16)
    b1 = (params['b1'] * s).reshape(planes, 1).astype(jnp.float32)
    w2 = (jnp.transpose(params['w2'], (2, 3, 0, 1)).reshape(9, planes, cin) * s
          ).astype(jnp.bfloat16)
    b2 = (params['b2'] * s).reshape(planes, 1).astype(jnp.float32)
    watt = w_att.reshape(classes, cin, pp).astype(jnp.float32)

    pool_m = jnp.asarray(_adaptive_pool_matrix(h, wd, pool_size))          # f32
    interp_m = jnp.asarray(_nearest_interp_matrix(pool_size, h, wd))       # f32
    shift_m = jnp.asarray(_shift_matrices(h, wd)).astype(jnp.bfloat16)     # bf16
    gmax_m = jnp.asarray(_maxpool_gather_matrices(h, wd))                  # f32

    grid_spec = pltpu.PrefetchScalarGridSpec(
        num_scalar_prefetch=0,
        grid=(n,),
        in_specs=[
            pl.BlockSpec((1, cin, hw), lambda b: (b, 0, 0)),   # x (per-batch block)
            _full_spec((planes, cin)),                         # w1
            _full_spec((planes, 1)),                           # b1
            _full_spec((9, planes, cin)),                      # w2 taps
            _full_spec((planes, 1)),                           # b2
            _full_spec((classes, cin, pp)),                    # attention weight
            _full_spec((hw, pp)),                              # adaptive-avg-pool matrix
            _full_spec((pp, hw)),                              # nearest-interp matrix
            _full_spec((9, hw, hw)),                           # conv tap shifts
            _full_spec((4, hw, ho * wo)),                      # maxpool selections
        ],
        out_specs=pl.BlockSpec((1, planes, ho * wo), lambda b: (b, 0, 0)),
    )

    out = pl.pallas_call(
        _embedding_block_kernel,
        out_shape=jax.ShapeDtypeStruct((n, planes, ho * wo), jnp.float32),
        grid_spec=grid_spec,
        compiler_params=pltpu.CompilerParams(
            dimension_semantics=("parallel",)),
    )(x, w1, b1, w2, b2, watt, pool_m, interp_m, shift_m, gmax_m)

    return out.reshape(n, planes, ho, wo)


# ----------------------------- demo -----------------------------

if __name__ == "__main__":
    key = jax.random.PRNGKey(0)
    k1, k2, k3, k4, k5, k6 = jax.random.split(key, 6)

    batch, planes, h, w = 2, 8, 16, 16
    pool_size, classes = 4, 3

    def conv_w(k, cout, cin, kh, kw):
        std = math.sqrt(2.0 / (cout * kh * kw))   # kaiming_normal_, fan_out
        return std * jax.random.normal(k, (cout, cin, kh, kw), jnp.float32)

    params = {
        'w1': conv_w(k1, planes, planes, 1, 1),
        'b1': 0.1 * jax.random.normal(k2, (planes,), jnp.float32),
        'w2': conv_w(k3, planes, planes, 3, 3),
        'b2': 0.1 * jax.random.normal(k4, (planes,), jnp.float32),
    }
    w_att = 0.01 * jax.random.normal(
        k5, (classes, planes * pool_size * pool_size), jnp.float32)
    x = jax.random.normal(k6, (batch, planes, h, w), jnp.float32)

    fwd = jax.jit(functools.partial(embedding_block_forward,
                                    pool_size=pool_size, classes=classes))
    out = fwd(x, params, w_att)
    jax.block_until_ready(out)
    assert out.shape == (batch, planes, h // 2, w // 2)
    print("KERNEL_OK")
</pallas_src>

<mosaic_0001>
module attributes {stable_mosaic.version = 11 : i64} {
  func.func @_embedding_block_kernel(%arg0: i32, %arg1: memref<1x8x256xf32, #tpu.memory_space<vmem>>, %arg2: memref<8x8xbf16, #tpu.memory_space<vmem>>, %arg3: memref<8x1xf32, #tpu.memory_space<vmem>>, %arg4: memref<9x8x8xbf16, #tpu.memory_space<vmem>>, %arg5: memref<8x1xf32, #tpu.memory_space<vmem>>, %arg6: memref<3x8x16xf32, #tpu.memory_space<vmem>>, %arg7: memref<256x16xf32, #tpu.memory_space<vmem>>, %arg8: memref<16x256xf32, #tpu.memory_space<vmem>>, %arg9: memref<9x256x256xbf16, #tpu.memory_space<vmem>>, %arg10: memref<4x256x64xf32, #tpu.memory_space<vmem>>, %arg11: memref<1x8x64xf32, #tpu.memory_space<vmem>>) attributes {dimension_semantics = [#tpu.dimension_semantics<parallel>], iteration_bounds = array<i64: 2>, scalar_prefetch = 0 : i64, scratch_operands = 0 : i64, tpu.core_type = #tpu.core_type<tc>, window_params = [{transform_indices = @transform_0, window_bounds = array<i64: 1, 8, 256>}, {pipeline_mode = #tpu.pipeline_mode<synchronous>, transform_indices = @transform_1, window_bounds = array<i64: 8, 8>}, {pipeline_mode = #tpu.pipeline_mode<synchronous>, transform_indices = @transform_2, window_bounds = array<i64: 8, 1>}, {pipeline_mode = #tpu.pipeline_mode<synchronous>, transform_indices = @transform_3, window_bounds = array<i64: 9, 8, 8>}, {pipeline_mode = #tpu.pipeline_mode<synchronous>, transform_indices = @transform_4, window_bounds = array<i64: 8, 1>}, {pipeline_mode = #tpu.pipeline_mode<synchronous>, transform_indices = @transform_5, window_bounds = array<i64: 3, 8, 16>}, {pipeline_mode = #tpu.pipeline_mode<synchronous>, transform_indices = @transform_6, window_bounds = array<i64: 256, 16>}, {pipeline_mode = #tpu.pipeline_mode<synchronous>, transform_indices = @transform_7, window_bounds = array<i64: 16, 256>}, {pipeline_mode = #tpu.pipeline_mode<synchronous>, transform_indices = @transform_8, window_bounds = array<i64: 9, 256, 256>}, {pipeline_mode = #tpu.pipeline_mode<synchronous>, transform_indices = @transform_9, window_bounds = array<i64: 4, 256, 64>}, {transform_indices = @transform_10, window_bounds = array<i64: 1, 8, 64>}]} {
    %c0 = arith.constant 0 : index
    %c0_0 = arith.constant 0 : index
    %c0_1 = arith.constant 0 : index
    %0 = vector.load %arg1[%c0, %c0_0, %c0_1] : memref<1x8x256xf32, #tpu.memory_space<vmem>>, vector<1x8x256xf32>
    %1 = vector.shape_cast %0 : vector<1x8x256xf32> to vector<8x256xf32>
    %2 = arith.truncf %1 : vector<8x256xf32> to vector<8x256xbf16>
    %c0_2 = arith.constant 0 : index
    %c0_3 = arith.constant 0 : index
    %3 = vector.load %arg2[%c0_2, %c0_3] : memref<8x8xbf16, #tpu.memory_space<vmem>>, vector<8x8xbf16>
    %cst = arith.constant dense<0.000000e+00> : vector<8x256xf32>
    %4 = tpu.matmul %3, %2, %cst {dimension_numbers = #tpu.dot_dimension_numbers<[1], [0], [0], [1], [0, 0, 1, 1], [], []>} : vector<8x8xbf16>, vector<8x256xbf16>, vector<8x256xf32> -> vector<8x256xf32>
    %c0_4 = arith.constant 0 : index
    %c0_5 = arith.constant 0 : index
    %5 = vector.load %arg3[%c0_4, %c0_5] : memref<8x1xf32, #tpu.memory_space<vmem>>, vector<8x1xf32>
    %6 = vector.broadcast %5 : vector<8x1xf32> to vector<8x256xf32>
    %7 = arith.addf %4, %6 : vector<8x256xf32>
    %cst_6 = arith.constant 0.000000e+00 : f32
    %8 = vector.broadcast %cst_6 : f32 to vector<8x256xf32>
    %9 = arith.maximumf %7, %8 : vector<8x256xf32>
    %c0_7 = arith.constant 0 : index
    %c0_8 = arith.constant 0 : index
    %10 = vector.load %arg7[%c0_7, %c0_8] : memref<256x16xf32, #tpu.memory_space<vmem>>, vector<256x16xf32>
    %cst_9 = arith.constant dense<0.000000e+00> : vector<8x16xf32>
    %11 = tpu.matmul %1, %10, %cst_9 {dimension_numbers = #tpu.dot_dimension_numbers<[1], [0], [0], [1], [0, 0, 1, 1], [], []>} : vector<8x256xf32>, vector<256x16xf32>, vector<8x16xf32> -> vector<8x16xf32>
    %c0_10 = arith.constant 0 : index
    %c0_11 = arith.constant 0 : index
    %c0_12 = arith.constant 0 : index
    %12 = vector.load %arg6[%c0_10, %c0_11, %c0_12] : memref<3x8x16xf32, #tpu.memory_space<vmem>>, vector<3x8x16xf32>
    %13 = vector.shape_cast %11 : vector<8x16xf32> to vector<1x8x16xf32>
    %14 = vector.broadcast %13 : vector<1x8x16xf32> to vector<3x8x16xf32>
    %15 = arith.mulf %12, %14 : vector<3x8x16xf32>
    %cst_13 = arith.constant dense<0.000000e+00> : vector<3x16xf32>
    %16 = vector.multi_reduction <add>, %15, %cst_13 [1] : vector<3x8x16xf32> to vector<3x16xf32>
    %cst_14 = arith.constant 8.000000e+00 : f32
    %17 = vector.broadcast %cst_14 : f32 to vector<3x16xf32>
    %18 = arith.divf %16, %17 : vector<3x16xf32>
    %cst_15 = arith.constant dense<0x7F800000> : vector<3xf32>
    %19 = vector.multi_reduction <minimumf>, %18, %cst_15 [1] : vector<3x16xf32> to vector<3xf32>
    %20 = vector.shape_cast %19 : vector<3xf32> to vector<3x1xf32>
    %21 = vector.broadcast %20 : vector<3x1xf32> to vector<3x16xf32>
    %22 = arith.subf %18, %21 : vector<3x16xf32>
    %cst_16 = arith.constant dense<0xFF800000> : vector<3xf32>
    %23 = vector.multi_reduction <maximumf>, %22, %cst_16 [1] : vector<3x16xf32> to vector<3xf32>
    %24 = vector.shape_cast %23 : vector<3xf32> to vector<3x1xf32>
    %cst_17 = arith.constant 0.000000e+00 : f32
    %25 = vector.broadcast %cst_17 : f32 to vector<3x1xf32>
    %26 = arith.cmpf ogt, %24, %25 : vector<3x1xf32>
    %cst_18 = arith.constant 1.000000e+00 : f32
    %27 = vector.broadcast %cst_18 : f32 to vector<3x1xf32>
    %28 = arith.select %26, %24, %27 : vector<3x1xi1>, vector<3x1xf32>
    %29 = vector.broadcast %28 : vector<3x1xf32> to vector<3x16xf32>
    %30 = arith.divf %22, %29 : vector<3x16xf32>
    %cst_19 = arith.constant dense<0.000000e+00> : vector<16xf32>
    %31 = vector.multi_reduction <add>, %30, %cst_19 [0] : vector<3x16xf32> to vector<16xf32>
    %32 = vector.shape_cast %31 : vector<16xf32> to vector<1x16xf32>
    %cst_20 = arith.constant 3.000000e+00 : f32
    %33 = vector.broadcast %cst_20 : f32 to vector<1x16xf32>
    %34 = arith.divf %32, %33 : vector<1x16xf32>
    %c0_21 = arith.constant 0 : index
    %c0_22 = arith.constant 0 : index
    %35 = vector.load %arg8[%c0_21, %c0_22] : memref<16x256xf32, #tpu.memory_space<vmem>>, vector<16x256xf32>
    %cst_23 = arith.constant dense<0.000000e+00> : vector<1x256xf32>
    %36 = tpu.matmul %34, %35, %cst_23 {dimension_numbers = #tpu.dot_dimension_numbers<[1], [0], [0], [1], [0, 0, 1, 1], [], []>} : vector<1x16xf32>, vector<16x256xf32>, vector<1x256xf32> -> vector<1x256xf32>
    %37 = vector.broadcast %36 : vector<1x256xf32> to vector<8x256xf32>
    %38 = arith.mulf %37, %9 : vector<8x256xf32>
    %39 = arith.addf %1, %38 : vector<8x256xf32>
    %40 = arith.truncf %39 : vector<8x256xf32> to vector<8x256xbf16>
    %cst_24 = arith.constant 0.000000e+00 : f32
    %41 = vector.broadcast %cst_24 : f32 to vector<8x256xf32>
    %c0_25 = arith.constant 0 : index
    %c0_26 = arith.constant 0 : index
    %c0_27 = arith.constant 0 : index
    %42 = vector.load %arg9[%c0_25, %c0_26, %c0_27] : memref<9x256x256xbf16, #tpu.memory_space<vmem>>, vector<1x256x256xbf16>
    %43 = vector.shape_cast %42 : vector<1x256x256xbf16> to vector<256x256xbf16>
    %cst_28 = arith.constant dense<0.000000e+00> : vector<8x256xf32>
    %44 = tpu.matmul %40, %43, %cst_28 {dimension_numbers = #tpu.dot_dimension_numbers<[1], [0], [0], [1], [0, 0, 1, 1], [], []>} : vector<8x256xbf16>, vector<256x256xbf16>, vector<8x256xf32> -> vector<8x256xf32>
    %c0_29 = arith.constant 0 : index
    %c0_30 = arith.constant 0 : index
    %c0_31 = arith.constant 0 : index
    %45 = vector.load %arg4[%c0_29, %c0_30, %c0_31] : memref<9x8x8xbf16, #tpu.memory_space<vmem>>, vector<1x8x8xbf16>
    %46 = vector.shape_cast %45 : vector<1x8x8xbf16> to vector<8x8xbf16>
    %47 = arith.truncf %44 : vector<8x256xf32> to vector<8x256xbf16>
    %cst_32 = arith.constant dense<0.000000e+00> : vector<8x256xf32>
    %48 = tpu.matmul %46, %47, %cst_32 {dimension_numbers = #tpu.dot_dimension_numbers<[1], [0], [0], [1], [0, 0, 1, 1], [], []>} : vector<8x8xbf16>, vector<8x256xbf16>, vector<8x256xf32> -> vector<8x256xf32>
    %49 = arith.addf %41, %48 : vector<8x256xf32>
    %c1 = arith.constant 1 : index
    %c0_33 = arith.constant 0 : index
    %c0_34 = arith.constant 0 : index
    %50 = vector.load %arg9[%c1, %c0_33, %c0_34] : memref<9x256x256xbf16, #tpu.memory_space<vmem>>, vector<1x256x256xbf16>
    %51 = vector.shape_cast %50 : vector<1x256x256xbf16> to vector<256x256xbf16>
    %cst_35 = arith.constant dense<0.000000e+00> : vector<8x256xf32>
    %52 = tpu.matmul %40, %51, %cst_35 {dimension_numbers = #tpu.dot_dimension_numbers<[1], [0], [0], [1], [0, 0, 1, 1], [], []>} : vector<8x256xbf16>, vector<256x256xbf16>, vector<8x256xf32> -> vector<8x256xf32>
    %c1_36 = arith.constant 1 : index
    %c0_37 = arith.constant 0 : index
    %c0_38 = arith.constant 0 : index
    %53 = vector.load %arg4[%c1_36, %c0_37, %c0_38] : memref<9x8x8xbf16, #tpu.memory_space<vmem>>, vector<1x8x8xbf16>
    %54 = vector.shape_cast %53 : vector<1x8x8xbf16> to vector<8x8xbf16>
    %55 = arith.truncf %52 : vector<8x256xf32> to vector<8x256xbf16>
    %cst_39 = arith.constant dense<0.000000e+00> : vector<8x256xf32>
    %56 = tpu.matmul %54, %55, %cst_39 {dimension_numbers = #tpu.dot_dimension_numbers<[1], [0], [0], [1], [0, 0, 1, 1], [], []>} : vector<8x8xbf16>, vector<8x256xbf16>, vector<8x256xf32> -> vector<8x256xf32>
    %57 = arith.addf %49, %56 : vector<8x256xf32>
    %c2 = arith.constant 2 : index
    %c0_40 = arith.constant 0 : index
    %c0_41 = arith.constant 0 : index
    %58 = vector.load %arg9[%c2, %c0_40, %c0_41] : memref<9x256x256xbf16, #tpu.memory_space<vmem>>, vector<1x256x256xbf16>
    %59 = vector.shape_cast %58 : vector<1x256x256xbf16> to vector<256x256xbf16>
    %cst_42 = arith.constant dense<0.000000e+00> : vector<8x256xf32>
    %60 = tpu.matmul %40, %59, %cst_42 {dimension_numbers = #tpu.dot_dimension_numbers<[1], [0], [0], [1], [0, 0, 1, 1], [], []>} : vector<8x256xbf16>, vector<256x256xbf16>, vector<8x256xf32> -> vector<8x256xf32>
    %c2_43 = arith.constant 2 : index
    %c0_44 = arith.constant 0 : index
    %c0_45 = arith.constant 0 : index
    %61 = vector.load %arg4[%c2_43, %c0_44, %c0_45] : memref<9x8x8xbf16, #tpu.memory_space<vmem>>, vector<1x8x8xbf16>
    %62 = vector.shape_cast %61 : vector<1x8x8xbf16> to vector<8x8xbf16>
    %63 = arith.truncf %60 : vector<8x256xf32> to vector<8x256xbf16>
    %cst_46 = arith.constant dense<0.000000e+00> : vector<8x256xf32>
    %64 = tpu.matmul %62, %63, %cst_46 {dimension_numbers = #tpu.dot_dimension_numbers<[1], [0], [0], [1], [0, 0, 1, 1], [], []>} : vector<8x8xbf16>, vector<8x256xbf16>, vector<8x256xf32> -> vector<8x256xf32>
    %65 = arith.addf %57, %64 : vector<8x256xf32>
    %c3 = arith.constant 3 : index
    %c0_47 = arith.constant 0 : index
    %c0_48 = arith.constant 0 : index
    %66 = vector.load %arg9[%c3, %c0_47, %c0_48] : memref<9x256x256xbf16, #tpu.memory_space<vmem>>, vector<1x256x256xbf16>
    %67 = vector.shape_cast %66 : vector<1x256x256xbf16> to vector<256x256xbf16>
    %cst_49 = arith.constant dense<0.000000e+00> : vector<8x256xf32>
    %68 = tpu.matmul %40, %67, %cst_49 {dimension_numbers = #tpu.dot_dimension_numbers<[1], [0], [0], [1], [0, 0, 1, 1], [], []>} : vector<8x256xbf16>, vector<256x256xbf16>, vector<8x256xf32> -> vector<8x256xf32>
    %c3_50 = arith.constant 3 : index
    %c0_51 = arith.constant 0 : index
    %c0_52 = arith.constant 0 : index
    %69 = vector.load %arg4[%c3_50, %c0_51, %c0_52] : memref<9x8x8xbf16, #tpu.memory_space<vmem>>, vector<1x8x8xbf16>
    %70 = vector.shape_cast %69 : vector<1x8x8xbf16> to vector<8x8xbf16>
    %71 = arith.truncf %68 : vector<8x256xf32> to vector<8x256xbf16>
    %cst_53 = arith.constant dense<0.000000e+00> : vector<8x256xf32>
    %72 = tpu.matmul %70, %71, %cst_53 {dimension_numbers = #tpu.dot_dimension_numbers<[1], [0], [0], [1], [0, 0, 1, 1], [], []>} : vector<8x8xbf16>, vector<8x256xbf16>, vector<8x256xf32> -> vector<8x256xf32>
    %73 = arith.addf %65, %72 : vector<8x256xf32>
    %c4 = arith.constant 4 : index
    %c0_54 = arith.constant 0 : index
    %c0_55 = arith.constant 0 : index
    %74 = vector.load %arg9[%c4, %c0_54, %c0_55] : memref<9x256x256xbf16, #tpu.memory_space<vmem>>, vector<1x256x256xbf16>
    %75 = vector.shape_cast %74 : vector<1x256x256xbf16> to vector<256x256xbf16>
    %cst_56 = arith.constant dense<0.000000e+00> : vector<8x256xf32>
    %76 = tpu.matmul %40, %75, %cst_56 {dimension_numbers = #tpu.dot_dimension_numbers<[1], [0], [0], [1], [0, 0, 1, 1], [], []>} : vector<8x256xbf16>, vector<256x256xbf16>, vector<8x256xf32> -> vector<8x256xf32>
    %c4_57 = arith.constant 4 : index
    %c0_58 = arith.constant 0 : index
    %c0_59 = arith.constant 0 : index
    %77 = vector.load %arg4[%c4_57, %c0_58, %c0_59] : memref<9x8x8xbf16, #tpu.memory_space<vmem>>, vector<1x8x8xbf16>
    %78 = vector.shape_cast %77 : vector<1x8x8xbf16> to vector<8x8xbf16>
    %79 = arith.truncf %76 : vector<8x256xf32> to vector<8x256xbf16>
    %cst_60 = arith.constant dense<0.000000e+00> : vector<8x256xf32>
    %80 = tpu.matmul %78, %79, %cst_60 {dimension_numbers = #tpu.dot_dimension_numbers<[1], [0], [0], [1], [0, 0, 1, 1], [], []>} : vector<8x8xbf16>, vector<8x256xbf16>, vector<8x256xf32> -> vector<8x256xf32>
    %81 = arith.addf %73, %80 : vector<8x256xf32>
    %c5 = arith.constant 5 : index
    %c0_61 = arith.constant 0 : index
    %c0_62 = arith.constant 0 : index
    %82 = vector.load %arg9[%c5, %c0_61, %c0_62] : memref<9x256x256xbf16, #tpu.memory_space<vmem>>, vector<1x256x256xbf16>
    %83 = vector.shape_cast %82 : vector<1x256x256xbf16> to vector<256x256xbf16>
    %cst_63 = arith.constant dense<0.000000e+00> : vector<8x256xf32>
    %84 = tpu.matmul %40, %83, %cst_63 {dimension_numbers = #tpu.dot_dimension_numbers<[1], [0], [0], [1], [0, 0, 1, 1], [], []>} : vector<8x256xbf16>, vector<256x256xbf16>, vector<8x256xf32> -> vector<8x256xf32>
    %c5_64 = arith.constant 5 : index
    %c0_65 = arith.constant 0 : index
    %c0_66 = arith.constant 0 : index
    %85 = vector.load %arg4[%c5_64, %c0_65, %c0_66] : memref<9x8x8xbf16, #tpu.memory_space<vmem>>, vector<1x8x8xbf16>
    %86 = vector.shape_cast %85 : vector<1x8x8xbf16> to vector<8x8xbf16>
    %87 = arith.truncf %84 : vector<8x256xf32> to vector<8x256xbf16>
    %cst_67 = arith.constant dense<0.000000e+00> : vector<8x256xf32>
    %88 = tpu.matmul %86, %87, %cst_67 {dimension_numbers = #tpu.dot_dimension_numbers<[1], [0], [0], [1], [0, 0, 1, 1], [], []>} : vector<8x8xbf16>, vector<8x256xbf16>, vector<8x256xf32> -> vector<8x256xf32>
    %89 = arith.addf %81, %88 : vector<8x256xf32>
    %c6 = arith.constant 6 : index
    %c0_68 = arith.constant 0 : index
    %c0_69 = arith.constant 0 : index
    %90 = vector.load %arg9[%c6, %c0_68, %c0_69] : memref<9x256x256xbf16, #tpu.memory_space<vmem>>, vector<1x256x256xbf16>
    %91 = vector.shape_cast %90 : vector<1x256x256xbf16> to vector<256x256xbf16>
    %cst_70 = arith.constant dense<0.000000e+00> : vector<8x256xf32>
    %92 = tpu.matmul %40, %91, %cst_70 {dimension_numbers = #tpu.dot_dimension_numbers<[1], [0], [0], [1], [0, 0, 1, 1], [], []>} : vector<8x256xbf16>, vector<256x256xbf16>, vector<8x256xf32> -> vector<8x256xf32>
    %c6_71 = arith.constant 6 : index
    %c0_72 = arith.constant 0 : index
    %c0_73 = arith.constant 0 : index
    %93 = vector.load %arg4[%c6_71, %c0_72, %c0_73] : memref<9x8x8xbf16, #tpu.memory_space<vmem>>, vector<1x8x8xbf16>
    %94 = vector.shape_cast %93 : vector<1x8x8xbf16> to vector<8x8xbf16>
    %95 = arith.truncf %92 : vector<8x256xf32> to vector<8x256xbf16>
    %cst_74 = arith.constant dense<0.000000e+00> : vector<8x256xf32>
    %96 = tpu.matmul %94, %95, %cst_74 {dimension_numbers = #tpu.dot_dimension_numbers<[1], [0], [0], [1], [0, 0, 1, 1], [], []>} : vector<8x8xbf16>, vector<8x256xbf16>, vector<8x256xf32> -> vector<8x256xf32>
    %97 = arith.addf %89, %96 : vector<8x256xf32>
    %c7 = arith.constant 7 : index
    %c0_75 = arith.constant 0 : index
    %c0_76 = arith.constant 0 : index
    %98 = vector.load %arg9[%c7, %c0_75, %c0_76] : memref<9x256x256xbf16, #tpu.memory_space<vmem>>, vector<1x256x256xbf16>
    %99 = vector.shape_cast %98 : vector<1x256x256xbf16> to vector<256x256xbf16>
    %cst_77 = arith.constant dense<0.000000e+00> : vector<8x256xf32>
    %100 = tpu.matmul %40, %99, %cst_77 {dimension_numbers = #tpu.dot_dimension_numbers<[1], [0], [0], [1], [0, 0, 1, 1], [], []>} : vector<8x256xbf16>, vector<256x256xbf16>, vector<8x256xf32> -> vector<8x256xf32>
    %c7_78 = arith.constant 7 : index
    %c0_79 = arith.constant 0 : index
    %c0_80 = arith.constant 0 : index
    %101 = vector.load %arg4[%c7_78, %c0_79, %c0_80] : memref<9x8x8xbf16, #tpu.memory_space<vmem>>, vector<1x8x8xbf16>
    %102 = vector.shape_cast %101 : vector<1x8x8xbf16> to vector<8x8xbf16>
    %103 = arith.truncf %100 : vector<8x256xf32> to vector<8x256xbf16>
    %cst_81 = arith.constant dense<0.000000e+00> : vector<8x256xf32>
    %104 = tpu.matmul %102, %103, %cst_81 {dimension_numbers = #tpu.dot_dimension_numbers<[1], [0], [0], [1], [0, 0, 1, 1], [], []>} : vector<8x8xbf16>, vector<8x256xbf16>, vector<8x256xf32> -> vector<8x256xf32>
    %105 = arith.addf %97, %104 : vector<8x256xf32>
    %c8 = arith.constant 8 : index
    %c0_82 = arith.constant 0 : index
    %c0_83 = arith.constant 0 : index
    %106 = vector.load %arg9[%c8, %c0_82, %c0_83] : memref<9x256x256xbf16, #tpu.memory_space<vmem>>, vector<1x256x256xbf16>
    %107 = vector.shape_cast %106 : vector<1x256x256xbf16> to vector<256x256xbf16>
    %cst_84 = arith.constant dense<0.000000e+00> : vector<8x256xf32>
    %108 = tpu.matmul %40, %107, %cst_84 {dimension_numbers = #tpu.dot_dimension_numbers<[1], [0], [0], [1], [0, 0, 1, 1], [], []>} : vector<8x256xbf16>, vector<256x256xbf16>, vector<8x256xf32> -> vector<8x256xf32>
    %c8_85 = arith.constant 8 : index
    %c0_86 = arith.constant 0 : index
    %c0_87 = arith.constant 0 : index
    %109 = vector.load %arg4[%c8_85, %c0_86, %c0_87] : memref<9x8x8xbf16, #tpu.memory_space<vmem>>, vector<1x8x8xbf16>
    %110 = vector.shape_cast %109 : vector<1x8x8xbf16> to vector<8x8xbf16>
    %111 = arith.truncf %108 : vector<8x256xf32> to vector<8x256xbf16>
    %cst_88 = arith.constant dense<0.000000e+00> : vector<8x256xf32>
    %112 = tpu.matmul %110, %111, %cst_88 {dimension_numbers = #tpu.dot_dimension_numbers<[1], [0], [0], [1], [0, 0, 1, 1], [], []>} : vector<8x8xbf16>, vector<8x256xbf16>, vector<8x256xf32> -> vector<8x256xf32>
    %113 = arith.addf %105, %112 : vector<8x256xf32>
    %c0_89 = arith.constant 0 : index
    %c0_90 = arith.constant 0 : index
    %114 = vector.load %arg5[%c0_89, %c0_90] : memref<8x1xf32, #tpu.memory_space<vmem>>, vector<8x1xf32>
    %115 = vector.broadcast %114 : vector<8x1xf32> to vector<8x256xf32>
    %116 = arith.addf %113, %115 : vector<8x256xf32>
    %cst_91 = arith.constant 0.000000e+00 : f32
    %117 = vector.broadcast %cst_91 : f32 to vector<8x256xf32>
    %118 = arith.maximumf %116, %117 : vector<8x256xf32>
    %119 = arith.addf %39, %118 : vector<8x256xf32>
    %120 = arith.truncf %119 : vector<8x256xf32> to vector<8x256xbf16>
    %cst_92 = arith.constant 0.000000e+00 : f32
    %121 = vector.broadcast %cst_92 : f32 to vector<8x256xf32>
    %c0_93 = arith.constant 0 : index
    %c0_94 = arith.constant 0 : index
    %c0_95 = arith.constant 0 : index
    %122 = vector.load %arg9[%c0_93, %c0_94, %c0_95] : memref<9x256x256xbf16, #tpu.memory_space<vmem>>, vector<1x256x256xbf16>
    %123 = vector.shape_cast %122 : vector<1x256x256xbf16> to vector<256x256xbf16>
    %cst_96 = arith.constant dense<0.000000e+00> : vector<8x256xf32>
    %124 = tpu.matmul %120, %123, %cst_96 {dimension_numbers = #tpu.dot_dimension_numbers<[1], [0], [0], [1], [0, 0, 1, 1], [], []>} : vector<8x256xbf16>, vector<256x256xbf16>, vector<8x256xf32> -> vector<8x256xf32>
    %c0_97 = arith.constant 0 : index
    %c0_98 = arith.constant 0 : index
    %c0_99 = arith.constant 0 : index
    %125 = vector.load %arg4[%c0_97, %c0_98, %c0_99] : memref<9x8x8xbf16, #tpu.memory_space<vmem>>, vector<1x8x8xbf16>
    %126 = vector.shape_cast %125 : vector<1x8x8xbf16> to vector<8x8xbf16>
    %127 = arith.truncf %124 : vector<8x256xf32> to vector<8x256xbf16>
    %cst_100 = arith.constant dense<0.000000e+00> : vector<8x256xf32>
    %128 = tpu.matmul %126, %127, %cst_100 {dimension_numbers = #tpu.dot_dimension_numbers<[1], [0], [0], [1], [0, 0, 1, 1], [], []>} : vector<8x8xbf16>, vector<8x256xbf16>, vector<8x256xf32> -> vector<8x256xf32>
    %129 = arith.addf %121, %128 : vector<8x256xf32>
    %c1_101 = arith.constant 1 : index
    %c0_102 = arith.constant 0 : index
    %c0_103 = arith.constant 0 : index
    %130 = vector.load %arg9[%c1_101, %c0_102, %c0_103] : memref<9x256x256xbf16, #tpu.memory_space<vmem>>, vector<1x256x256xbf16>
    %131 = vector.shape_cast %130 : vector<1x256x256xbf16> to vector<256x256xbf16>
    %cst_104 = arith.constant dense<0.000000e+00> : vector<8x256xf32>
    %132 = tpu.matmul %120, %131, %cst_104 {dimension_numbers = #tpu.dot_dimension_numbers<[1], [0], [0], [1], [0, 0, 1, 1], [], []>} : vector<8x256xbf16>, vector<256x256xbf16>, vector<8x256xf32> -> vector<8x256xf32>
    %c1_105 = arith.constant 1 : index
    %c0_106 = arith.constant 0 : index
    %c0_107 = arith.constant 0 : index
    %133 = vector.load %arg4[%c1_105, %c0_106, %c0_107] : memref<9x8x8xbf16, #tpu.memory_space<vmem>>, vector<1x8x8xbf16>
    %134 = vector.shape_cast %133 : vector<1x8x8xbf16> to vector<8x8xbf16>
    %135 = arith.truncf %132 : vector<8x256xf32> to vector<8x256xbf16>
    %cst_108 = arith.constant dense<0.000000e+00> : vector<8x256xf32>
    %136 = tpu.matmul %134, %135, %cst_108 {dimension_numbers = #tpu.dot_dimension_numbers<[1], [0], [0], [1], [0, 0, 1, 1], [], []>} : vector<8x8xbf16>, vector<8x256xbf16>, vector<8x256xf32> -> vector<8x256xf32>
    %137 = arith.addf %129, %136 : vector<8x256xf32>
    %c2_109 = arith.constant 2 : index
    %c0_110 = arith.constant 0 : index
    %c0_111 = arith.constant 0 : index
    %138 = vector.load %arg9[%c2_109, %c0_110, %c0_111] : memref<9x256x256xbf16, #tpu.memory_space<vmem>>, vector<1x256x256xbf16>
    %139 = vector.shape_cast %138 : vector<1x256x256xbf16> to vector<256x256xbf16>
    %cst_112 = arith.constant dense<0.000000e+00> : vector<8x256xf32>
    %140 = tpu.matmul %120, %139, %cst_112 {dimension_numbers = #tpu.dot_dimension_numbers<[1], [0], [0], [1], [0, 0, 1, 1], [], []>} : vector<8x256xbf16>, vector<256x256xbf16>, vector<8x256xf32> -> vector<8x256xf32>
    %c2_113 = arith.constant 2 : index
    %c0_114 = arith.constant 0 : index
    %c0_115 = arith.constant 0 : index
    %141 = vector.load %arg4[%c2_113, %c0_114, %c0_115] : memref<9x8x8xbf16, #tpu.memory_space<vmem>>, vector<1x8x8xbf16>
    %142 = vector.shape_cast %141 : vector<1x8x8xbf16> to vector<8x8xbf16>
    %143 = arith.truncf %140 : vector<8x256xf32> to vector<8x256xbf16>
    %cst_116 = arith.constant dense<0.000000e+00> : vector<8x256xf32>
    %144 = tpu.matmul %142, %143, %cst_116 {dimension_numbers = #tpu.dot_dimension_numbers<[1], [0], [0], [1], [0, 0, 1, 1], [], []>} : vector<8x8xbf16>, vector<8x256xbf16>, vector<8x256xf32> -> vector<8x256xf32>
    %145 = arith.addf %137, %144 : vector<8x256xf32>
    %c3_117 = arith.constant 3 : index
    %c0_118 = arith.constant 0 : index
    %c0_119 = arith.constant 0 : index
    %146 = vector.load %arg9[%c3_117, %c0_118, %c0_119] : memref<9x256x256xbf16, #tpu.memory_space<vmem>>, vector<1x256x256xbf16>
    %147 = vector.shape_cast %146 : vector<1x256x256xbf16> to vector<256x256xbf16>
    %cst_120 = arith.constant dense<0.000000e+00> : vector<8x256xf32>
    %148 = tpu.matmul %120, %147, %cst_120 {dimension_numbers = #tpu.dot_dimension_numbers<[1], [0], [0], [1], [0, 0, 1, 1], [], []>} : vector<8x256xbf16>, vector<256x256xbf16>, vector<8x256xf32> -> vector<8x256xf32>
    %c3_121 = arith.constant 3 : index
    %c0_122 = arith.constant 0 : index
    %c0_123 = arith.constant 0 : index
    %149 = vector.load %arg4[%c3_121, %c0_122, %c0_123] : memref<9x8x8xbf16, #tpu.memory_space<vmem>>, vector<1x8x8xbf16>
    %150 = vector.shape_cast %149 : vector<1x8x8xbf16> to vector<8x8xbf16>
    %151 = arith.truncf %148 : vector<8x256xf32> to vector<8x256xbf16>
    %cst_124 = arith.constant dense<0.000000e+00> : vector<8x256xf32>
    %152 = tpu.matmul %150, %151, %cst_124 {dimension_numbers = #tpu.dot_dimension_numbers<[1], [0], [0], [1], [0, 0, 1, 1], [], []>} : vector<8x8xbf16>, vector<8x256xbf16>, vector<8x256xf32> -> vector<8x256xf32>
    %153 = arith.addf %145, %152 : vector<8x256xf32>
    %c4_125 = arith.constant 4 : index
    %c0_126 = arith.constant 0 : index
    %c0_127 = arith.constant 0 : index
    %154 = vector.load %arg9[%c4_125, %c0_126, %c0_127] : memref<9x256x256xbf16, #tpu.memory_space<vmem>>, vector<1x256x256xbf16>
    %155 = vector.shape_cast %154 : vector<1x256x256xbf16> to vector<256x256xbf16>
    %cst_128 = arith.constant dense<0.000000e+00> : vector<8x256xf32>
    %156 = tpu.matmul %120, %155, %cst_128 {dimension_numbers = #tpu.dot_dimension_numbers<[1], [0], [0], [1], [0, 0, 1, 1], [], []>} : vector<8x256xbf16>, vector<256x256xbf16>, vector<8x256xf32> -> vector<8x256xf32>
    %c4_129 = arith.constant 4 : index
    %c0_130 = arith.constant 0 : index
    %c0_131 = arith.constant 0 : index
    %157 = vector.load %arg4[%c4_129, %c0_130, %c0_131] : memref<9x8x8xbf16, #tpu.memory_space<vmem>>, vector<1x8x8xbf16>
    %158 = vector.shape_cast %157 : vector<1x8x8xbf16> to vector<8x8xbf16>
    %159 = arith.truncf %156 : vector<8x256xf32> to vector<8x256xbf16>
    %cst_132 = arith.constant dense<0.000000e+00> : vector<8x256xf32>
    %160 = tpu.matmul %158, %159, %cst_132 {dimension_numbers = #tpu.dot_dimension_numbers<[1], [0], [0], [1], [0, 0, 1, 1], [], []>} : vector<8x8xbf16>, vector<8x256xbf16>, vector<8x256xf32> -> vector<8x256xf32>
    %161 = arith.addf %153, %160 : vector<8x256xf32>
    %c5_133 = arith.constant 5 : index
    %c0_134 = arith.constant 0 : index
    %c0_135 = arith.constant 0 : index
    %162 = vector.load %arg9[%c5_133, %c0_134, %c0_135] : memref<9x256x256xbf16, #tpu.memory_space<vmem>>, vector<1x256x256xbf16>
    %163 = vector.shape_cast %162 : vector<1x256x256xbf16> to vector<256x256xbf16>
    %cst_136 = arith.constant dense<0.000000e+00> : vector<8x256xf32>
    %164 = tpu.matmul %120, %163, %cst_136 {dimension_numbers = #tpu.dot_dimension_numbers<[1], [0], [0], [1], [0, 0, 1, 1], [], []>} : vector<8x256xbf16>, vector<256x256xbf16>, vector<8x256xf32> -> vector<8x256xf32>
    %c5_137 = arith.constant 5 : index
    %c0_138 = arith.constant 0 : index
    %c0_139 = arith.constant 0 : index
    %165 = vector.load %arg4[%c5_137, %c0_138, %c0_139] : memref<9x8x8xbf16, #tpu.memory_space<vmem>>, vector<1x8x8xbf16>
    %166 = vector.shape_cast %165 : vector<1x8x8xbf16> to vector<8x8xbf16>
    %167 = arith.truncf %164 : vector<8x256xf32> to vector<8x256xbf16>
    %cst_140 = arith.constant dense<0.000000e+00> : vector<8x256xf32>
    %168 = tpu.matmul %166, %167, %cst_140 {dimension_numbers = #tpu.dot_dimension_numbers<[1], [0], [0], [1], [0, 0, 1, 1], [], []>} : vector<8x8xbf16>, vector<8x256xbf16>, vector<8x256xf32> -> vector<8x256xf32>
    %169 = arith.addf %161, %168 : vector<8x256xf32>
    %c6_141 = arith.constant 6 : index
    %c0_142 = arith.constant 0 : index
    %c0_143 = arith.constant 0 : index
    %170 = vector.load %arg9[%c6_141, %c0_142, %c0_143] : memref<9x256x256xbf16, #tpu.memory_space<vmem>>, vector<1x256x256xbf16>
    %171 = vector.shape_cast %170 : vector<1x256x256xbf16> to vector<256x256xbf16>
    %cst_144 = arith.constant dense<0.000000e+00> : vector<8x256xf32>
    %172 = tpu.matmul %120, %171, %cst_144 {dimension_numbers = #tpu.dot_dimension_numbers<[1], [0], [0], [1], [0, 0, 1, 1], [], []>} : vector<8x256xbf16>, vector<256x256xbf16>, vector<8x256xf32> -> vector<8x256xf32>
    %c6_145 = arith.constant 6 : index
    %c0_146 = arith.constant 0 : index
    %c0_147 = arith.constant 0 : index
    %173 = vector.load %arg4[%c6_145, %c0_146, %c0_147] : memref<9x8x8xbf16, #tpu.memory_space<vmem>>, vector<1x8x8xbf16>
    %174 = vector.shape_cast %173 : vector<1x8x8xbf16> to vector<8x8xbf16>
    %175 = arith.truncf %172 : vector<8x256xf32> to vector<8x256xbf16>
    %cst_148 = arith.constant dense<0.000000e+00> : vector<8x256xf32>
    %176 = tpu.matmul %174, %175, %cst_148 {dimension_numbers = #tpu.dot_dimension_numbers<[1], [0], [0], [1], [0, 0, 1, 1], [], []>} : vector<8x8xbf16>, vector<8x256xbf16>, vector<8x256xf32> -> vector<8x256xf32>
    %177 = arith.addf %169, %176 : vector<8x256xf32>
    %c7_149 = arith.constant 7 : index
    %c0_150 = arith.constant 0 : index
    %c0_151 = arith.constant 0 : index
    %178 = vector.load %arg9[%c7_149, %c0_150, %c0_151] : memref<9x256x256xbf16, #tpu.memory_space<vmem>>, vector<1x256x256xbf16>
    %179 = vector.shape_cast %178 : vector<1x256x256xbf16> to vector<256x256xbf16>
    %cst_152 = arith.constant dense<0.000000e+00> : vector<8x256xf32>
    %180 = tpu.matmul %120, %179, %cst_152 {dimension_numbers = #tpu.dot_dimension_numbers<[1], [0], [0], [1], [0, 0, 1, 1], [], []>} : vector<8x256xbf16>, vector<256x256xbf16>, vector<8x256xf32> -> vector<8x256xf32>
    %c7_153 = arith.constant 7 : index
    %c0_154 = arith.constant 0 : index
    %c0_155 = arith.constant 0 : index
    %181 = vector.load %arg4[%c7_153, %c0_154, %c0_155] : memref<9x8x8xbf16, #tpu.memory_space<vmem>>, vector<1x8x8xbf16>
    %182 = vector.shape_cast %181 : vector<1x8x8xbf16> to vector<8x8xbf16>
    %183 = arith.truncf %180 : vector<8x256xf32> to vector<8x256xbf16>
    %cst_156 = arith.constant dense<0.000000e+00> : vector<8x256xf32>
    %184 = tpu.matmul %182, %183, %cst_156 {dimension_numbers = #tpu.dot_dimension_numbers<[1], [0], [0], [1], [0, 0, 1, 1], [], []>} : vector<8x8xbf16>, vector<8x256xbf16>, vector<8x256xf32> -> vector<8x256xf32>
    %185 = arith.addf %177, %184 : vector<8x256xf32>
    %c8_157 = arith.constant 8 : index
    %c0_158 = arith.constant 0 : index
    %c0_159 = arith.constant 0 : index
    %186 = vector.load %arg9[%c8_157, %c0_158, %c0_159] : memref<9x256x256xbf16, #tpu.memory_space<vmem>>, vector<1x256x256xbf16>
    %187 = vector.shape_cast %186 : vector<1x256x256xbf16> to vector<256x256xbf16>
    %cst_160 = arith.constant dense<0.000000e+00> : vector<8x256xf32>
    %188 = tpu.matmul %120, %187, %cst_160 {dimension_numbers = #tpu.dot_dimension_numbers<[1], [0], [0], [1], [0, 0, 1, 1], [], []>} : vector<8x256xbf16>, vector<256x256xbf16>, vector<8x256xf32> -> vector<8x256xf32>
    %c8_161 = arith.constant 8 : index
    %c0_162 = arith.constant 0 : index
    %c0_163 = arith.constant 0 : index
    %189 = vector.load %arg4[%c8_161, %c0_162, %c0_163] : memref<9x8x8xbf16, #tpu.memory_space<vmem>>, vector<1x8x8xbf16>
    %190 = vector.shape_cast %189 : vector<1x8x8xbf16> to vector<8x8xbf16>
    %191 = arith.truncf %188 : vector<8x256xf32> to vector<8x256xbf16>
    %cst_164 = arith.constant dense<0.000000e+00> : vector<8x256xf32>
    %192 = tpu.matmul %190, %191, %cst_164 {dimension_numbers = #tpu.dot_dimension_numbers<[1], [0], [0], [1], [0, 0, 1, 1], [], []>} : vector<8x8xbf16>, vector<8x256xbf16>, vector<8x256xf32> -> vector<8x256xf32>
    %193 = arith.addf %185, %192 : vector<8x256xf32>
    %c0_165 = arith.constant 0 : index
    %c0_166 = arith.constant 0 : index
    %194 = vector.load %arg5[%c0_165, %c0_166] : memref<8x1xf32, #tpu.memory_space<vmem>>, vector<8x1xf32>
    %195 = vector.broadcast %194 : vector<8x1xf32> to vector<8x256xf32>
    %196 = arith.addf %193, %195 : vector<8x256xf32>
    %cst_167 = arith.constant 0.000000e+00 : f32
    %197 = vector.broadcast %cst_167 : f32 to vector<8x256xf32>
    %198 = arith.maximumf %196, %197 : vector<8x256xf32>
    %199 = arith.addf %39, %118 : vector<8x256xf32>
    %200 = arith.addf %199, %198 : vector<8x256xf32>
    %201 = arith.truncf %200 : vector<8x256xf32> to vector<8x256xbf16>
    %cst_168 = arith.constant 0.000000e+00 : f32
    %202 = vector.broadcast %cst_168 : f32 to vector<8x256xf32>
    %c0_169 = arith.constant 0 : index
    %c0_170 = arith.constant 0 : index
    %c0_171 = arith.constant 0 : index
    %203 = vector.load %arg9[%c0_169, %c0_170, %c0_171] : memref<9x256x256xbf16, #tpu.memory_space<vmem>>, vector<1x256x256xbf16>
    %204 = vector.shape_cast %203 : vector<1x256x256xbf16> to vector<256x256xbf16>
    %cst_172 = arith.constant dense<0.000000e+00> : vector<8x256xf32>
    %205 = tpu.matmul %201, %204, %cst_172 {dimension_numbers = #tpu.dot_dimension_numbers<[1], [0], [0], [1], [0, 0, 1, 1], [], []>} : vector<8x256xbf16>, vector<256x256xbf16>, vector<8x256xf32> -> vector<8x256xf32>
    %c0_173 = arith.constant 0 : index
    %c0_174 = arith.constant 0 : index
    %c0_175 = arith.constant 0 : index
    %206 = vector.load %arg4[%c0_173, %c0_174, %c0_175] : memref<9x8x8xbf16, #tpu.memory_space<vmem>>, vector<1x8x8xbf16>
    %207 = vector.shape_cast %206 : vector<1x8x8xbf16> to vector<8x8xbf16>
    %208 = arith.truncf %205 : vector<8x256xf32> to vector<8x256xbf16>
    %cst_176 = arith.constant dense<0.000000e+00> : vector<8x256xf32>
    %209 = tpu.matmul %207, %208, %cst_176 {dimension_numbers = #tpu.dot_dimension_numbers<[1], [0], [0], [1], [0, 0, 1, 1], [], []>} : vector<8x8xbf16>, vector<8x256xbf16>, vector<8x256xf32> -> vector<8x256xf32>
    %210 = arith.addf %202, %209 : vector<8x256xf32>
    %c1_177 = arith.constant 1 : index
    %c0_178 = arith.constant 0 : index
    %c0_179 = arith.constant 0 : index
    %211 = vector.load %arg9[%c1_177, %c0_178, %c0_179] : memref<9x256x256xbf16, #tpu.memory_space<vmem>>, vector<1x256x256xbf16>
    %212 = vector.shape_cast %211 : vector<1x256x256xbf16> to vector<256x256xbf16>
    %cst_180 = arith.constant dense<0.000000e+00> : vector<8x256xf32>
    %213 = tpu.matmul %201, %212, %cst_180 {dimension_numbers = #tpu.dot_dimension_numbers<[1], [0], [0], [1], [0, 0, 1, 1], [], []>} : vector<8x256xbf16>, vector<256x256xbf16>, vector<8x256xf32> -> vector<8x256xf32>
    %c1_181 = arith.constant 1 : index
    %c0_182 = arith.constant 0 : index
    %c0_183 = arith.constant 0 : index
    %214 = vector.load %arg4[%c1_181, %c0_182, %c0_183] : memref<9x8x8xbf16, #tpu.memory_space<vmem>>, vector<1x8x8xbf16>
    %215 = vector.shape_cast %214 : vector<1x8x8xbf16> to vector<8x8xbf16>
    %216 = arith.truncf %213 : vector<8x256xf32> to vector<8x256xbf16>
    %cst_184 = arith.constant dense<0.000000e+00> : vector<8x256xf32>
    %217 = tpu.matmul %215, %216, %cst_184 {dimension_numbers = #tpu.dot_dimension_numbers<[1], [0], [0], [1], [0, 0, 1, 1], [], []>} : vector<8x8xbf16>, vector<8x256xbf16>, vector<8x256xf32> -> vector<8x256xf32>
    %218 = arith.addf %210, %217 : vector<8x256xf32>
    %c2_185 = arith.constant 2 : index
    %c0_186 = arith.constant 0 : index
    %c0_187 = arith.constant 0 : index
    %219 = vector.load %arg9[%c2_185, %c0_186, %c0_187] : memref<9x256x256xbf16, #tpu.memory_space<vmem>>, vector<1x256x256xbf16>
    %220 = vector.shape_cast %219 : vector<1x256x256xbf16> to vector<256x256xbf16>
    %cst_188 = arith.constant dense<0.000000e+00> : vector<8x256xf32>
    %221 = tpu.matmul %201, %220, %cst_188 {dimension_numbers = #tpu.dot_dimension_numbers<[1], [0], [0], [1], [0, 0, 1, 1], [], []>} : vector<8x256xbf16>, vector<256x256xbf16>, vector<8x256xf32> -> vector<8x256xf32>
    %c2_189 = arith.constant 2 : index
    %c0_190 = arith.constant 0 : index
    %c0_191 = arith.constant 0 : index
    %222 = vector.load %arg4[%c2_189, %c0_190, %c0_191] : memref<9x8x8xbf16, #tpu.memory_space<vmem>>, vector<1x8x8xbf16>
    %223 = vector.shape_cast %222 : vector<1x8x8xbf16> to vector<8x8xbf16>
    %224 = arith.truncf %221 : vector<8x256xf32> to vector<8x256xbf16>
    %cst_192 = arith.constant dense<0.000000e+00> : vector<8x256xf32>
    %225 = tpu.matmul %223, %224, %cst_192 {dimension_numbers = #tpu.dot_dimension_numbers<[1], [0], [0], [1], [0, 0, 1, 1], [], []>} : vector<8x8xbf16>, vector<8x256xbf16>, vector<8x256xf32> -> vector<8x256xf32>
    %226 = arith.addf %218, %225 : vector<8x256xf32>
    %c3_193 = arith.constant 3 : index
    %c0_194 = arith.constant 0 : index
    %c0_195 = arith.constant 0 : index
    %227 = vector.load %arg9[%c3_193, %c0_194, %c0_195] : memref<9x256x256xbf16, #tpu.memory_space<vmem>>, vector<1x256x256xbf16>
    %228 = vector.shape_cast %227 : vector<1x256x256xbf16> to vector<256x256xbf16>
    %cst_196 = arith.constant dense<0.000000e+00> : vector<8x256xf32>
    %229 = tpu.matmul %201, %228, %cst_196 {dimension_numbers = #tpu.dot_dimension_numbers<[1], [0], [0], [1], [0, 0, 1, 1], [], []>} : vector<8x256xbf16>, vector<256x256xbf16>, vector<8x256xf32> -> vector<8x256xf32>
    %c3_197 = arith.constant 3 : index
    %c0_198 = arith.constant 0 : index
    %c0_199 = arith.constant 0 : index
    %230 = vector.load %arg4[%c3_197, %c0_198, %c0_199] : memref<9x8x8xbf16, #tpu.memory_space<vmem>>, vector<1x8x8xbf16>
    %231 = vector.shape_cast %230 : vector<1x8x8xbf16> to vector<8x8xbf16>
    %232 = arith.truncf %229 : vector<8x256xf32> to vector<8x256xbf16>
    %cst_200 = arith.constant dense<0.000000e+00> : vector<8x256xf32>
    %233 = tpu.matmul %231, %232, %cst_200 {dimension_numbers = #tpu.dot_dimension_numbers<[1], [0], [0], [1], [0, 0, 1, 1], [], []>} : vector<8x8xbf16>, vector<8x256xbf16>, vector<8x256xf32> -> vector<8x256xf32>
    %234 = arith.addf %226, %233 : vector<8x256xf32>
    %c4_201 = arith.constant 4 : index
    %c0_202 = arith.constant 0 : index
    %c0_203 = arith.constant 0 : index
    %235 = vector.load %arg9[%c4_201, %c0_202, %c0_203] : memref<9x256x256xbf16, #tpu.memory_space<vmem>>, vector<1x256x256xbf16>
    %236 = vector.shape_cast %235 : vector<1x256x256xbf16> to vector<256x256xbf16>
    %cst_204 = arith.constant dense<0.000000e+00> : vector<8x256xf32>
    %237 = tpu.matmul %201, %236, %cst_204 {dimension_numbers = #tpu.dot_dimension_numbers<[1], [0], [0], [1], [0, 0, 1, 1], [], []>} : vector<8x256xbf16>, vector<256x256xbf16>, vector<8x256xf32> -> vector<8x256xf32>
    %c4_205 = arith.constant 4 : index
    %c0_206 = arith.constant 0 : index
    %c0_207 = arith.constant 0 : index
    %238 = vector.load %arg4[%c4_205, %c0_206, %c0_207] : memref<9x8x8xbf16, #tpu.memory_space<vmem>>, vector<1x8x8xbf16>
    %239 = vector.shape_cast %238 : vector<1x8x8xbf16> to vector<8x8xbf16>
    %240 = arith.truncf %237 : vector<8x256xf32> to vector<8x256xbf16>
    %cst_208 = arith.constant dense<0.000000e+00> : vector<8x256xf32>
    %241 = tpu.matmul %239, %240, %cst_208 {dimension_numbers = #tpu.dot_dimension_numbers<[1], [0], [0], [1], [0, 0, 1, 1], [], []>} : vector<8x8xbf16>, vector<8x256xbf16>, vector<8x256xf32> -> vector<8x256xf32>
    %242 = arith.addf %234, %241 : vector<8x256xf32>
    %c5_209 = arith.constant 5 : index
    %c0_210 = arith.constant 0 : index
    %c0_211 = arith.constant 0 : index
    %243 = vector.load %arg9[%c5_209, %c0_210, %c0_211] : memref<9x256x256xbf16, #tpu.memory_space<vmem>>, vector<1x256x256xbf16>
    %244 = vector.shape_cast %243 : vector<1x256x256xbf16> to vector<256x256xbf16>
    %cst_212 = arith.constant dense<0.000000e+00> : vector<8x256xf32>
    %245 = tpu.matmul %201, %244, %cst_212 {dimension_numbers = #tpu.dot_dimension_numbers<[1], [0], [0], [1], [0, 0, 1, 1], [], []>} : vector<8x256xbf16>, vector<256x256xbf16>, vector<8x256xf32> -> vector<8x256xf32>
    %c5_213 = arith.constant 5 : index
    %c0_214 = arith.constant 0 : index
    %c0_215 = arith.constant 0 : index
    %246 = vector.load %arg4[%c5_213, %c0_214, %c0_215] : memref<9x8x8xbf16, #tpu.memory_space<vmem>>, vector<1x8x8xbf16>
    %247 = vector.shape_cast %246 : vector<1x8x8xbf16> to vector<8x8xbf16>
    %248 = arith.truncf %245 : vector<8x256xf32> to vector<8x256xbf16>
    %cst_216 = arith.constant dense<0.000000e+00> : vector<8x256xf32>
    %249 = tpu.matmul %247, %248, %cst_216 {dimension_numbers = #tpu.dot_dimension_numbers<[1], [0], [0], [1], [0, 0, 1, 1], [], []>} : vector<8x8xbf16>, vector<8x256xbf16>, vector<8x256xf32> -> vector<8x256xf32>
    %250 = arith.addf %242, %249 : vector<8x256xf32>
    %c6_217 = arith.constant 6 : index
    %c0_218 = arith.constant 0 : index
    %c0_219 = arith.constant 0 : index
    %251 = vector.load %arg9[%c6_217, %c0_218, %c0_219] : memref<9x256x256xbf16, #tpu.memory_space<vmem>>, vector<1x256x256xbf16>
    %252 = vector.shape_cast %251 : vector<1x256x256xbf16> to vector<256x256xbf16>
    %cst_220 = arith.constant dense<0.000000e+00> : vector<8x256xf32>
    %253 = tpu.matmul %201, %252, %cst_220 {dimension_numbers = #tpu.dot_dimension_numbers<[1], [0], [0], [1], [0, 0, 1, 1], [], []>} : vector<8x256xbf16>, vector<256x256xbf16>, vector<8x256xf32> -> vector<8x256xf32>
    %c6_221 = arith.constant 6 : index
    %c0_222 = arith.constant 0 : index
    %c0_223 = arith.constant 0 : index
    %254 = vector.load %arg4[%c6_221, %c0_222, %c0_223] : memref<9x8x8xbf16, #tpu.memory_space<vmem>>, vector<1x8x8xbf16>
    %255 = vector.shape_cast %254 : vector<1x8x8xbf16> to vector<8x8xbf16>
    %256 = arith.truncf %253 : vector<8x256xf32> to vector<8x256xbf16>
    %cst_224 = arith.constant dense<0.000000e+00> : vector<8x256xf32>
    %257 = tpu.matmul %255, %256, %cst_224 {dimension_numbers = #tpu.dot_dimension_numbers<[1], [0], [0], [1], [0, 0, 1, 1], [], []>} : vector<8x8xbf16>, vector<8x256xbf16>, vector<8x256xf32> -> vector<8x256xf32>
    %258 = arith.addf %250, %257 : vector<8x256xf32>
    %c7_225 = arith.constant 7 : index
    %c0_226 = arith.constant 0 : index
    %c0_227 = arith.constant 0 : index
    %259 = vector.load %arg9[%c7_225, %c0_226, %c0_227] : memref<9x256x256xbf16, #tpu.memory_space<vmem>>, vector<1x256x256xbf16>
    %260 = vector.shape_cast %259 : vector<1x256x256xbf16> to vector<256x256xbf16>
    %cst_228 = arith.constant dense<0.000000e+00> : vector<8x256xf32>
    %261 = tpu.matmul %201, %260, %cst_228 {dimension_numbers = #tpu.dot_dimension_numbers<[1], [0], [0], [1], [0, 0, 1, 1], [], []>} : vector<8x256xbf16>, vector<256x256xbf16>, vector<8x256xf32> -> vector<8x256xf32>
    %c7_229 = arith.constant 7 : index
    %c0_230 = arith.constant 0 : index
    %c0_231 = arith.constant 0 : index
    %262 = vector.load %arg4[%c7_229, %c0_230, %c0_231] : memref<9x8x8xbf16, #tpu.memory_space<vmem>>, vector<1x8x8xbf16>
    %263 = vector.shape_cast %262 : vector<1x8x8xbf16> to vector<8x8xbf16>
    %264 = arith.truncf %261 : vector<8x256xf32> to vector<8x256xbf16>
    %cst_232 = arith.constant dense<0.000000e+00> : vector<8x256xf32>
    %265 = tpu.matmul %263, %264, %cst_232 {dimension_numbers = #tpu.dot_dimension_numbers<[1], [0], [0], [1], [0, 0, 1, 1], [], []>} : vector<8x8xbf16>, vector<8x256xbf16>, vector<8x256xf32> -> vector<8x256xf32>
    %266 = arith.addf %258, %265 : vector<8x256xf32>
    %c8_233 = arith.constant 8 : index
    %c0_234 = arith.constant 0 : index
    %c0_235 = arith.constant 0 : index
    %267 = vector.load %arg9[%c8_233, %c0_234, %c0_235] : memref<9x256x256xbf16, #tpu.memory_space<vmem>>, vector<1x256x256xbf16>
    %268 = vector.shape_cast %267 : vector<1x256x256xbf16> to vector<256x256xbf16>
    %cst_236 = arith.constant dense<0.000000e+00> : vector<8x256xf32>
    %269 = tpu.matmul %201, %268, %cst_236 {dimension_numbers = #tpu.dot_dimension_numbers<[1], [0], [0], [1], [0, 0, 1, 1], [], []>} : vector<8x256xbf16>, vector<256x256xbf16>, vector<8x256xf32> -> vector<8x256xf32>
    %c8_237 = arith.constant 8 : index
    %c0_238 = arith.constant 0 : index
    %c0_239 = arith.constant 0 : index
    %270 = vector.load %arg4[%c8_237, %c0_238, %c0_239] : memref<9x8x8xbf16, #tpu.memory_space<vmem>>, vector<1x8x8xbf16>
    %271 = vector.shape_cast %270 : vector<1x8x8xbf16> to vector<8x8xbf16>
    %272 = arith.truncf %269 : vector<8x256xf32> to vector<8x256xbf16>
    %cst_240 = arith.constant dense<0.000000e+00> : vector<8x256xf32>
    %273 = tpu.matmul %271, %272, %cst_240 {dimension_numbers = #tpu.dot_dimension_numbers<[1], [0], [0], [1], [0, 0, 1, 1], [], []>} : vector<8x8xbf16>, vector<8x256xbf16>, vector<8x256xf32> -> vector<8x256xf32>
    %274 = arith.addf %266, %273 : vector<8x256xf32>
    %c0_241 = arith.constant 0 : index
    %c0_242 = arith.constant 0 : index
    %275 = vector.load %arg5[%c0_241, %c0_242] : memref<8x1xf32, #tpu.memory_space<vmem>>, vector<8x1xf32>
    %276 = vector.broadcast %275 : vector<8x1xf32> to vector<8x256xf32>
    %277 = arith.addf %274, %276 : vector<8x256xf32>
    %cst_243 = arith.constant 0.000000e+00 : f32
    %278 = vector.broadcast %cst_243 : f32 to vector<8x256xf32>
    %279 = arith.maximumf %277, %278 : vector<8x256xf32>
    %c0_244 = arith.constant 0 : index
    %c0_245 = arith.constant 0 : index
    %c0_246 = arith.constant 0 : index
    %280 = vector.load %arg10[%c0_244, %c0_245, %c0_246] : memref<4x256x64xf32, #tpu.memory_space<vmem>>, vector<1x256x64xf32>
    %281 = vector.shape_cast %280 : vector<1x256x64xf32> to vector<256x64xf32>
    %cst_247 = arith.constant dense<0.000000e+00> : vector<8x64xf32>
    %282 = tpu.matmul %279, %281, %cst_247 {dimension_numbers = #tpu.dot_dimension_numbers<[1], [0], [0], [1], [0, 0, 1, 1], [], []>} : vector<8x256xf32>, vector<256x64xf32>, vector<8x64xf32> -> vector<8x64xf32>
    %c1_248 = arith.constant 1 : index
    %c0_249 = arith.constant 0 : index
    %c0_250 = arith.constant 0 : index
    %283 = vector.load %arg10[%c1_248, %c0_249, %c0_250] : memref<4x256x64xf32, #tpu.memory_space<vmem>>, vector<1x256x64xf32>
    %284 = vector.shape_cast %283 : vector<1x256x64xf32> to vector<256x64xf32>
    %cst_251 = arith.constant dense<0.000000e+00> : vector<8x64xf32>
    %285 = tpu.matmul %279, %284, %cst_251 {dimension_numbers = #tpu.dot_dimension_numbers<[1], [0], [0], [1], [0, 0, 1, 1], [], []>} : vector<8x256xf32>, vector<256x64xf32>, vector<8x64xf32> -> vector<8x64xf32>
    %286 = arith.maximumf %282, %285 : vector<8x64xf32>
    %c2_252 = arith.constant 2 : index
    %c0_253 = arith.constant 0 : index
    %c0_254 = arith.constant 0 : index
    %287 = vector.load %arg10[%c2_252, %c0_253, %c0_254] : memref<4x256x64xf32, #tpu.memory_space<vmem>>, vector<1x256x64xf32>
    %288 = vector.shape_cast %287 : vector<1x256x64xf32> to vector<256x64xf32>
    %cst_255 = arith.constant dense<0.000000e+00> : vector<8x64xf32>
    %289 = tpu.matmul %279, %288, %cst_255 {dimension_numbers = #tpu.dot_dimension_numbers<[1], [0], [0], [1], [0, 0, 1, 1], [], []>} : vector<8x256xf32>, vector<256x64xf32>, vector<8x64xf32> -> vector<8x64xf32>
    %290 = arith.maximumf %286, %289 : vector<8x64xf32>
    %c3_256 = arith.constant 3 : index
    %c0_257 = arith.constant 0 : index
    %c0_258 = arith.constant 0 : index
    %291 = vector.load %arg10[%c3_256, %c0_257, %c0_258] : memref<4x256x64xf32, #tpu.memory_space<vmem>>, vector<1x256x64xf32>
    %292 = vector.shape_cast %291 : vector<1x256x64xf32> to vector<256x64xf32>
    %cst_259 = arith.constant dense<0.000000e+00> : vector<8x64xf32>
    %293 = tpu.matmul %279, %292, %cst_259 {dimension_numbers = #tpu.dot_dimension_numbers<[1], [0], [0], [1], [0, 0, 1, 1], [], []>} : vector<8x256xf32>, vector<256x64xf32>, vector<8x64xf32> -> vector<8x64xf32>
    %294 = arith.maximumf %290, %293 : vector<8x64xf32>
    %c0_260 = arith.constant 0 : index
    %c0_261 = arith.constant 0 : index
    %c0_262 = arith.constant 0 : index
    %295 = vector.load %arg11[%c0_260, %c0_261, %c0_262] : memref<1x8x64xf32, #tpu.memory_space<vmem>>, vector<1x8x64xf32>
    %296 = vector.shape_cast %295 : vector<1x8x64xf32> to vector<8x64xf32>
    %297 = vector.shape_cast %294 : vector<8x64xf32> to vector<1x8x64xf32>
    tpu.vector_store %arg11[%c0_260, %c0_261, %c0_262], %297 {strides = array<i32>} : memref<1x8x64xf32, #tpu.memory_space<vmem>>, vector<1x8x64xf32>,
    return
  }
  func.func @transform_0(%arg0: i32) -> (i32, i32, i32) {
    %c0_i32 = arith.constant 0 : i32
    %c0_i32_0 = arith.constant 0 : i32
    %c0_i32_1 = arith.constant 0 : i32
    return %arg0, %c0_i32, %c0_i32_0 : i32, i32, i32
  }
  func.func @transform_1(%arg0: i32) -> (i32, i32) {
    %c0_i32 = arith.constant 0 : i32
    %c0_i32_0 = arith.constant 0 : i32
    %c0_i32_1 = arith.constant 0 : i32
    return %c0_i32, %c0_i32_0 : i32, i32
  }
  func.func @transform_2(%arg0: i32) -> (i32, i32) {
    %c0_i32 = arith.constant 0 : i32
    %c0_i32_0 = arith.constant 0 : i32
    %c0_i32_1 = arith.constant 0 : i32
    return %c0_i32, %c0_i32_0 : i32, i32
  }
  func.func @transform_3(%arg0: i32) -> (i32, i32, i32) {
    %c0_i32 = arith.constant 0 : i32
    %c0_i32_0 = arith.constant 0 : i32
    %c0_i32_1 = arith.constant 0 : i32
    %c0_i32_2 = arith.constant 0 : i32
    return %c0_i32, %c0_i32_0, %c0_i32_1 : i32, i32, i32
  }
  func.func @transform_4(%arg0: i32) -> (i32, i32) {
    %c0_i32 = arith.constant 0 : i32
    %c0_i32_0 = arith.constant 0 : i32
    %c0_i32_1 = arith.constant 0 : i32
    return %c0_i32, %c0_i32_0 : i32, i32
  }
  func.func @transform_5(%arg0: i32) -> (i32, i32, i32) {
    %c0_i32 = arith.constant 0 : i32
    %c0_i32_0 = arith.constant 0 : i32
    %c0_i32_1 = arith.constant 0 : i32
    %c0_i32_2 = arith.constant 0 : i32
    return %c0_i32, %c0_i32_0, %c0_i32_1 : i32, i32, i32
  }
  func.func @transform_6(%arg0: i32) -> (i32, i32) {
    %c0_i32 = arith.constant 0 : i32
    %c0_i32_0 = arith.constant 0 : i32
    %c0_i32_1 = arith.constant 0 : i32
    return %c0_i32, %c0_i32_0 : i32, i32
  }
  func.func @transform_7(%arg0: i32) -> (i32, i32) {
    %c0_i32 = arith.constant 0 : i32
    %c0_i32_0 = arith.constant 0 : i32
    %c0_i32_1 = arith.constant 0 : i32
    return %c0_i32, %c0_i32_0 : i32, i32
  }
  func.func @transform_8(%arg0: i32) -> (i32, i32, i32) {
    %c0_i32 = arith.constant 0 : i32
    %c0_i32_0 = arith.constant 0 : i32
    %c0_i32_1 = arith.constant 0 : i32
    %c0_i32_2 = arith.constant 0 : i32
    return %c0_i32, %c0_i32_0, %c0_i32_1 : i32, i32, i32
  }
  func.func @transform_9(%arg0: i32) -> (i32, i32, i32) {
    %c0_i32 = arith.constant 0 : i32
    %c0_i32_0 = arith.constant 0 : i32
    %c0_i32_1 = arith.constant 0 : i32
    %c0_i32_2 = arith.constant 0 : i32
    return %c0_i32, %c0_i32_0, %c0_i32_1 : i32, i32, i32
  }
  func.func @transform_10(%arg0: i32) -> (i32, i32, i32) {
    %c0_i32 = arith.constant 0 : i32
    %c0_i32_0 = arith.constant 0 : i32
    %c0_i32_1 = arith.constant 0 : i32
    return %arg0, %c0_i32, %c0_i32_0 : i32, i32, i32
  }
}

</mosaic_0001>

<llo_original>
// kernel: embedding_block_forward.1
$region0: #{embedding_block_forward.1}
  #allocation0 [shape = 'u32[]', space=smem, size = 0x4, offset = 0x4, fixed_abs, tag = 'smem constant byte address 0x4 - core index']
  #allocation1 [shape = 'u32[144,128]{1,0:T(1,128)}', space=vmem, size = 0x12000, scoped, tag = 'internal scratch']
  %s0 = inlined_call_operand.vmem [shape: f32[2,8,256], index: 0, kind: input, shape index: {}]
  %s1 = inlined_call_operand.vmem [shape: bf16[8,8], index: 1, kind: input, shape index: {}]
  %s2 = inlined_call_operand.vmem [shape: f32[8,1], index: 2, kind: input, shape index: {}]
  %s3 = inlined_call_operand.vmem [shape: bf16[9,8,8], index: 3, kind: input, shape index: {}]
  %s4 = inlined_call_operand.vmem [shape: f32[8,1], index: 4, kind: input, shape index: {}]
  %s5 = inlined_call_operand.vmem [shape: f32[3,8,16], index: 5, kind: input, shape index: {}]
  %s6 = inlined_call_operand.vmem [shape: f32[256,16], index: 6, kind: input, shape index: {}]
  %s7 = inlined_call_operand.vmem [shape: f32[16,256], index: 7, kind: input, shape index: {}]
  %s8 = inlined_call_operand.vmem [shape: bf16[9,256,256], index: 8, kind: input, shape index: {}]
  %s9 = inlined_call_operand.vmem [shape: f32[4,256,64], index: 9, kind: input, shape index: {}]
  %s10 = inlined_call_operand.vmem [shape: f32[2,8,64], index: 10, kind: output, shape index: {}]
  %s11 = sld [smem:[#allocation0]]
  $region73: #{embedding_block_forward.1} parent=0
    _
  %s13 = ssub.s32 1, %s11
  %s14 = scalar_select 0, %s13, %s11
  loop: start=0, step=1, limit=4
  $region2: #{embedding_block_forward.1} parent=0 // loop_pre_header
    _
  $region3: #{embedding_block_forward.1} parent=0 // loop_header
    %s16 = sphi 0, %s20
    %p17 = scmp.ge.s32.totalorder %s16, 4
    %s26 = sphi 0, %s28
    %s29 = sphi 0, %s26
    %s30 = sphi 0, %s29
    %s46 = sphi 0, %s30
    %s50 = sphi 0, %s50
    %s52 = sphi 0, %s50
    %s53 = sphi 0, %s52
    %s67 = sphi 0, %s53
    %s71 = sphi 0, %s71
    %s73 = sphi 0, %s71
    %s74 = sphi 0, %s73
    %s88 = sphi 0, %s74
    %s92 = sphi 0, %s92
    %s94 = sphi 0, %s92
    %s95 = sphi 0, %s94
    %s109 = sphi 0, %s95
    %s113 = sphi 0, %s113
    %s115 = sphi 0, %s113
    %s116 = sphi 0, %s115
    %s130 = sphi 0, %s116
    %s134 = sphi 0, %s134
    %s136 = sphi 0, %s134
    %s137 = sphi 0, %s136
    %s151 = sphi 0, %s137
    %s155 = sphi 0, %s155
    %s157 = sphi 0, %s155
    %s158 = sphi 0, %s157
    %s172 = sphi 0, %s158
    %s176 = sphi 0, %s176
    %s178 = sphi 0, %s176
    %s179 = sphi 0, %s178
    %s193 = sphi 0, %s179
    %s197 = sphi 0, %s197
    %s199 = sphi 0, %s197
    %s200 = sphi 0, %s199
    %s214 = sphi 0, %s200
    %s218 = sphi 0, %s218
    %s220 = sphi 0, %s218
    %s221 = sphi 0, %s220
    %s235 = sphi 0, %s221
    %s241 = sphi 0, %s243
    %s244 = sphi 0, %s241
    %s245 = sphi 0, %s244
    %s261 = sphi 0, %s245
  $region4: #{embedding_block_forward.1} parent=0 // loop_header_branch
    %19 = sbr.rel (%p17) target = $region8
  $region5: #{embedding_block_forward.1} parent=0 // loop_body
    %s21 = ssub.s32 %s16, 1
    %s22 = ssub.s32 %s16, 2
    %s23 = sadd.s32 %s16, 1
    %s24 = ssub.s32 %s16, %s23
    %p25 = scmp.eq.s32.totalorder %s24, 0
    %s27 = sadd.s32 %s26, 1
    %s28 = scalar_select %p25, %s26, %s27
    %p31 = pneg %p25
    %p32 = scmp.eq.s32.totalorder %s16, 1
    %p33 = por %p31, %p32
    %p34 = scmp.ne.s32.totalorder %s26, %s29
    %p35 = scmp.eq.s32.totalorder %s16, 0
    %p36 = por %p34, %p35
    %p37 = scmp.ne.s32.totalorder %s26, %s29
    %p38 = scmp.eq.s32.totalorder %s21, 1
    %p39 = por %p37, %p38
    %p40 = scmp.ne.s32.totalorder %s29, %s30
    %p41 = scmp.eq.s32.totalorder %s21, 0
    %p42 = por %p40, %p41
    %p43 = scmp.ne.s32.totalorder %s29, %s30
    %p44 = scmp.eq.s32.totalorder %s22, 1
    %p45 = por %p43, %p44
    %p47 = scmp.ne.s32.totalorder %s30, %s46
    %p48 = scmp.eq.s32.totalorder %s22, 0
    %p49 = por %p47, %p48
    %s51 = sadd.s32 %s50, 1
    %p54 = scmp.eq.s32.totalorder %s16, 1
    %p55 = scmp.ne.s32.totalorder %s50, %s52
    %p56 = scmp.eq.s32.totalorder %s16, 0
    %p57 = por %p55, %p56
    %p58 = scmp.ne.s32.totalorder %s50, %s52
    %p59 = scmp.eq.s32.totalorder %s21, 1
    %p60 = por %p58, %p59
    %p61 = scmp.ne.s32.totalorder %s52, %s53
    %p62 = scmp.eq.s32.totalorder %s21, 0
    %p63 = por %p61, %p62
    %p64 = scmp.ne.s32.totalorder %s52, %s53
    %p65 = scmp.eq.s32.totalorder %s22, 1
    %p66 = por %p64, %p65
    %p68 = scmp.ne.s32.totalorder %s53, %s67
    %p69 = scmp.eq.s32.totalorder %s22, 0
    %p70 = por %p68, %p69
    %s72 = sadd.s32 %s71, 1
    %p75 = scmp.eq.s32.totalorder %s16, 1
    %p76 = scmp.ne.s32.totalorder %s71, %s73
    %p77 = scmp.eq.s32.totalorder %s16, 0
    %p78 = por %p76, %p77
    %p79 = scmp.ne.s32.totalorder %s71, %s73
    %p80 = scmp.eq.s32.totalorder %s21, 1
    %p81 = por %p79, %p80
    %p82 = scmp.ne.s32.totalorder %s73, %s74
    %p83 = scmp.eq.s32.totalorder %s21, 0
    %p84 = por %p82, %p83
    %p85 = scmp.ne.s32.totalorder %s73, %s74
    %p86 = scmp.eq.s32.totalorder %s22, 1
    %p87 = por %p85, %p86
    %p89 = scmp.ne.s32.totalorder %s74, %s88
    %p90 = scmp.eq.s32.totalorder %s22, 0
    %p91 = por %p89, %p90
    %s93 = sadd.s32 %s92, 1
    %p96 = scmp.eq.s32.totalorder %s16, 1
    %p97 = scmp.ne.s32.totalorder %s92, %s94
    %p98 = scmp.eq.s32.totalorder %s16, 0
    %p99 = por %p97, %p98
    %p100 = scmp.ne.s32.totalorder %s92, %s94
    %p101 = scmp.eq.s32.totalorder %s21, 1
    %p102 = por %p100, %p101
    %p103 = scmp.ne.s32.totalorder %s94, %s95
    %p104 = scmp.eq.s32.totalorder %s21, 0
    %p105 = por %p103, %p104
    %p106 = scmp.ne.s32.totalorder %s94, %s95
    %p107 = scmp.eq.s32.totalorder %s22, 1
    %p108 = por %p106, %p107
    %p110 = scmp.ne.s32.totalorder %s95, %s109
    %p111 = scmp.eq.s32.totalorder %s22, 0
    %p112 = por %p110, %p111
    %s114 = sadd.s32 %s113, 1
    %p117 = scmp.eq.s32.totalorder %s16, 1
    %p118 = scmp.ne.s32.totalorder %s113, %s115
    %p119 = scmp.eq.s32.totalorder %s16, 0
    %p120 = por %p118, %p119
    %p121 = scmp.ne.s32.totalorder %s113, %s115
    %p122 = scmp.eq.s32.totalorder %s21, 1
    %p123 = por %p121, %p122
    %p124 = scmp.ne.s32.totalorder %s115, %s116
    %p125 = scmp.eq.s32.totalorder %s21, 0
    %p126 = por %p124, %p125
    %p127 = scmp.ne.s32.totalorder %s115, %s116
    %p128 = scmp.eq.s32.totalorder %s22, 1
    %p129 = por %p127, %p128
    %p131 = scmp.ne.s32.totalorder %s116, %s130
    %p132 = scmp.eq.s32.totalorder %s22, 0
    %p133 = por %p131, %p132
    %s135 = sadd.s32 %s134, 1
    %p138 = scmp.eq.s32.totalorder %s16, 1
    %p139 = scmp.ne.s32.totalorder %s134, %s136
    %p140 = scmp.eq.s32.totalorder %s16, 0
    %p141 = por %p139, %p140
    %p142 = scmp.ne.s32.totalorder %s134, %s136
    %p143 = scmp.eq.s32.totalorder %s21, 1
    %p144 = por %p142, %p143
    %p145 = scmp.ne.s32.totalorder %s136, %s137
    %p146 = scmp.eq.s32.totalorder %s21, 0
    %p147 = por %p145, %p146
    %p148 = scmp.ne.s32.totalorder %s136, %s137
    %p149 = scmp.eq.s32.totalorder %s22, 1
    %p150 = por %p148, %p149
    %p152 = scmp.ne.s32.totalorder %s137, %s151
    %p153 = scmp.eq.s32.totalorder %s22, 0
    %p154 = por %p152, %p153
    %s156 = sadd.s32 %s155, 1
    %p159 = scmp.eq.s32.totalorder %s16, 1
    %p160 = scmp.ne.s32.totalorder %s155, %s157
    %p161 = scmp.eq.s32.totalorder %s16, 0
    %p162 = por %p160, %p161
    %p163 = scmp.ne.s32.totalorder %s155, %s157
    %p164 = scmp.eq.s32.totalorder %s21, 1
    %p165 = por %p163, %p164
    %p166 = scmp.ne.s32.totalorder %s157, %s158
    %p167 = scmp.eq.s32.totalorder %s21, 0
    %p168 = por %p166, %p167
    %p169 = scmp.ne.s32.totalorder %s157, %s158
    %p170 = scmp.eq.s32.totalorder %s22, 1
    %p171 = por %p169, %p170
    %p173 = scmp.ne.s32.totalorder %s158, %s172
    %p174 = scmp.eq.s32.totalorder %s22, 0
    %p175 = por %p173, %p174
    %s177 = sadd.s32 %s176, 1
    %p180 = scmp.eq.s32.totalorder %s16, 1
    %p181 = scmp.ne.s32.totalorder %s176, %s178
    %p182 = scmp.eq.s32.totalorder %s16, 0
    %p183 = por %p181, %p182
    %p184 = scmp.ne.s32.totalorder %s176, %s178
    %p185 = scmp.eq.s32.totalorder %s21, 1
    %p186 = por %p184, %p185
    %p187 = scmp.ne.s32.totalorder %s178, %s179
    %p188 = scmp.eq.s32.totalorder %s21, 0
    %p189 = por %p187, %p188
    %p190 = scmp.ne.s32.totalorder %s178, %s179
    %p191 = scmp.eq.s32.totalorder %s22, 1
    %p192 = por %p190, %p191
    %p194 = scmp.ne.s32.totalorder %s179, %s193
    %p195 = scmp.eq.s32.totalorder %s22, 0
    %p196 = por %p194, %p195
    %s198 = sadd.s32 %s197, 1
    %p201 = scmp.eq.s32.totalorder %s16, 1
    %p202 = scmp.ne.s32.totalorder %s197, %s199
    %p203 = scmp.eq.s32.totalorder %s16, 0
    %p204 = por %p202, %p203
    %p205 = scmp.ne.s32.totalorder %s197, %s199
    %p206 = scmp.eq.s32.totalorder %s21, 1
    %p207 = por %p205, %p206
    %p208 = scmp.ne.s32.totalorder %s199, %s200
    %p209 = scmp.eq.s32.totalorder %s21, 0
    %p210 = por %p208, %p209
    %p211 = scmp.ne.s32.totalorder %s199, %s200
    %p212 = scmp.eq.s32.totalorder %s22, 1
    %p213 = por %p211, %p212
    %p215 = scmp.ne.s32.totalorder %s200, %s214
    %p216 = scmp.eq.s32.totalorder %s22, 0
    %p217 = por %p215, %p216
    %s219 = sadd.s32 %s218, 1
    %p222 = scmp.eq.s32.totalorder %s16, 1
    %p223 = scmp.ne.s32.totalorder %s218, %s220
    %p224 = scmp.eq.s32.totalorder %s16, 0
    %p225 = por %p223, %p224
    %p226 = scmp.ne.s32.totalorder %s218, %s220
    %p227 = scmp.eq.s32.totalorder %s21, 1
    %p228 = por %p226, %p227
    %p229 = scmp.ne.s32.totalorder %s220, %s221
    %p230 = scmp.eq.s32.totalorder %s21, 0
    %p231 = por %p229, %p230
    %p232 = scmp.ne.s32.totalorder %s220, %s221
    %p233 = scmp.eq.s32.totalorder %s22, 1
    %p234 = por %p232, %p233
    %p236 = scmp.ne.s32.totalorder %s221, %s235
    %p237 = scmp.eq.s32.totalorder %s22, 0
    %p238 = por %p236, %p237
    %s239 = ssub.s32 %s16, %s23
    %p240 = scmp.eq.s32.totalorder %s239, 0
    %s242 = sadd.s32 %s241, 1
    %s243 = scalar_select %p240, %s241, %s242
    %p246 = pneg %p240
    %p247 = scmp.eq.s32.totalorder %s16, 1
    %p248 = por %p246, %p247
    %p249 = scmp.ne.s32.totalorder %s241, %s244
    %p250 = scmp.eq.s32.totalorder %s16, 0
    %p251 = por %p249, %p250
    %p252 = scmp.ne.s32.totalorder %s241, %s244
    %p253 = scmp.eq.s32.totalorder %s21, 1
    %p254 = por %p252, %p253
    %p255 = scmp.ne.s32.totalorder %s244, %s245
    %p256 = scmp.eq.s32.totalorder %s21, 0
    %p257 = por %p255, %p256
    %p258 = scmp.ne.s32.totalorder %s244, %s245
    %p259 = scmp.eq.s32.totalorder %s22, 1
    %p260 = por %p258, %p259
    %p262 = scmp.ne.s32.totalorder %s245, %s261
    %p263 = scmp.eq.s32.totalorder %s22, 0
    %p264 = por %p262, %p263
    %p265 = scmp.le.s32.totalorder 1, %s16
    %p266 = scmp.lt.s32.totalorder %s16, 3
    %p267 = pnand %p265, %p266
    %p268 = pneg %p267
    // Predicated region
    $region9: #{embedding_block_forward.1} parent=5 // pred_check
      _
    $region10: #{embedding_block_forward.1} parent=5 // pred_check_branch
      %270 = sbr.rel (%p267) target = $region12
    $region11: #{embedding_block_forward.1} parent=5 // pred_region
      %s271 = ssub.s32 %s16, 1
      // Predicated region
      $region13: #{embedding_block_forward.1} parent=11 // pred_check
        %p272 = pneg %p63
      $region14: #{embedding_block_forward.1} parent=11 // pred_check_branch
        %274 = sbr.rel (%p272) target = $region16
      $region15: #{embedding_block_forward.1} parent=11 // pred_region
        _
      $region16: #{embedding_block_forward.1} parent=11 // pred_fallthru
        _
      // Predicated region
      $region17: #{embedding_block_forward.1} parent=11 // pred_check
        %p275 = pneg %p84
      $region18: #{embedding_block_forward.1} parent=11 // pred_check_branch
        %277 = sbr.rel (%p275) target = $region20
      $region19: #{embedding_block_forward.1} parent=11 // pred_region
        _
      $region20: #{embedding_block_forward.1} parent=11 // pred_fallthru
        _
      // Predicated region
      $region21: #{embedding_block_forward.1} parent=11 // pred_check
        %p278 = pneg %p105
      $region22: #{embedding_block_forward.1} parent=11 // pred_check_branch
        %280 = sbr.rel (%p278) target = $region24
      $region23: #{embedding_block_forward.1} parent=11 // pred_region
        _
      $region24: #{embedding_block_forward.1} parent=11 // pred_fallthru
        _
      // Predicated region
      $region25: #{embedding_block_forward.1} parent=11 // pred_check
        %p281 = pneg %p126
      $region26: #{embedding_block_forward.1} parent=11 // pred_check_branch
        %283 = sbr.rel (%p281) target = $region28
      $region27: #{embedding_block_forward.1} parent=11 // pred_region
        _
      $region28: #{embedding_block_forward.1} parent=11 // pred_fallthru
        _
      // Predicated region
      $region29: #{embedding_block_forward.1} parent=11 // pred_check
        %p284 = pneg %p147
      $region30: #{embedding_block_forward.1} parent=11 // pred_check_branch
        %286 = sbr.rel (%p284) target = $region32
      $region31: #{embedding_block_forward.1} parent=11 // pred_region
        _
      $region32: #{embedding_block_forward.1} parent=11 // pred_fallthru
        _
      // Predicated region
      $region33: #{embedding_block_forward.1} parent=11 // pred_check
        %p287 = pneg %p168
      $region34: #{embedding_block_forward.1} parent=11 // pred_check_branch
        %289 = sbr.rel (%p287) target = $region36
      $region35: #{embedding_block_forward.1} parent=11 // pred_region
        _
      $region36: #{embedding_block_forward.1} parent=11 // pred_fallthru
        _
      // Predicated region
      $region37: #{embedding_block_forward.1} parent=11 // pred_check
        %p290 = pneg %p189
      $region38: #{embedding_block_forward.1} parent=11 // pred_check_branch
        %292 = sbr.rel (%p290) target = $region40
      $region39: #{embedding_block_forward.1} parent=11 // pred_region
        _
      $region40: #{embedding_block_forward.1} parent=11 // pred_fallthru
        _
      // Predicated region
      $region41: #{embedding_block_forward.1} parent=11 // pred_check
        %p293 = pneg %p210
      $region42: #{embedding_block_forward.1} parent=11 // pred_check_branch
        %295 = sbr.rel (%p293) target = $region44
      $region43: #{embedding_block_forward.1} parent=11 // pred_region
        _
      $region44: #{embedding_block_forward.1} parent=11 // pred_fallthru
        _
      // Predicated region
      $region45: #{embedding_block_forward.1} parent=11 // pred_check
        %p296 = pneg %p231
      $region46: #{embedding_block_forward.1} parent=11 // pred_check_branch
        %298 = sbr.rel (%p296) target = $region48
      $region47: #{embedding_block_forward.1} parent=11 // pred_region
        _
      $region48: #{embedding_block_forward.1} parent=11 // pred_fallthru
        _
    $region12: #{embedding_block_forward.1} parent=5 // pred_fallthru
      _
    %p299 = scmp.lt.s32.totalorder %s16, 2
    // Predicated region
    $region49: #{embedding_block_forward.1} parent=5 // pred_check
      %p300 = pneg %p299
    $region50: #{embedding_block_forward.1} parent=5 // pred_check_branch
      %302 = sbr.rel (%p300) target = $region52
    $region51: #{embedding_block_forward.1} parent=5 // pred_region
      // Predicated region
      $region53: #{embedding_block_forward.1} parent=51 // pred_check
        %p303 = pneg %p36
      $region54: #{embedding_block_forward.1} parent=51 // pred_check_branch
        %305 = sbr.rel (%p303) target = $region56
      $region55: #{embedding_block_forward.1} parent=51 // pred_region
        %p306 = scmp.lt.s32.totalorder %s16, 1
        %s307 = scalar_select %p306, %s16, 1
        %s308 = smul.addr %s307, 2
        %s309 = smul.addr %s308, 8
        %s310 = scalar_lea.vmem %s0, %s309
      $region56: #{embedding_block_forward.1} parent=51 // pred_fallthru
        _
    $region52: #{embedding_block_forward.1} parent=5 // pred_fallthru
      _
    %p311 = scmp.le.s32.totalorder 1, %s16
    %p312 = scmp.lt.s32.totalorder %s16, 3
    %p313 = pnand %p311, %p312
    %p314 = pneg %p313
    // Predicated region
    $region57: #{embedding_block_forward.1} parent=5 // pred_check
      _
    $region58: #{embedding_block_forward.1} parent=5 // pred_check_branch
      %316 = sbr.rel (%p313) target = $region60
    $region59: #{embedding_block_forward.1} parent=5 // pred_region
      %s317 = ssub.s32 %s16, 1
      %p318 = scmp.lt.s32.totalorder %s21, 1
      %s319 = scalar_select %p318, %s21, 1
      %s320 = smul.addr %s319, 2
      %s321 = smul.addr %s320, 8
      %s322 = scalar_lea.vmem %s0, %s321
      %p323 = pneg %p42
      %p324 = pneg %p39
      %p325 = pneg %p63
      %p326 = pneg %p60
      %p327 = pneg %p84
      %p328 = pneg %p81
      %p329 = pneg %p105
      %p330 = pneg %p102
      %p331 = pneg %p126
      %p332 = pneg %p123
      %p333 = pneg %p147
      %p334 = pneg %p144
      %p335 = pneg %p168
      %p336 = pneg %p165
      %p337 = pneg %p189
      %p338 = pneg %p186
      %p339 = pneg %p210
      %p340 = pneg %p207
      %p341 = pneg %p231
      %p342 = pneg %p228
      %p343 = pneg %p257
      %p344 = pneg %p254
      %p345 = scmp.lt.s32.totalorder %s21, 1
      %s346 = scalar_select %p345, %s21, 1
      %s347 = smul.addr %s346, 8
      %s348 = scalar_lea.vmem %s10, %s347
      %p349 = scmp.lt.s32.totalorder %s21, 1
      %s350 = scalar_select %p349, %s21, 1
      %s351 = smul.addr %s350, 2
      %s352 = smul.addr %s351, 8
      %s353 = scalar_lea.vmem %s0, %s352
      %p354 = scmp.lt.s32.totalorder %s21, 1
      %s355 = scalar_select %p354, %s21, 1
      %s356 = smul.addr %s355, 8
      %s357 = scalar_lea.vmem %s10, %s356
      %v359 = vld [vmem:[%s353] sm:$0xff]
      %v360 = vld [vmem:[%s353 + $0x8] sm:$0xff]
      %v361 = vpack.c.bf16 %v359, %v359
      %v362 = vpack.c.bf16 %v360, %v360
      %v363 = vld [vmem:[%s1] sm:$0xf]
      %v364 = vld [vmem:[%s2] sm:$0xff]
      %366 = vset.pattern.permute.xlu0 0
      %367 = vperm.xlu0 %366, %v364
      %v368 = vpop.permute.xlu0 %367
      %vm370 = vcmask 64512
      %v372 = vsel %vm370, %v363, 0
      %vm374 = vcmask 1043456
      %v376 = vsel %vm374, %v361, 0
      %v379 = vsel %vm374, %v362, 0
      %381 = vmatprep.subr.bf16.mxu0 %v379
      %382 = vmatpush1.bf16.msra.mxu0 %v376
      %383 = vmatprep.subr.bf16.mxu0 0
      %384 = vmatpush1.bf16.msra.mxu0 0
      %385 = vmatprep.subr.bf16.mxu0 0
      %386 = vmatpush1.bf16.msra.mxu0 0
      %387 = vmatprep.subr.bf16.mxu0 0
      %388 = vmatpush1.bf16.msra.mxu0 0
      %389 = vmatprep.subr.bf16.mxu0 0
      %390 = vmatpush1.bf16.msra.mxu0 0
      %391 = vmatprep.subr.bf16.mxu0 0
      %392 = vmatpush1.bf16.msra.mxu0 0
      %393 = vmatprep.subr.bf16.mxu0 0
      %394 = vmatpush1.bf16.msra.mxu0 0
      %395 = vmatprep.subr.bf16.mxu0 0
      %396 = vmatpush1.bf16.msra.mxu0 0
      %397 = vmatprep.subr.bf16.mxu0 0
      %398 = vmatpush1.bf16.msra.mxu0 0
      %399 = vmatprep.subr.bf16.mxu0 0
      %400 = vmatpush1.bf16.msra.mxu0 0
      %401 = vmatprep.subr.bf16.mxu0 0
      %402 = vmatpush1.bf16.msra.mxu0 0
      %403 = vmatprep.subr.bf16.mxu0 0
      %404 = vmatpush1.bf16.msra.mxu0 0
      %405 = vmatprep.subr.bf16.mxu0 0
      %406 = vmatpush1.bf16.msra.mxu0 0
      %407 = vmatprep.subr.bf16.mxu0 0
      %408 = vmatpush1.bf16.msra.mxu0 0
      %409 = vmatprep.subr.bf16.mxu0 0
      %410 = vmatpush1.bf16.msra.mxu0 0
      %411 = vmatprep.subr.bf16.mxu0 0
      %412 = vmatpush1.bf16.msra.mxu0 0
      %413 = vmatprep.mubr.bf16.mxu0 0
      %414 = vmatmul.mubr.bf16.gmra.mrb[0].mxu0 %v372
      %v415 = vpop.f32.mrb[0].mxu0
      %v416 = vadd.f32 %v368, %v415
      %v417 = vpop.f32.mrb[0].mxu0
      %v418 = vadd.f32 %v368, %v417
      %v419 = vpop.f32.mrb[0].mxu0
      %v420 = vpop.f32.mrb[0].mxu0
      %421 = vdwg.mxu0
      %v422 = vmax.f32 %v416, 0.0
      %v423 = vmax.f32 %v418, 0.0
      %v424 = vld [vmem:[%s6] sm:$0xff]
      %v425 = vld [vmem:[%s6 + $0x8] sm:$0xff]
      %v426 = vld [vmem:[%s6 + $0x10] sm:$0xff]
      %v427 = vld [vmem:[%s6 + $0x18] sm:$0xff]
      %v428 = vld [vmem:[%s6 + $0x20] sm:$0xff]
      %v429 = vld [vmem:[%s6 + $0x28] sm:$0xff]
      %v430 = vld [vmem:[%s6 + $0x30] sm:$0xff]
      %v431 = vld [vmem:[%s6 + $0x38] sm:$0xff]
      %v432 = vld [vmem:[%s6 + $0x40] sm:$0xff]
      %v433 = vld [vmem:[%s6 + $0x48] sm:$0xff]
      %v434 = vld [vmem:[%s6 + $0x50] sm:$0xff]
      %v435 = vld [vmem:[%s6 + $0x58] sm:$0xff]
      %v436 = vld [vmem:[%s6 + $0x60] sm:$0xff]
      %v437 = vld [vmem:[%s6 + $0x68] sm:$0xff]
      %v438 = vld [vmem:[%s6 + $0x70] sm:$0xff]
      %v439 = vld [vmem:[%s6 + $0x78] sm:$0xff]
      %v440 = vld [vmem:[%s6 + $0x80] sm:$0xff]
      %v441 = vld [vmem:[%s6 + $0x88] sm:$0xff]
      %v442 = vld [vmem:[%s6 + $0x90] sm:$0xff]
      %v443 = vld [vmem:[%s6 + $0x98] sm:$0xff]
      %v444 = vld [vmem:[%s6 + $0xa0] sm:$0xff]
      %v445 = vld [vmem:[%s6 + $0xa8] sm:$0xff]
      %v446 = vld [vmem:[%s6 + $0xb0] sm:$0xff]
      %v447 = vld [vmem:[%s6 + $0xb8] sm:$0xff]
      %v448 = vld [vmem:[%s6 + $0xc0] sm:$0xff]
      %v449 = vld [vmem:[%s6 + $0xc8] sm:$0xff]
      %v450 = vld [vmem:[%s6 + $0xd0] sm:$0xff]
      %v451 = vld [vmem:[%s6 + $0xd8] sm:$0xff]
      %v452 = vld [vmem:[%s6 + $0xe0] sm:$0xff]
      %v453 = vld [vmem:[%s6 + $0xe8] sm:$0xff]
      %v454 = vld [vmem:[%s6 + $0xf0] sm:$0xff]
      %v455 = vld [vmem:[%s6 + $0xf8] sm:$0xff]
      %456 = vmatprep.subr.mxu0 0.0
      %457 = vmatpush1.msra.mxu0 %v424
      %458 = vmatprep.subr.mxu0 0.0
      %459 = vmatpush1.msra.mxu0 %v425
      %460 = vmatprep.subr.mxu0 0.0
      %461 = vmatpush1.msra.mxu0 %v426
      %462 = vmatprep.subr.mxu0 0.0
      %463 = vmatpush1.msra.mxu0 %v427
      %464 = vmatprep.subr.mxu0 0.0
      %465 = vmatpush1.msra.mxu0 %v428
      %466 = vmatprep.subr.mxu0 0.0
      %467 = vmatpush1.msra.mxu0 %v429
      %468 = vmatprep.subr.mxu0 0.0
      %469 = vmatpush1.msra.mxu0 %v430
      %470 = vmatprep.subr.mxu0 0.0
      %471 = vmatpush1.msra.mxu0 %v431
      %472 = vmatprep.subr.mxu0 0.0
      %473 = vmatpush1.msra.mxu0 %v432
      %474 = vmatprep.subr.mxu0 0.0
      %475 = vmatpush1.msra.mxu0 %v433
      %476 = vmatprep.subr.mxu0 0.0
      %477 = vmatpush1.msra.mxu0 %v434
      %478 = vmatprep.subr.mxu0 0.0
      %479 = vmatpush1.msra.mxu0 %v435
      %480 = vmatprep.subr.mxu0 0.0
      %481 = vmatpush1.msra.mxu0 %v436
      %482 = vmatprep.subr.mxu0 0.0
      %483 = vmatpush1.msra.mxu0 %v437
      %484 = vmatprep.subr.mxu0 0.0
      %485 = vmatpush1.msra.mxu0 %v438
      %486 = vmatprep.subr.mxu0 0.0
      %487 = vmatpush1.msra.mxu0 %v439
      %488 = vmatprep.subr.mxu0 0.0
      %489 = vmatpush1.msra.mxu0 %v440
      %490 = vmatprep.subr.mxu0 0.0
      %491 = vmatpush1.msra.mxu0 %v441
      %492 = vmatprep.subr.mxu0 0.0
      %493 = vmatpush1.msra.mxu0 %v442
      %494 = vmatprep.subr.mxu0 0.0
      %495 = vmatpush1.msra.mxu0 %v443
      %496 = vmatprep.subr.mxu0 0.0
      %497 = vmatpush1.msra.mxu0 %v444
      %498 = vmatprep.subr.mxu0 0.0
      %499 = vmatpush1.msra.mxu0 %v445
      %500 = vmatprep.subr.mxu0 0.0
      %501 = vmatpush1.msra.mxu0 %v446
      %502 = vmatprep.subr.mxu0 0.0
      %503 = vmatpush1.msra.mxu0 %v447
      %504 = vmatprep.subr.mxu0 0.0
      %505 = vmatpush1.msra.mxu0 %v448
      %506 = vmatprep.subr.mxu0 0.0
      %507 = vmatpush1.msra.mxu0 %v449
      %508 = vmatprep.subr.mxu0 0.0
      %509 = vmatpush1.msra.mxu0 %v450
      %510 = vmatprep.subr.mxu0 0.0
      %511 = vmatpush1.msra.mxu0 %v451
      %512 = vmatprep.subr.mxu0 0.0
      %513 = vmatpush1.msra.mxu0 %v452
      %514 = vmatprep.subr.mxu0 0.0
      %515 = vmatpush1.msra.mxu0 %v453
      %516 = vmatprep.subr.mxu0 0.0
      %517 = vmatpush1.msra.mxu0 %v454
      %518 = vmatprep.subr.mxu0 0.0
      %519 = vmatpush1.msra.mxu0 %v455
      %520 = vmatprep.mubr.f32.mxu0 %v360
      %521 = vmatmul.mubr.f32.gmra.mrb[0].mxu0 %v359
      %v522 = vpop.f32.mrb[0].mxu0
      %v523 = vadd.f32 0.0, %v522
      %v524 = vpop.f32.mrb[0].mxu0
      %525 = vdwg.mxu0
      %v526 = vld [vmem:[%s5] sm:$0xff]
      %v527 = vld [vmem:[%s5 + $0x8] sm:$0xff]
      %v528 = vld [vmem:[%s5 + $0x10] sm:$0xff]
      %v529 = vmul.f32 %v526, %v523
      %v530 = vmul.f32 %v527, %v523
      %v531 = vmul.f32 %v528, %v523
      %vm532 = vcmask 130048
      %v533 = vsel %vm532, %v529, 0.0
      %v534 = vrot.slane %v533, 4
      %v535 = vadd.f32 %v533, %v534
      %v536 = vrot.slane %v535, 2
      %v537 = vadd.f32 %v535, %v536
      %v538 = vrot.slane %v537, 1
      %v539 = vadd.f32 %v537, %v538
      %v540 = vsel %vm532, %v530, 0.0
      %v541 = vrot.slane %v540, 4
      %v542 = vadd.f32 %v540, %v541
      %v543 = vrot.slane %v542, 2
      %v544 = vadd.f32 %v542, %v543
      %v545 = vrot.slane %v544, 1
      %v546 = vadd.f32 %v544, %v545
      %v547 = vsel %vm532, %v531, 0.0
      %v548 = vrot.slane %v547, 4
      %v549 = vadd.f32 %v547, %v548
      %v550 = vrot.slane %v549, 2
      %v551 = vadd.f32 %v549, %v550
      %v552 = vrot.slane %v551, 1
      %v553 = vadd.f32 %v551, %v552
      %v554 = vrcp.pop 8.0
      %v555 = vmul.f32 %v539, %v554
      %v556 = vmul.f32 %v546, %v554
      %v557 = vmul.f32 %v553, %v554
      %vm561 = vcmask 1041409
      %v562 = vsel %vm561, %v556, %v555
      %vm563 = vcmask 1042434
      %v564 = vsel %vm563, %v557, %v562
      %vm566 = vcmask 124928
      %v567 = vsel %vm566, %v564, inf
      %568 = vmin.xlane.f32.xlu0 %v567
      %v569 = vpop.xlane.xlu0 %568
      %v571 = vrot.slane %v569, 1
      %v572 = vrot.slane %v569, 2
      %v576 = vsub.f32 %v555, %v569
      %v577 = vsub.f32 %v556, %v571
      %v578 = vsub.f32 %v557, %v572
      %v582 = vrot.slane %v577, 7
      %v583 = vsel %vm561, %v582, %v576
      %v584 = vrot.slane %v578, 6
      %v585 = vsel %vm563, %v584, %v583
      %v587 = vsel %vm566, %v585, -inf
      %588 = vmax.xlane.f32.xlu0 %v587
      %v589 = vpop.xlane.xlu0 %588
      %vm590 = vcmp.gt.f32.partialorder %v589, 0.0
      %v591 = vsel %vm590, %v589, 1.0
      %v593 = vrot.slane %v591, 1
      %v594 = vrot.slane %v591, 2
      %v598 = vrcp.pop %v591
      %v599 = vmul.f32 %v576, %v598
      %v600 = vrcp.pop %v593
      %v601 = vmul.f32 %v577, %v600
      %v602 = vrcp.pop %v594
      %v603 = vmul.f32 %v578, %v602
      %v607 = vrot.slane %v601, 7
      %v608 = vsel %vm561, %v607, %v599
      %v609 = vrot.slane %v603, 6
      %v610 = vsel %vm563, %v609, %v608
      %v612 = vsel %vm566, %v610, 0.0
      %v613 = vrot.slane %v612, 4
      %v614 = vadd.f32 %v612, %v613
      %v615 = vrot.slane %v614, 2
      %v616 = vadd.f32 %v614, %v615
      %v617 = vrot.slane %v616, 1
      %v618 = vadd.f32 %v616, %v617
      %v619 = vrcp.pop 3.0
      %v620 = vmul.f32 %v618, %v619
      %v621 = vld [vmem:[%s7] sm:$0xff]
      %v622 = vld [vmem:[%s7 + $0x8] sm:$0xff]
      %v623 = vld [vmem:[%s7 + $0x10] sm:$0xff]
      %v624 = vld [vmem:[%s7 + $0x18] sm:$0xff]
      %v626 = vsel %vm532, %v620, 0
      %628 = vmatprep.subr.mxu0 %v622
      %629 = vmatpush1.msra.mxu0 %v621
      %630 = vmatprep.subr.mxu0 %v624
      %631 = vmatpush1.msra.mxu0 %v623
      %632 = vmatprep.subr.mxu0 0.0
      %633 = vmatpush1.msra.mxu0 0.0
      %634 = vmatprep.subr.mxu0 0.0
      %635 = vmatpush1.msra.mxu0 0.0
      %636 = vmatprep.subr.mxu0 0.0
      %637 = vmatpush1.msra.mxu0 0.0
      %638 = vmatprep.subr.mxu0 0.0
      %639 = vmatpush1.msra.mxu0 0.0
      %640 = vmatprep.subr.mxu0 0.0
      %641 = vmatpush1.msra.mxu0 0.0
      %642 = vmatprep.subr.mxu0 0.0
      %643 = vmatpush1.msra.mxu0 0.0
      %644 = vmatprep.subr.mxu0 0.0
      %645 = vmatpush1.msra.mxu0 0.0
      %646 = vmatprep.subr.mxu0 0.0
      %647 = vmatpush1.msra.mxu0 0.0
      %648 = vmatprep.subr.mxu0 0.0
      %649 = vmatpush1.msra.mxu0 0.0
      %650 = vmatprep.subr.mxu0 0.0
      %651 = vmatpush1.msra.mxu0 0.0
      %652 = vmatprep.subr.mxu0 0.0
      %653 = vmatpush1.msra.mxu0 0.0
      %654 = vmatprep.subr.mxu0 0.0
      %655 = vmatpush1.msra.mxu0 0.0
      %656 = vmatprep.subr.mxu0 0.0
      %657 = vmatpush1.msra.mxu0 0.0
      %658 = vmatprep.subr.mxu0 0.0
      %659 = vmatpush1.msra.mxu0 0.0
      %660 = vmatprep.subr.mxu0 0.0
      %661 = vmatpush1.msra.mxu0 0.0
      %662 = vmatprep.subr.mxu0 0.0
      %663 = vmatpush1.msra.mxu0 0.0
      %664 = vmatprep.subr.mxu0 0.0
      %665 = vmatpush1.msra.mxu0 0.0
      %666 = vmatprep.subr.mxu0 0.0
      %667 = vmatpush1.msra.mxu0 0.0
      %668 = vmatprep.subr.mxu0 0.0
      %669 = vmatpush1.msra.mxu0 0.0
      %670 = vmatprep.subr.mxu0 0.0
      %671 = vmatpush1.msra.mxu0 0.0
      %672 = vmatprep.subr.mxu0 0.0
      %673 = vmatpush1.msra.mxu0 0.0
      %674 = vmatprep.subr.mxu0 0.0
      %675 = vmatpush1.msra.mxu0 0.0
      %676 = vmatprep.subr.mxu0 0.0
      %677 = vmatpush1.msra.mxu0 0.0
      %678 = vmatprep.subr.mxu0 0.0
      %679 = vmatpush1.msra.mxu0 0.0
      %680 = vmatprep.subr.mxu0 0.0
      %681 = vmatpush1.msra.mxu0 0.0
      %682 = vmatprep.subr.mxu0 0.0
      %683 = vmatpush1.msra.mxu0 0.0
      %684 = vmatprep.subr.mxu0 0.0
      %685 = vmatpush1.msra.mxu0 0.0
      %686 = vmatprep.subr.mxu0 0.0
      %687 = vmatpush1.msra.mxu0 0.0
      %688 = vmatprep.subr.mxu0 0.0
      %689 = vmatpush1.msra.mxu0 0.0
      %690 = vmatprep.subr.mxu0 0.0
      %691 = vmatpush1.msra.mxu0 0.0
      %692 = vmatprep.mubr.f32.mxu0 0.0
      %693 = vmatmul.mubr.f32.gmra.mrb[0].mxu0 %v626
      %v694 = vpop.f32.mrb[0].mxu0
      %v695 = vadd.f32 0.0, %v694
      %v696 = vpop.f32.mrb[0].mxu0
      %v697 = vadd.f32 0.0, %v696
      %698 = vdwg.mxu0
      %v699 = vlaneseq
      %v700 = vshrl.u32 %v699, 7
      %v701 = vsub.s32 0, %v700
      %v702 = vrot.slane %v695, %v701
      %v703 = vlaneseq
      %v704 = vshrl.u32 %v703, 7
      %v705 = vsub.s32 0, %v704
      %v706 = vrot.slane %v697, %v705
      %v707 = vmul.f32 %v702, %v422
      %v708 = vmul.f32 %v706, %v423
      %v709 = vadd.f32 %v359, %v707
      %v710 = vadd.f32 %v360, %v708
      %v711 = vpack.c.bf16 %v709, %v709
      %v712 = vpack.c.bf16 %v710, %v710
      %v713 = vld [vmem:[%s8] sm:$0xff]
      %v714 = vld [vmem:[%s8 + $0x8] sm:$0xff]
      %v715 = vld [vmem:[%s8 + $0x10] sm:$0xff]
      %v716 = vld [vmem:[%s8 + $0x18] sm:$0xff]
      %v717 = vld [vmem:[%s8 + $0x20] sm:$0xff]
      %v718 = vld [vmem:[%s8 + $0x28] sm:$0xff]
      %v719 = vld [vmem:[%s8 + $0x30] sm:$0xff]
      %v720 = vld [vmem:[%s8 + $0x38] sm:$0xff]
      %v721 = vld [vmem:[%s8 + $0x40] sm:$0xff]
      %v722 = vld [vmem:[%s8 + $0x48] sm:$0xff]
      %v723 = vld [vmem:[%s8 + $0x50] sm:$0xff]
      %v724 = vld [vmem:[%s8 + $0x58] sm:$0xff]
      %v725 = vld [vmem:[%s8 + $0x60] sm:$0xff]
      %v726 = vld [vmem:[%s8 + $0x68] sm:$0xff]
      %v727 = vld [vmem:[%s8 + $0x70] sm:$0xff]
      %v728 = vld [vmem:[%s8 + $0x78] sm:$0xff]
      %v729 = vld [vmem:[%s8 + $0x80] sm:$0xff]
      %v730 = vld [vmem:[%s8 + $0x88] sm:$0xff]
      %v731 = vld [vmem:[%s8 + $0x90] sm:$0xff]
      %v732 = vld [vmem:[%s8 + $0x98] sm:$0xff]
      %v733 = vld [vmem:[%s8 + $0xa0] sm:$0xff]
      %v734 = vld [vmem:[%s8 + $0xa8] sm:$0xff]
      %v735 = vld [vmem:[%s8 + $0xb0] sm:$0xff]
      %v736 = vld [vmem:[%s8 + $0xb8] sm:$0xff]
      %v737 = vld [vmem:[%s8 + $0xc0] sm:$0xff]
      %v738 = vld [vmem:[%s8 + $0xc8] sm:$0xff]
      %v739 = vld [vmem:[%s8 + $0xd0] sm:$0xff]
      %v740 = vld [vmem:[%s8 + $0xd8] sm:$0xff]
      %v741 = vld [vmem:[%s8 + $0xe0] sm:$0xff]
      %v742 = vld [vmem:[%s8 + $0xe8] sm:$0xff]
      %v743 = vld [vmem:[%s8 + $0xf0] sm:$0xff]
      %v744 = vld [vmem:[%s8 + $0xf8] sm:$0xff]
      %v777 = vunpack.c.l.b16 %v713
      %v778 = vunpack.c.h.b16 %v713
      %v779 = vunpack.c.l.b16 %v714
      %v780 = vunpack.c.h.b16 %v714
      %v781 = vunpack.c.l.b16 %v715
      %v782 = vunpack.c.h.b16 %v715
      %v783 = vunpack.c.l.b16 %v716
      %v784 = vunpack.c.h.b16 %v716
      %v785 = vunpack.c.l.b16 %v717
      %v786 = vunpack.c.h.b16 %v717
      %v787 = vunpack.c.l.b16 %v718
      %v788 = vunpack.c.h.b16 %v718
      %v789 = vunpack.c.l.b16 %v719
      %v790 = vunpack.c.h.b16 %v719
      %v791 = vunpack.c.l.b16 %v720
      %v792 = vunpack.c.h.b16 %v720
      %v793 = vunpack.c.l.b16 %v721
      %v794 = vunpack.c.h.b16 %v721
      %v795 = vunpack.c.l.b16 %v722
      %v796 = vunpack.c.h.b16 %v722
      %v797 = vunpack.c.l.b16 %v723
      %v798 = vunpack.c.h.b16 %v723
      %v799 = vunpack.c.l.b16 %v724
      %v800 = vunpack.c.h.b16 %v724
      %v801 = vunpack.c.l.b16 %v725
      %v802 = vunpack.c.h.b16 %v725
      %v803 = vunpack.c.l.b16 %v726
      %v804 = vunpack.c.h.b16 %v726
      %v805 = vunpack.c.l.b16 %v727
      %v806 = vunpack.c.h.b16 %v727
      %v807 = vunpack.c.l.b16 %v728
      %v808 = vunpack.c.h.b16 %v728
      %v809 = vunpack.c.l.b16 %v729
      %v810 = vunpack.c.h.b16 %v729
      %v811 = vunpack.c.l.b16 %v730
      %v812 = vunpack.c.h.b16 %v730
      %v813 = vunpack.c.l.b16 %v731
      %v814 = vunpack.c.h.b16 %v731
      %v815 = vunpack.c.l.b16 %v732
      %v816 = vunpack.c.h.b16 %v732
      %v817 = vunpack.c.l.b16 %v733
      %v818 = vunpack.c.h.b16 %v733
      %v819 = vunpack.c.l.b16 %v734
      %v820 = vunpack.c.h.b16 %v734
      %v821 = vunpack.c.l.b16 %v735
      %v822 = vunpack.c.h.b16 %v735
      %v823 = vunpack.c.l.b16 %v736
      %v824 = vunpack.c.h.b16 %v736
      %v825 = vunpack.c.l.b16 %v737
      %v826 = vunpack.c.h.b16 %v737
      %v827 = vunpack.c.l.b16 %v738
      %v828 = vunpack.c.h.b16 %v738
      %v829 = vunpack.c.l.b16 %v739
      %v830 = vunpack.c.h.b16 %v739
      %v831 = vunpack.c.l.b16 %v740
      %v832 = vunpack.c.h.b16 %v740
      %v833 = vunpack.c.l.b16 %v741
      %v834 = vunpack.c.h.b16 %v741
      %v835 = vunpack.c.l.b16 %v742
      %v836 = vunpack.c.h.b16 %v742
      %v837 = vunpack.c.l.b16 %v743
      %v838 = vunpack.c.h.b16 %v743
      %v839 = vunpack.c.l.b16 %v744
      %v840 = vunpack.c.h.b16 %v744
      %v841 = vpack.c.b16 %v779, %v777
      %v842 = vpack.c.b16 %v780, %v778
      %v843 = vpack.c.b16 %v783, %v781
      %v844 = vpack.c.b16 %v784, %v782
      %v845 = vpack.c.b16 %v787, %v785
      %v846 = vpack.c.b16 %v788, %v786
      %v847 = vpack.c.b16 %v791, %v789
      %v848 = vpack.c.b16 %v792, %v790
      %v849 = vpack.c.b16 %v795, %v793
      %v850 = vpack.c.b16 %v796, %v794
      %v851 = vpack.c.b16 %v799, %v797
      %v852 = vpack.c.b16 %v800, %v798
      %v853 = vpack.c.b16 %v803, %v801
      %v854 = vpack.c.b16 %v804, %v802
      %v855 = vpack.c.b16 %v807, %v805
      %v856 = vpack.c.b16 %v808, %v806
      %v857 = vpack.c.b16 %v811, %v809
      %v858 = vpack.c.b16 %v812, %v810
      %v859 = vpack.c.b16 %v815, %v813
      %v860 = vpack.c.b16 %v816, %v814
      %v861 = vpack.c.b16 %v819, %v817
      %v862 = vpack.c.b16 %v820, %v818
      %v863 = vpack.c.b16 %v823, %v821
      %v864 = vpack.c.b16 %v824, %v822
      %v865 = vpack.c.b16 %v827, %v825
      %v866 = vpack.c.b16 %v828, %v826
      %v867 = vpack.c.b16 %v831, %v829
      %v868 = vpack.c.b16 %v832, %v830
      %v869 = vpack.c.b16 %v835, %v833
      %v870 = vpack.c.b16 %v836, %v834
      %v871 = vpack.c.b16 %v839, %v837
      %v872 = vpack.c.b16 %v840, %v838
      %905 = vmatprep.subr.bf16.mxu0 %v842
      %906 = vmatpush1.bf16.msra.mxu0 %v841
      %907 = vmatprep.subr.bf16.mxu0 %v844
      %908 = vmatpush1.bf16.msra.mxu0 %v843
      %909 = vmatprep.subr.bf16.mxu0 %v846
      %910 = vmatpush1.bf16.msra.mxu0 %v845
      %911 = vmatprep.subr.bf16.mxu0 %v848
      %912 = vmatpush1.bf16.msra.mxu0 %v847
      %913 = vmatprep.subr.bf16.mxu0 %v850
      %914 = vmatpush1.bf16.msra.mxu0 %v849
      %915 = vmatprep.subr.bf16.mxu0 %v852
      %916 = vmatpush1.bf16.msra.mxu0 %v851
      %917 = vmatprep.subr.bf16.mxu0 %v854
      %918 = vmatpush1.bf16.msra.mxu0 %v853
      %919 = vmatprep.subr.bf16.mxu0 %v856
      %920 = vmatpush1.bf16.msra.mxu0 %v855
      %921 = vmatprep.subr.bf16.mxu0 %v858
      %922 = vmatpush1.bf16.msra.mxu0 %v857
      %923 = vmatprep.subr.bf16.mxu0 %v860
      %924 = vmatpush1.bf16.msra.mxu0 %v859
      %925 = vmatprep.subr.bf16.mxu0 %v862
      %926 = vmatpush1.bf16.msra.mxu0 %v861
      %927 = vmatprep.subr.bf16.mxu0 %v864
      %928 = vmatpush1.bf16.msra.mxu0 %v863
      %929 = vmatprep.subr.bf16.mxu0 %v866
      %930 = vmatpush1.bf16.msra.mxu0 %v865
      %931 = vmatprep.subr.bf16.mxu0 %v868
      %932 = vmatpush1.bf16.msra.mxu0 %v867
      %933 = vmatprep.subr.bf16.mxu0 %v870
      %934 = vmatpush1.bf16.msra.mxu0 %v869
      %935 = vmatprep.subr.bf16.mxu0 %v872
      %936 = vmatpush1.bf16.msra.mxu0 %v871
      %937 = vmatprep.mubr.bf16.mxu0 %v712
      %938 = vmatmul.mubr.bf16.gmra.mrb[0].mxu0 %v711
      %v939 = vpop.f32.mrb[0].mxu0
      %v940 = vadd.f32 0.0, %v939
      %v941 = vpop.f32.mrb[0].mxu0
      %v942 = vadd.f32 0.0, %v941
      %v943 = vpop.f32.mrb[0].mxu0
      %v944 = vpop.f32.mrb[0].mxu0
      %945 = vdwg.mxu0
      %v946 = vld [vmem:[%s3] sm:$0xf]
      %v947 = vpack.c.bf16 %v940, %v940
      %v948 = vpack.c.bf16 %v942, %v942
      %s949 = scalar_lea.vmem %s8, 256
      %v950 = vld [vmem:[%s949] sm:$0xff]
      %v951 = vld [vmem:[%s949 + $0x8] sm:$0xff]
      %v952 = vld [vmem:[%s949 + $0x10] sm:$0xff]
      %v953 = vld [vmem:[%s949 + $0x18] sm:$0xff]
      %v954 = vld [vmem:[%s949 + $0x20] sm:$0xff]
      %v955 = vld [vmem:[%s949 + $0x28] sm:$0xff]
      %v956 = vld [vmem:[%s949 + $0x30] sm:$0xff]
      %v957 = vld [vmem:[%s949 + $0x38] sm:$0xff]
      %v958 = vld [vmem:[%s949 + $0x40] sm:$0xff]
      %v959 = vld [vmem:[%s949 + $0x48] sm:$0xff]
      %v960 = vld [vmem:[%s949 + $0x50] sm:$0xff]
      %v961 = vld [vmem:[%s949 + $0x58] sm:$0xff]
      %v962 = vld [vmem:[%s949 + $0x60] sm:$0xff]
      %v963 = vld [vmem:[%s949 + $0x68] sm:$0xff]
      %v964 = vld [vmem:[%s949 + $0x70] sm:$0xff]
      %v965 = vld [vmem:[%s949 + $0x78] sm:$0xff]
      %v966 = vld [vmem:[%s949 + $0x80] sm:$0xff]
      %v967 = vld [vmem:[%s949 + $0x88] sm:$0xff]
      %v968 = vld [vmem:[%s949 + $0x90] sm:$0xff]
      %v969 = vld [vmem:[%s949 + $0x98] sm:$0xff]
      %v970 = vld [vmem:[%s949 + $0xa0] sm:$0xff]
      %v971 = vld [vmem:[%s949 + $0xa8] sm:$0xff]
      %v972 = vld [vmem:[%s949 + $0xb0] sm:$0xff]
      %v973 = vld [vmem:[%s949 + $0xb8] sm:$0xff]
      %v974 = vld [vmem:[%s949 + $0xc0] sm:$0xff]
      %v975 = vld [vmem:[%s949 + $0xc8] sm:$0xff]
      %v976 = vld [vmem:[%s949 + $0xd0] sm:$0xff]
      %v977 = vld [vmem:[%s949 + $0xd8] sm:$0xff]
      %v978 = vld [vmem:[%s949 + $0xe0] sm:$0xff]
      %v979 = vld [vmem:[%s949 + $0xe8] sm:$0xff]
      %v980 = vld [vmem:[%s949 + $0xf0] sm:$0xff]
      %v981 = vld [vmem:[%s949 + $0xf8] sm:$0xff]
      %v1014 = vunpack.c.l.b16 %v950
      %v1015 = vunpack.c.h.b16 %v950
      %v1016 = vunpack.c.l.b16 %v951
      %v1017 = vunpack.c.h.b16 %v951
      %v1018 = vunpack.c.l.b16 %v952
      %v1019 = vunpack.c.h.b16 %v952
      %v1020 = vunpack.c.l.b16 %v953
      %v1021 = vunpack.c.h.b16 %v953
      %v1022 = vunpack.c.l.b16 %v954
      %v1023 = vunpack.c.h.b16 %v954
      %v1024 = vunpack.c.l.b16 %v955
      %v1025 = vunpack.c.h.b16 %v955
      %v1026 = vunpack.c.l.b16 %v956
      %v1027 = vunpack.c.h.b16 %v956
      %v1028 = vunpack.c.l.b16 %v957
      %v1029 = vunpack.c.h.b16 %v957
      %v1030 = vunpack.c.l.b16 %v958
      %v1031 = vunpack.c.h.b16 %v958
      %v1032 = vunpack.c.l.b16 %v959
      %v1033 = vunpack.c.h.b16 %v959
      %v1034 = vunpack.c.l.b16 %v960
      %v1035 = vunpack.c.h.b16 %v960
      %v1036 = vunpack.c.l.b16 %v961
      %v1037 = vunpack.c.h.b16 %v961
      %v1038 = vunpack.c.l.b16 %v962
      %v1039 = vunpack.c.h.b16 %v962
      %v1040 = vunpack.c.l.b16 %v963
      %v1041 = vunpack.c.h.b16 %v963
      %v1042 = vunpack.c.l.b16 %v964
      %v1043 = vunpack.c.h.b16 %v964
      %v1044 = vunpack.c.l.b16 %v965
      %v1045 = vunpack.c.h.b16 %v965
      %v1046 = vunpack.c.l.b16 %v966
      %v1047 = vunpack.c.h.b16 %v966
      %v1048 = vunpack.c.l.b16 %v967
      %v1049 = vunpack.c.h.b16 %v967
      %v1050 = vunpack.c.l.b16 %v968
      %v1051 = vunpack.c.h.b16 %v968
      %v1052 = vunpack.c.l.b16 %v969
      %v1053 = vunpack.c.h.b16 %v969
      %v1054 = vunpack.c.l.b16 %v970
      %v1055 = vunpack.c.h.b16 %v970
      %v1056 = vunpack.c.l.b16 %v971
      %v1057 = vunpack.c.h.b16 %v971
      %v1058 = vunpack.c.l.b16 %v972
      %v1059 = vunpack.c.h.b16 %v972
      %v1060 = vunpack.c.l.b16 %v973
      %v1061 = vunpack.c.h.b16 %v973
      %v1062 = vunpack.c.l.b16 %v974
      %v1063 = vunpack.c.h.b16 %v974
      %v1064 = vunpack.c.l.b16 %v975
      %v1065 = vunpack.c.h.b16 %v975
      %v1066 = vunpack.c.l.b16 %v976
      %v1067 = vunpack.c.h.b16 %v976
      %v1068 = vunpack.c.l.b16 %v977
      %v1069 = vunpack.c.h.b16 %v977
      %v1070 = vunpack.c.l.b16 %v978
      %v1071 = vunpack.c.h.b16 %v978
      %v1072 = vunpack.c.l.b16 %v979
      %v1073 = vunpack.c.h.b16 %v979
      %v1074 = vunpack.c.l.b16 %v980
      %v1075 = vunpack.c.h.b16 %v980
      %v1076 = vunpack.c.l.b16 %v981
      %v1077 = vunpack.c.h.b16 %v981
      %v1078 = vpack.c.b16 %v1016, %v1014
      %v1079 = vpack.c.b16 %v1017, %v1015
      %v1080 = vpack.c.b16 %v1020, %v1018
      %v1081 = vpack.c.b16 %v1021, %v1019
      %v1082 = vpack.c.b16 %v1024, %v1022
      %v1083 = vpack.c.b16 %v1025, %v1023
      %v1084 = vpack.c.b16 %v1028, %v1026
      %v1085 = vpack.c.b16 %v1029, %v1027
      %v1086 = vpack.c.b16 %v1032, %v1030
      %v1087 = vpack.c.b16 %v1033, %v1031
      %v1088 = vpack.c.b16 %v1036, %v1034
      %v1089 = vpack.c.b16 %v1037, %v1035
      %v1090 = vpack.c.b16 %v1040, %v1038
      %v1091 = vpack.c.b16 %v1041, %v1039
      %v1092 = vpack.c.b16 %v1044, %v1042
      %v1093 = vpack.c.b16 %v1045, %v1043
      %v1094 = vpack.c.b16 %v1048, %v1046
      %v1095 = vpack.c.b16 %v1049, %v1047
      %v1096 = vpack.c.b16 %v1052, %v1050
      %v1097 = vpack.c.b16 %v1053, %v1051
      %v1098 = vpack.c.b16 %v1056, %v1054
      %v1099 = vpack.c.b16 %v1057, %v1055
      %v1100 = vpack.c.b16 %v1060, %v1058
      %v1101 = vpack.c.b16 %v1061, %v1059
      %v1102 = vpack.c.b16 %v1064, %v1062
      %v1103 = vpack.c.b16 %v1065, %v1063
      %v1104 = vpack.c.b16 %v1068, %v1066
      %v1105 = vpack.c.b16 %v1069, %v1067
      %v1106 = vpack.c.b16 %v1072, %v1070
      %v1107 = vpack.c.b16 %v1073, %v1071
      %v1108 = vpack.c.b16 %v1076, %v1074
      %v1109 = vpack.c.b16 %v1077, %v1075
      %1142 = vmatprep.subr.bf16.mxu0 %v1079
      %1143 = vmatpush1.bf16.msra.mxu0 %v1078
      %1144 = vmatprep.subr.bf16.mxu0 %v1081
      %1145 = vmatpush1.bf16.msra.mxu0 %v1080
      %1146 = vmatprep.subr.bf16.mxu0 %v1083
      %1147 = vmatpush1.bf16.msra.mxu0 %v1082
      %1148 = vmatprep.subr.bf16.mxu0 %v1085
      %1149 = vmatpush1.bf16.msra.mxu0 %v1084
      %1150 = vmatprep.subr.bf16.mxu0 %v1087
      %1151 = vmatpush1.bf16.msra.mxu0 %v1086
      %1152 = vmatprep.subr.bf16.mxu0 %v1089
      %1153 = vmatpush1.bf16.msra.mxu0 %v1088
      %1154 = vmatprep.subr.bf16.mxu0 %v1091
      %1155 = vmatpush1.bf16.msra.mxu0 %v1090
      %1156 = vmatprep.subr.bf16.mxu0 %v1093
      %1157 = vmatpush1.bf16.msra.mxu0 %v1092
      %1158 = vmatprep.subr.bf16.mxu0 %v1095
      %1159 = vmatpush1.bf16.msra.mxu0 %v1094
      %1160 = vmatprep.subr.bf16.mxu0 %v1097
      %1161 = vmatpush1.bf16.msra.mxu0 %v1096
      %1162 = vmatprep.subr.bf16.mxu0 %v1099
      %1163 = vmatpush1.bf16.msra.mxu0 %v1098
      %1164 = vmatprep.subr.bf16.mxu0 %v1101
      %1165 = vmatpush1.bf16.msra.mxu0 %v1100
      %1166 = vmatprep.subr.bf16.mxu0 %v1103
      %1167 = vmatpush1.bf16.msra.mxu0 %v1102
      %1168 = vmatprep.subr.bf16.mxu0 %v1105
      %1169 = vmatpush1.bf16.msra.mxu0 %v1104
      %1170 = vmatprep.subr.bf16.mxu0 %v1107
      %1171 = vmatpush1.bf16.msra.mxu0 %v1106
      %1172 = vmatprep.subr.bf16.mxu0 %v1109
      %1173 = vmatpush1.bf16.msra.mxu0 %v1108
      %1174 = vmatprep.mubr.bf16.mxu0 %v712
      %1175 = vmatmul.mubr.bf16.gmra.mrb[0].mxu0 %v711
      %v1176 = vpop.f32.mrb[0].mxu0
      %v1177 = vadd.f32 0.0, %v1176
      %v1178 = vpop.f32.mrb[0].mxu0
      %v1179 = vadd.f32 0.0, %v1178
      %v1180 = vpop.f32.mrb[0].mxu0
      %v1181 = vpop.f32.mrb[0].mxu0
      %1182 = vdwg.mxu0
      %s1183 = scalar_lea.vmem %s3, 4
      %v1184 = vld [vmem:[%s1183] sm:$0xf]
      %v1185 = vpack.c.bf16 %v1177, %v1177
      %v1186 = vpack.c.bf16 %v1179, %v1179
      %v1188 = vsel %vm370, %v1184, 0
      %v1191 = vsel %vm374, %v1185, 0
      %v1194 = vsel %vm374, %v1186, 0
      %1196 = vmatprep.subr.bf16.mxu0 %v1194
      %1197 = vmatpush1.bf16.msra.mxu0 %v1191
      %1198 = vmatprep.subr.bf16.mxu0 0
      %1199 = vmatpush1.bf16.msra.mxu0 0
      %1200 = vmatprep.subr.bf16.mxu0 0
      %1201 = vmatpush1.bf16.msra.mxu0 0
      %1202 = vmatprep.subr.bf16.mxu0 0
      %1203 = vmatpush1.bf16.msra.mxu0 0
      %1204 = vmatprep.subr.bf16.mxu0 0
      %1205 = vmatpush1.bf16.msra.mxu0 0
      %1206 = vmatprep.subr.bf16.mxu0 0
      %1207 = vmatpush1.bf16.msra.mxu0 0
      %1208 = vmatprep.subr.bf16.mxu0 0
      %1209 = vmatpush1.bf16.msra.mxu0 0
      %1210 = vmatprep.subr.bf16.mxu0 0
      %1211 = vmatpush1.bf16.msra.mxu0 0
      %1212 = vmatprep.subr.bf16.mxu0 0
      %1213 = vmatpush1.bf16.msra.mxu0 0
      %1214 = vmatprep.subr.bf16.mxu0 0
      %1215 = vmatpush1.bf16.msra.mxu0 0
      %1216 = vmatprep.subr.bf16.mxu0 0
      %1217 = vmatpush1.bf16.msra.mxu0 0
      %1218 = vmatprep.subr.bf16.mxu0 0
      %1219 = vmatpush1.bf16.msra.mxu0 0
      %1220 = vmatprep.subr.bf16.mxu0 0
      %1221 = vmatpush1.bf16.msra.mxu0 0
      %1222 = vmatprep.subr.bf16.mxu0 0
      %1223 = vmatpush1.bf16.msra.mxu0 0
      %1224 = vmatprep.subr.bf16.mxu0 0
      %1225 = vmatpush1.bf16.msra.mxu0 0
      %1226 = vmatprep.subr.bf16.mxu0 0
      %1227 = vmatpush1.bf16.msra.mxu0 0
      %1228 = vmatprep.mubr.bf16.mxu0 0
      %1229 = vmatmul.mubr.bf16.gmra.mrb[0].mxu0 %v1188
      %v1230 = vpop.f32.mrb[0].mxu0
      %v1231 = vadd.f32 0.0, %v1230
      %v1232 = vpop.f32.mrb[0].mxu0
      %v1233 = vadd.f32 0.0, %v1232
      %v1234 = vpop.f32.mrb[0].mxu0
      %v1235 = vpop.f32.mrb[0].mxu0
      %1236 = vdwg.mxu0
      %v1238 = vsel %vm370, %v946, 0
      %v1241 = vsel %vm374, %v947, 0
      %v1244 = vsel %vm374, %v948, 0
      %1246 = vmatprep.subr.bf16.mxu0 %v1244
      %1247 = vmatpush1.bf16.msra.mxu0 %v1241
      %1248 = vmatprep.subr.bf16.mxu0 0
      %1249 = vmatpush1.bf16.msra.mxu0 0
      %1250 = vmatprep.subr.bf16.mxu0 0
      %1251 = vmatpush1.bf16.msra.mxu0 0
      %1252 = vmatprep.subr.bf16.mxu0 0
      %1253 = vmatpush1.bf16.msra.mxu0 0
      %1254 = vmatprep.subr.bf16.mxu0 0
      %1255 = vmatpush1.bf16.msra.mxu0 0
      %1256 = vmatprep.subr.bf16.mxu0 0
      %1257 = vmatpush1.bf16.msra.mxu0 0
      %1258 = vmatprep.subr.bf16.mxu0 0
      %1259 = vmatpush1.bf16.msra.mxu0 0
      %1260 = vmatprep.subr.bf16.mxu0 0
      %1261 = vmatpush1.bf16.msra.mxu0 0
      %1262 = vmatprep.subr.bf16.mxu0 0
      %1263 = vmatpush1.bf16.msra.mxu0 0
      %1264 = vmatprep.subr.bf16.mxu0 0
      %1265 = vmatpush1.bf16.msra.mxu0 0
      %1266 = vmatprep.subr.bf16.mxu0 0
      %1267 = vmatpush1.bf16.msra.mxu0 0
      %1268 = vmatprep.subr.bf16.mxu0 0
      %1269 = vmatpush1.bf16.msra.mxu0 0
      %1270 = vmatprep.subr.bf16.mxu0 0
      %1271 = vmatpush1.bf16.msra.mxu0 0
      %1272 = vmatprep.subr.bf16.mxu0 0
      %1273 = vmatpush1.bf16.msra.mxu0 0
      %1274 = vmatprep.subr.bf16.mxu0 0
      %1275 = vmatpush1.bf16.msra.mxu0 0
      %1276 = vmatprep.subr.bf16.mxu0 0
      %1277 = vmatpush1.bf16.msra.mxu0 0
      %1278 = vmatprep.mubr.bf16.mxu0 0
      %1279 = vmatmul.mubr.bf16.gmra.mrb[0].mxu0 %v1238
      %v1280 = vpop.f32.mrb[0].mxu0
      %v1281 = vadd.f32 %v1231, %v1280
      %v1282 = vpop.f32.mrb[0].mxu0
      %v1283 = vadd.f32 %v1233, %v1282
      %v1284 = vpop.f32.mrb[0].mxu0
      %v1285 = vpop.f32.mrb[0].mxu0
      %1286 = vdwg.mxu0
      %s1287 = scalar_lea.vmem %s8, 512
      %v1288 = vld [vmem:[%s1287] sm:$0xff]
      %v1289 = vld [vmem:[%s1287 + $0x8] sm:$0xff]
      %v1290 = vld [vmem:[%s1287 + $0x10] sm:$0xff]
      %v1291 = vld [vmem:[%s1287 + $0x18] sm:$0xff]
      %v1292 = vld [vmem:[%s1287 + $0x20] sm:$0xff]
      %v1293 = vld [vmem:[%s1287 + $0x28] sm:$0xff]
      %v1294 = vld [vmem:[%s1287 + $0x30] sm:$0xff]
      %v1295 = vld [vmem:[%s1287 + $0x38] sm:$0xff]
      %v1296 = vld [vmem:[%s1287 + $0x40] sm:$0xff]
      %v1297 = vld [vmem:[%s1287 + $0x48] sm:$0xff]
      %v1298 = vld [vmem:[%s1287 + $0x50] sm:$0xff]
      %v1299 = vld [vmem:[%s1287 + $0x58] sm:$0xff]
      %v1300 = vld [vmem:[%s1287 + $0x60] sm:$0xff]
      %v1301 = vld [vmem:[%s1287 + $0x68] sm:$0xff]
      %v1302 = vld [vmem:[%s1287 + $0x70] sm:$0xff]
      %v1303 = vld [vmem:[%s1287 + $0x78] sm:$0xff]
      %v1304 = vld [vmem:[%s1287 + $0x80] sm:$0xff]
      %v1305 = vld [vmem:[%s1287 + $0x88] sm:$0xff]
      %v1306 = vld [vmem:[%s1287 + $0x90] sm:$0xff]
      %v1307 = vld [vmem:[%s1287 + $0x98] sm:$0xff]
      %v1308 = vld [vmem:[%s1287 + $0xa0] sm:$0xff]
      %v1309 = vld [vmem:[%s1287 + $0xa8] sm:$0xff]
      %v1310 = vld [vmem:[%s1287 + $0xb0] sm:$0xff]
      %v1311 = vld [vmem:[%s1287 + $0xb8] sm:$0xff]
      %v1312 = vld [vmem:[%s1287 + $0xc0] sm:$0xff]
      %v1313 = vld [vmem:[%s1287 + $0xc8] sm:$0xff]
      %v1314 = vld [vmem:[%s1287 + $0xd0] sm:$0xff]
      %v1315 = vld [vmem:[%s1287 + $0xd8] sm:$0xff]
      %v1316 = vld [vmem:[%s1287 + $0xe0] sm:$0xff]
      %v1317 = vld [vmem:[%s1287 + $0xe8] sm:$0xff]
      %v1318 = vld [vmem:[%s1287 + $0xf0] sm:$0xff]
      %v1319 = vld [vmem:[%s1287 + $0xf8] sm:$0xff]
      %v1352 = vunpack.c.l.b16 %v1288
      %v1353 = vunpack.c.h.b16 %v1288
      %v1354 = vunpack.c.l.b16 %v1289
      %v1355 = vunpack.c.h.b16 %v1289
      %v1356 = vunpack.c.l.b16 %v1290
      %v1357 = vunpack.c.h.b16 %v1290
      %v1358 = vunpack.c.l.b16 %v1291
      %v1359 = vunpack.c.h.b16 %v1291
      %v1360 = vunpack.c.l.b16 %v1292
      %v1361 = vunpack.c.h.b16 %v1292
      %v1362 = vunpack.c.l.b16 %v1293
      %v1363 = vunpack.c.h.b16 %v1293
      %v1364 = vunpack.c.l.b16 %v1294
      %v1365 = vunpack.c.h.b16 %v1294
      %v1366 = vunpack.c.l.b16 %v1295
      %v1367 = vunpack.c.h.b16 %v1295
      %v1368 = vunpack.c.l.b16 %v1296
      %v1369 = vunpack.c.h.b16 %v1296
      %v1370 = vunpack.c.l.b16 %v1297
      %v1371 = vunpack.c.h.b16 %v1297
      %v1372 = vunpack.c.l.b16 %v1298
      %v1373 = vunpack.c.h.b16 %v1298
      %v1374 = vunpack.c.l.b16 %v1299
      %v1375 = vunpack.c.h.b16 %v1299
      %v1376 = vunpack.c.l.b16 %v1300
      %v1377 = vunpack.c.h.b16 %v1300
      %v1378 = vunpack.c.l.b16 %v1301
      %v1379 = vunpack.c.h.b16 %v1301
      %v1380 = vunpack.c.l.b16 %v1302
      %v1381 = vunpack.c.h.b16 %v1302
      %v1382 = vunpack.c.l.b16 %v1303
      %v1383 = vunpack.c.h.b16 %v1303
      %v1384 = vunpack.c.l.b16 %v1304
      %v1385 = vunpack.c.h.b16 %v1304
      %v1386 = vunpack.c.l.b16 %v1305
      %v1387 = vunpack.c.h.b16 %v1305
      %v1388 = vunpack.c.l.b16 %v1306
      %v1389 = vunpack.c.h.b16 %v1306
      %v1390 = vunpack.c.l.b16 %v1307
      %v1391 = vunpack.c.h.b16 %v1307
      %v1392 = vunpack.c.l.b16 %v1308
      %v1393 = vunpack.c.h.b16 %v1308
      %v1394 = vunpack.c.l.b16 %v1309
      %v1395 = vunpack.c.h.b16 %v1309
      %v1396 = vunpack.c.l.b16 %v1310
      %v1397 = vunpack.c.h.b16 %v1310
      %v1398 = vunpack.c.l.b16 %v1311
      %v1399 = vunpack.c.h.b16 %v1311
      %v1400 = vunpack.c.l.b16 %v1312
      %v1401 = vunpack.c.h.b16 %v1312
      %v1402 = vunpack.c.l.b16 %v1313
      %v1403 = vunpack.c.h.b16 %v1313
      %v1404 = vunpack.c.l.b16 %v1314
      %v1405 = vunpack.c.h.b16 %v1314
      %v1406 = vunpack.c.l.b16 %v1315
      %v1407 = vunpack.c.h.b16 %v1315
      %v1408 = vunpack.c.l.b16 %v1316
      %v1409 = vunpack.c.h.b16 %v1316
      %v1410 = vunpack.c.l.b16 %v1317
      %v1411 = vunpack.c.h.b16 %v1317
      %v1412 = vunpack.c.l.b16 %v1318
      %v1413 = vunpack.c.h.b16 %v1318
      %v1414 = vunpack.c.l.b16 %v1319
      %v1415 = vunpack.c.h.b16 %v1319
      %v1416 = vpack.c.b16 %v1354, %v1352
      %v1417 = vpack.c.b16 %v1355, %v1353
      %v1418 = vpack.c.b16 %v1358, %v1356
      %v1419 = vpack.c.b16 %v1359, %v1357
      %v1420 = vpack.c.b16 %v1362, %v1360
      %v1421 = vpack.c.b16 %v1363, %v1361
      %v1422 = vpack.c.b16 %v1366, %v1364
      %v1423 = vpack.c.b16 %v1367, %v1365
      %v1424 = vpack.c.b16 %v1370, %v1368
      %v1425 = vpack.c.b16 %v1371, %v1369
      %v1426 = vpack.c.b16 %v1374, %v1372
      %v1427 = vpack.c.b16 %v1375, %v1373
      %v1428 = vpack.c.b16 %v1378, %v1376
      %v1429 = vpack.c.b16 %v1379, %v1377
      %v1430 = vpack.c.b16 %v1382, %v1380
      %v1431 = vpack.c.b16 %v1383, %v1381
      %v1432 = vpack.c.b16 %v1386, %v1384
      %v1433 = vpack.c.b16 %v1387, %v1385
      %v1434 = vpack.c.b16 %v1390, %v1388
      %v1435 = vpack.c.b16 %v1391, %v1389
      %v1436 = vpack.c.b16 %v1394, %v1392
      %v1437 = vpack.c.b16 %v1395, %v1393
      %v1438 = vpack.c.b16 %v1398, %v1396
      %v1439 = vpack.c.b16 %v1399, %v1397
      %v1440 = vpack.c.b16 %v1402, %v1400
      %v1441 = vpack.c.b16 %v1403, %v1401
      %v1442 = vpack.c.b16 %v1406, %v1404
      %v1443 = vpack.c.b16 %v1407, %v1405
      %v1444 = vpack.c.b16 %v1410, %v1408
      %v1445 = vpack.c.b16 %v1411, %v1409
      %v1446 = vpack.c.b16 %v1414, %v1412
      %v1447 = vpack.c.b16 %v1415, %v1413
      %1480 = vmatprep.subr.bf16.mxu0 %v1417
      %1481 = vmatpush1.bf16.msra.mxu0 %v1416
      %1482 = vmatprep.subr.bf16.mxu0 %v1419
      %1483 = vmatpush1.bf16.msra.mxu0 %v1418
      %1484 = vmatprep.subr.bf16.mxu0 %v1421
      %1485 = vmatpush1.bf16.msra.mxu0 %v1420
      %1486 = vmatprep.subr.bf16.mxu0 %v1423
      %1487 = vmatpush1.bf16.msra.mxu0 %v1422
      %1488 = vmatprep.subr.bf16.mxu0 %v1425
      %1489 = vmatpush1.bf16.msra.mxu0 %v1424
      %1490 = vmatprep.subr.bf16.mxu0 %v1427
      %1491 = vmatpush1.bf16.msra.mxu0 %v1426
      %1492 = vmatprep.subr.bf16.mxu0 %v1429
      %1493 = vmatpush1.bf16.msra.mxu0 %v1428
      %1494 = vmatprep.subr.bf16.mxu0 %v1431
      %1495 = vmatpush1.bf16.msra.mxu0 %v1430
      %1496 = vmatprep.subr.bf16.mxu0 %v1433
      %1497 = vmatpush1.bf16.msra.mxu0 %v1432
      %1498 = vmatprep.subr.bf16.mxu0 %v1435
      %1499 = vmatpush1.bf16.msra.mxu0 %v1434
      %1500 = vmatprep.subr.bf16.mxu0 %v1437
      %1501 = vmatpush1.bf16.msra.mxu0 %v1436
      %1502 = vmatprep.subr.bf16.mxu0 %v1439
      %1503 = vmatpush1.bf16.msra.mxu0 %v1438
      %1504 = vmatprep.subr.bf16.mxu0 %v1441
      %1505 = vmatpush1.bf16.msra.mxu0 %v1440
      %1506 = vmatprep.subr.bf16.mxu0 %v1443
      %1507 = vmatpush1.bf16.msra.mxu0 %v1442
      %1508 = vmatprep.subr.bf16.mxu0 %v1445
      %1509 = vmatpush1.bf16.msra.mxu0 %v1444
      %1510 = vmatprep.subr.bf16.mxu0 %v1447
      %1511 = vmatpush1.bf16.msra.mxu0 %v1446
      %1512 = vmatprep.mubr.bf16.mxu0 %v712
      %1513 = vmatmul.mubr.bf16.gmra.mrb[0].mxu0 %v711
      %v1514 = vpop.f32.mrb[0].mxu0
      %v1515 = vadd.f32 0.0, %v1514
      %v1516 = vpop.f32.mrb[0].mxu0
      %v1517 = vadd.f32 0.0, %v1516
      %v1518 = vpop.f32.mrb[0].mxu0
      %v1519 = vpop.f32.mrb[0].mxu0
      %1520 = vdwg.mxu0
      %s1521 = scalar_lea.vmem %s3, 8
      %v1522 = vld [vmem:[%s1521] sm:$0xf]
      %v1523 = vpack.c.bf16 %v1515, %v1515
      %v1524 = vpack.c.bf16 %v1517, %v1517
      %v1526 = vsel %vm370, %v1522, 0
      %v1529 = vsel %vm374, %v1523, 0
      %v1532 = vsel %vm374, %v1524, 0
      %1534 = vmatprep.subr.bf16.mxu0 %v1532
      %1535 = vmatpush1.bf16.msra.mxu0 %v1529
      %1536 = vmatprep.subr.bf16.mxu0 0
      %1537 = vmatpush1.bf16.msra.mxu0 0
      %1538 = vmatprep.subr.bf16.mxu0 0
      %1539 = vmatpush1.bf16.msra.mxu0 0
      %1540 = vmatprep.subr.bf16.mxu0 0
      %1541 = vmatpush1.bf16.msra.mxu0 0
      %1542 = vmatprep.subr.bf16.mxu0 0
      %1543 = vmatpush1.bf16.msra.mxu0 0
      %1544 = vmatprep.subr.bf16.mxu0 0
      %1545 = vmatpush1.bf16.msra.mxu0 0
      %1546 = vmatprep.subr.bf16.mxu0 0
      %1547 = vmatpush1.bf16.msra.mxu0 0
      %1548 = vmatprep.subr.bf16.mxu0 0
      %1549 = vmatpush1.bf16.msra.mxu0 0
      %1550 = vmatprep.subr.bf16.mxu0 0
      %1551 = vmatpush1.bf16.msra.mxu0 0
      %1552 = vmatprep.subr.bf16.mxu0 0
      %1553 = vmatpush1.bf16.msra.mxu0 0
      %1554 = vmatprep.subr.bf16.mxu0 0
      %1555 = vmatpush1.bf16.msra.mxu0 0
      %1556 = vmatprep.subr.bf16.mxu0 0
      %1557 = vmatpush1.bf16.msra.mxu0 0
      %1558 = vmatprep.subr.bf16.mxu0 0
      %1559 = vmatpush1.bf16.msra.mxu0 0
      %1560 = vmatprep.subr.bf16.mxu0 0
      %1561 = vmatpush1.bf16.msra.mxu0 0
      %1562 = vmatprep.subr.bf16.mxu0 0
      %1563 = vmatpush1.bf16.msra.mxu0 0
      %1564 = vmatprep.subr.bf16.mxu0 0
      %1565 = vmatpush1.bf16.msra.mxu0 0
      %1566 = vmatprep.mubr.bf16.mxu0 0
      %1567 = vmatmul.mubr.bf16.gmra.mrb[0].mxu0 %v1526
      %v1568 = vpop.f32.mrb[0].mxu0
      %v1569 = vadd.f32 0.0, %v1568
      %v1570 = vpop.f32.mrb[0].mxu0
      %v1571 = vadd.f32 0.0, %v1570
      %v1572 = vpop.f32.mrb[0].mxu0
      %v1573 = vpop.f32.mrb[0].mxu0
      %1574 = vdwg.mxu0
      %v1575 = vadd.f32 %v1281, %v1569
      %v1576 = vadd.f32 %v1283, %v1571
      %s1577 = scalar_lea.vmem %s8, 768
      %v1578 = vld [vmem:[%s1577] sm:$0xff]
      %v1579 = vld [vmem:[%s1577 + $0x8] sm:$0xff]
      %v1580 = vld [vmem:[%s1577 + $0x10] sm:$0xff]
      %v1581 = vld [vmem:[%s1577 + $0x18] sm:$0xff]
      %v1582 = vld [vmem:[%s1577 + $0x20] sm:$0xff]
      %v1583 = vld [vmem:[%s1577 + $0x28] sm:$0xff]
      %v1584 = vld [vmem:[%s1577 + $0x30] sm:$0xff]
      %v1585 = vld [vmem:[%s1577 + $0x38] sm:$0xff]
      %v1586 = vld [vmem:[%s1577 + $0x40] sm:$0xff]
      %v1587 = vld [vmem:[%s1577 + $0x48] sm:$0xff]
      %v1588 = vld [vmem:[%s1577 + $0x50] sm:$0xff]
      %v1589 = vld [vmem:[%s1577 + $0x58] sm:$0xff]
      %v1590 = vld [vmem:[%s1577 + $0x60] sm:$0xff]
      %v1591 = vld [vmem:[%s1577 + $0x68] sm:$0xff]
      %v1592 = vld [vmem:[%s1577 + $0x70] sm:$0xff]
      %v1593 = vld [vmem:[%s1577 + $0x78] sm:$0xff]
      %v1594 = vld [vmem:[%s1577 + $0x80] sm:$0xff]
      %v1595 = vld [vmem:[%s1577 + $0x88] sm:$0xff]
      %v1596 = vld [vmem:[%s1577 + $0x90] sm:$0xff]
      %v1597 = vld [vmem:[%s1577 + $0x98] sm:$0xff]
      %v1598 = vld [vmem:[%s1577 + $0xa0] sm:$0xff]
      %v1599 = vld [vmem:[%s1577 + $0xa8] sm:$0xff]
      %v1600 = vld [vmem:[%s1577 + $0xb0] sm:$0xff]
      %v1601 = vld [vmem:[%s1577 + $0xb8] sm:$0xff]
      %v1602 = vld [vmem:[%s1577 + $0xc0] sm:$0xff]
      %v1603 = vld [vmem:[%s1577 + $0xc8] sm:$0xff]
      %v1604 = vld [vmem:[%s1577 + $0xd0] sm:$0xff]
      %v1605 = vld [vmem:[%s1577 + $0xd8] sm:$0xff]
      %v1606 = vld [vmem:[%s1577 + $0xe0] sm:$0xff]
      %v1607 = vld [vmem:[%s1577 + $0xe8] sm:$0xff]
      %v1608 = vld [vmem:[%s1577 + $0xf0] sm:$0xff]
      %v1609 = vld [vmem:[%s1577 + $0xf8] sm:$0xff]
      %v1642 = vunpack.c.l.b16 %v1578
      %v1643 = vunpack.c.h.b16 %v1578
      %v1644 = vunpack.c.l.b16 %v1579
      %v1645 = vunpack.c.h.b16 %v1579
      %v1646 = vunpack.c.l.b16 %v1580
      %v1647 = vunpack.c.h.b16 %v1580
      %v1648 = vunpack.c.l.b16 %v1581
      %v1649 = vunpack.c.h.b16 %v1581
      %v1650 = vunpack.c.l.b16 %v1582
      %v1651 = vunpack.c.h.b16 %v1582
      %v1652 = vunpack.c.l.b16 %v1583
      %v1653 = vunpack.c.h.b16 %v1583
      %v1654 = vunpack.c.l.b16 %v1584
      %v1655 = vunpack.c.h.b16 %v1584
      %v1656 = vunpack.c.l.b16 %v1585
      %v1657 = vunpack.c.h.b16 %v1585
      %v1658 = vunpack.c.l.b16 %v1586
      %v1659 = vunpack.c.h.b16 %v1586
      %v1660 = vunpack.c.l.b16 %v1587
      %v1661 = vunpack.c.h.b16 %v1587
      %v1662 = vunpack.c.l.b16 %v1588
      %v1663 = vunpack.c.h.b16 %v1588
      %v1664 = vunpack.c.l.b16 %v1589
      %v1665 = vunpack.c.h.b16 %v1589
      %v1666 = vunpack.c.l.b16 %v1590
      %v1667 = vunpack.c.h.b16 %v1590
      %v1668 = vunpack.c.l.b16 %v1591
      %v1669 = vunpack.c.h.b16 %v1591
      %v1670 = vunpack.c.l.b16 %v1592
      %v1671 = vunpack.c.h.b16 %v1592
      %v1672 = vunpack.c.l.b16 %v1593
      %v1673 = vunpack.c.h.b16 %v1593
      %v1674 = vunpack.c.l.b16 %v1594
      %v1675 = vunpack.c.h.b16 %v1594
      %v1676 = vunpack.c.l.b16 %v1595
      %v1677 = vunpack.c.h.b16 %v1595
      %v1678 = vunpack.c.l.b16 %v1596
      %v1679 = vunpack.c.h.b16 %v1596
      %v1680 = vunpack.c.l.b16 %v1597
      %v1681 = vunpack.c.h.b16 %v1597
      %v1682 = vunpack.c.l.b16 %v1598
      %v1683 = vunpack.c.h.b16 %v1598
      %v1684 = vunpack.c.l.b16 %v1599
      %v1685 = vunpack.c.h.b16 %v1599
      %v1686 = vunpack.c.l.b16 %v1600
      %v1687 = vunpack.c.h.b16 %v1600
      %v1688 = vunpack.c.l.b16 %v1601
      %v1689 = vunpack.c.h.b16 %v1601
      %v1690 = vunpack.c.l.b16 %v1602
      %v1691 = vunpack.c.h.b16 %v1602
      %v1692 = vunpack.c.l.b16 %v1603
      %v1693 = vunpack.c.h.b16 %v1603
      %v1694 = vunpack.c.l.b16 %v1604
      %v1695 = vunpack.c.h.b16 %v1604
      %v1696 = vunpack.c.l.b16 %v1605
      %v1697 = vunpack.c.h.b16 %v1605
      %v1698 = vunpack.c.l.b16 %v1606
      %v1699 = vunpack.c.h.b16 %v1606
      %v1700 = vunpack.c.l.b16 %v1607
      %v1701 = vunpack.c.h.b16 %v1607
      %v1702 = vunpack.c.l.b16 %v1608
      %v1703 = vunpack.c.h.b16 %v1608
      %v1704 = vunpack.c.l.b16 %v1609
      %v1705 = vunpack.c.h.b16 %v1609
      %v1706 = vpack.c.b16 %v1644, %v1642
      %v1707 = vpack.c.b16 %v1645, %v1643
      %v1708 = vpack.c.b16 %v1648, %v1646
      %v1709 = vpack.c.b16 %v1649, %v1647
      %v1710 = vpack.c.b16 %v1652, %v1650
      %v1711 = vpack.c.b16 %v1653, %v1651
      %v1712 = vpack.c.b16 %v1656, %v1654
      %v1713 = vpack.c.b16 %v1657, %v1655
      %v1714 = vpack.c.b16 %v1660, %v1658
      %v1715 = vpack.c.b16 %v1661, %v1659
      %v1716 = vpack.c.b16 %v1664, %v1662
      %v1717 = vpack.c.b16 %v1665, %v1663
      %v1718 = vpack.c.b16 %v1668, %v1666
      %v1719 = vpack.c.b16 %v1669, %v1667
      %v1720 = vpack.c.b16 %v1672, %v1670
      %v1721 = vpack.c.b16 %v1673, %v1671
      %v1722 = vpack.c.b16 %v1676, %v1674
      %v1723 = vpack.c.b16 %v1677, %v1675
      %v1724 = vpack.c.b16 %v1680, %v1678
      %v1725 = vpack.c.b16 %v1681, %v1679
      %v1726 = vpack.c.b16 %v1684, %v1682
      %v1727 = vpack.c.b16 %v1685, %v1683
      %v1728 = vpack.c.b16 %v1688, %v1686
      %v1729 = vpack.c.b16 %v1689, %v1687
      %v1730 = vpack.c.b16 %v1692, %v1690
      %v1731 = vpack.c.b16 %v1693, %v1691
      %v1732 = vpack.c.b16 %v1696, %v1694
      %v1733 = vpack.c.b16 %v1697, %v1695
      %v1734 = vpack.c.b16 %v1700, %v1698
      %v1735 = vpack.c.b16 %v1701, %v1699
      %v1736 = vpack.c.b16 %v1704, %v1702
      %v1737 = vpack.c.b16 %v1705, %v1703
      %1770 = vmatprep.subr.bf16.mxu0 %v1707
      %1771 = vmatpush1.bf16.msra.mxu0 %v1706
      %1772 = vmatprep.subr.bf16.mxu0 %v1709
      %1773 = vmatpush1.bf16.msra.mxu0 %v1708
      %1774 = vmatprep.subr.bf16.mxu0 %v1711
      %1775 = vmatpush1.bf16.msra.mxu0 %v1710
      %1776 = vmatprep.subr.bf16.mxu0 %v1713
      %1777 = vmatpush1.bf16.msra.mxu0 %v1712
      %1778 = vmatprep.subr.bf16.mxu0 %v1715
      %1779 = vmatpush1.bf16.msra.mxu0 %v1714
      %1780 = vmatprep.subr.bf16.mxu0 %v1717
      %1781 = vmatpush1.bf16.msra.mxu0 %v1716
      %1782 = vmatprep.subr.bf16.mxu0 %v1719
      %1783 = vmatpush1.bf16.msra.mxu0 %v1718
      %1784 = vmatprep.subr.bf16.mxu0 %v1721
      %1785 = vmatpush1.bf16.msra.mxu0 %v1720
      %1786 = vmatprep.subr.bf16.mxu0 %v1723
      %1787 = vmatpush1.bf16.msra.mxu0 %v1722
      %1788 = vmatprep.subr.bf16.mxu0 %v1725
      %1789 = vmatpush1.bf16.msra.mxu0 %v1724
      %1790 = vmatprep.subr.bf16.mxu0 %v1727
      %1791 = vmatpush1.bf16.msra.mxu0 %v1726
      %1792 = vmatprep.subr.bf16.mxu0 %v1729
      %1793 = vmatpush1.bf16.msra.mxu0 %v1728
      %1794 = vmatprep.subr.bf16.mxu0 %v1731
      %1795 = vmatpush1.bf16.msra.mxu0 %v1730
      %1796 = vmatprep.subr.bf16.mxu0 %v1733
      %1797 = vmatpush1.bf16.msra.mxu0 %v1732
      %1798 = vmatprep.subr.bf16.mxu0 %v1735
      %1799 = vmatpush1.bf16.msra.mxu0 %v1734
      %1800 = vmatprep.subr.bf16.mxu0 %v1737
      %1801 = vmatpush1.bf16.msra.mxu0 %v1736
      %1802 = vmatprep.mubr.bf16.mxu0 %v712
      %1803 = vmatmul.mubr.bf16.gmra.mrb[0].mxu0 %v711
      %v1804 = vpop.f32.mrb[0].mxu0
      %v1805 = vadd.f32 0.0, %v1804
      %v1806 = vpop.f32.mrb[0].mxu0
      %v1807 = vadd.f32 0.0, %v1806
      %v1808 = vpop.f32.mrb[0].mxu0
      %v1809 = vpop.f32.mrb[0].mxu0
      %1810 = vdwg.mxu0
      %s1811 = scalar_lea.vmem %s3, 12
      %v1812 = vld [vmem:[%s1811] sm:$0xf]
      %v1813 = vpack.c.bf16 %v1805, %v1805
      %v1814 = vpack.c.bf16 %v1807, %v1807
      %v1816 = vsel %vm370, %v1812, 0
      %v1819 = vsel %vm374, %v1813, 0
      %v1822 = vsel %vm374, %v1814, 0
      %1824 = vmatprep.subr.bf16.mxu0 %v1822
      %1825 = vmatpush1.bf16.msra.mxu0 %v1819
      %1826 = vmatprep.subr.bf16.mxu0 0
      %1827 = vmatpush1.bf16.msra.mxu0 0
      %1828 = vmatprep.subr.bf16.mxu0 0
      %1829 = vmatpush1.bf16.msra.mxu0 0
      %1830 = vmatprep.subr.bf16.mxu0 0
      %1831 = vmatpush1.bf16.msra.mxu0 0
      %1832 = vmatprep.subr.bf16.mxu0 0
      %1833 = vmatpush1.bf16.msra.mxu0 0
      %1834 = vmatprep.subr.bf16.mxu0 0
      %1835 = vmatpush1.bf16.msra.mxu0 0
      %1836 = vmatprep.subr.bf16.mxu0 0
      %1837 = vmatpush1.bf16.msra.mxu0 0
      %1838 = vmatprep.subr.bf16.mxu0 0
      %1839 = vmatpush1.bf16.msra.mxu0 0
      %1840 = vmatprep.subr.bf16.mxu0 0
      %1841 = vmatpush1.bf16.msra.mxu0 0
      %1842 = vmatprep.subr.bf16.mxu0 0
      %1843 = vmatpush1.bf16.msra.mxu0 0
      %1844 = vmatprep.subr.bf16.mxu0 0
      %1845 = vmatpush1.bf16.msra.mxu0 0
      %1846 = vmatprep.subr.bf16.mxu0 0
      %1847 = vmatpush1.bf16.msra.mxu0 0
      %1848 = vmatprep.subr.bf16.mxu0 0
      %1849 = vmatpush1.bf16.msra.mxu0 0
      %1850 = vmatprep.subr.bf16.mxu0 0
      %1851 = vmatpush1.bf16.msra.mxu0 0
      %1852 = vmatprep.subr.bf16.mxu0 0
      %1853 = vmatpush1.bf16.msra.mxu0 0
      %1854 = vmatprep.subr.bf16.mxu0 0
      %1855 = vmatpush1.bf16.msra.mxu0 0
      %1856 = vmatprep.mubr.bf16.mxu0 0
      %1857 = vmatmul.mubr.bf16.gmra.mrb[0].mxu0 %v1816
      %v1858 = vpop.f32.mrb[0].mxu0
      %v1859 = vadd.f32 0.0, %v1858
      %v1860 = vpop.f32.mrb[0].mxu0
      %v1861 = vadd.f32 0.0, %v1860
      %v1862 = vpop.f32.mrb[0].mxu0
      %v1863 = vpop.f32.mrb[0].mxu0
      %1864 = vdwg.mxu0
      %v1865 = vadd.f32 %v1575, %v1859
      %v1866 = vadd.f32 %v1576, %v1861
      %s1867 = scalar_lea.vmem %s8, 1024
      %v1868 = vld [vmem:[%s1867] sm:$0xff]
      %v1869 = vld [vmem:[%s1867 + $0x8] sm:$0xff]
      %v1870 = vld [vmem:[%s1867 + $0x10] sm:$0xff]
      %v1871 = vld [vmem:[%s1867 + $0x18] sm:$0xff]
      %v1872 = vld [vmem:[%s1867 + $0x20] sm:$0xff]
      %v1873 = vld [vmem:[%s1867 + $0x28] sm:$0xff]
      %v1874 = vld [vmem:[%s1867 + $0x30] sm:$0xff]
      %v1875 = vld [vmem:[%s1867 + $0x38] sm:$0xff]
      %v1876 = vld [vmem:[%s1867 + $0x40] sm:$0xff]
      %v1877 = vld [vmem:[%s1867 + $0x48] sm:$0xff]
      %v1878 = vld [vmem:[%s1867 + $0x50] sm:$0xff]
      %v1879 = vld [vmem:[%s1867 + $0x58] sm:$0xff]
      %v1880 = vld [vmem:[%s1867 + $0x60] sm:$0xff]
      %v1881 = vld [vmem:[%s1867 + $0x68] sm:$0xff]
      %v1882 = vld [vmem:[%s1867 + $0x70] sm:$0xff]
      %v1883 = vld [vmem:[%s1867 + $0x78] sm:$0xff]
      %v1884 = vld [vmem:[%s1867 + $0x80] sm:$0xff]
      %v1885 = vld [vmem:[%s1867 + $0x88] sm:$0xff]
      %v1886 = vld [vmem:[%s1867 + $0x90] sm:$0xff]
      %v1887 = vld [vmem:[%s1867 + $0x98] sm:$0xff]
      %v1888 = vld [vmem:[%s1867 + $0xa0] sm:$0xff]
      %v1889 = vld [vmem:[%s1867 + $0xa8] sm:$0xff]
      %v1890 = vld [vmem:[%s1867 + $0xb0] sm:$0xff]
      %v1891 = vld [vmem:[%s1867 + $0xb8] sm:$0xff]
      %v1892 = vld [vmem:[%s1867 + $0xc0] sm:$0xff]
      %v1893 = vld [vmem:[%s1867 + $0xc8] sm:$0xff]
      %v1894 = vld [vmem:[%s1867 + $0xd0] sm:$0xff]
      %v1895 = vld [vmem:[%s1867 + $0xd8] sm:$0xff]
      %v1896 = vld [vmem:[%s1867 + $0xe0] sm:$0xff]
      %v1897 = vld [vmem:[%s1867 + $0xe8] sm:$0xff]
      %v1898 = vld [vmem:[%s1867 + $0xf0] sm:$0xff]
      %v1899 = vld [vmem:[%s1867 + $0xf8] sm:$0xff]
      %v1932 = vunpack.c.l.b16 %v1868
      %v1933 = vunpack.c.h.b16 %v1868
      %v1934 = vunpack.c.l.b16 %v1869
      %v1935 = vunpack.c.h.b16 %v1869
      %v1936 = vunpack.c.l.b16 %v1870
      %v1937 = vunpack.c.h.b16 %v1870
      %v1938 = vunpack.c.l.b16 %v1871
      %v1939 = vunpack.c.h.b16 %v1871
      %v1940 = vunpack.c.l.b16 %v1872
      %v1941 = vunpack.c.h.b16 %v1872
      %v1942 = vunpack.c.l.b16 %v1873
      %v1943 = vunpack.c.h.b16 %v1873
      %v1944 = vunpack.c.l.b16 %v1874
      %v1945 = vunpack.c.h.b16 %v1874
      %v1946 = vunpack.c.l.b16 %v1875
      %v1947 = vunpack.c.h.b16 %v1875
      %v1948 = vunpack.c.l.b16 %v1876
      %v1949 = vunpack.c.h.b16 %v1876
      %v1950 = vunpack.c.l.b16 %v1877
      %v1951 = vunpack.c.h.b16 %v1877
      %v1952 = vunpack.c.l.b16 %v1878
      %v1953 = vunpack.c.h.b16 %v1878
      %v1954 = vunpack.c.l.b16 %v1879
      %v1955 = vunpack.c.h.b16 %v1879
      %v1956 = vunpack.c.l.b16 %v1880
      %v1957 = vunpack.c.h.b16 %v1880
      %v1958 = vunpack.c.l.b16 %v1881
      %v1959 = vunpack.c.h.b16 %v1881
      %v1960 = vunpack.c.l.b16 %v1882
      %v1961 = vunpack.c.h.b16 %v1882
      %v1962 = vunpack.c.l.b16 %v1883
      %v1963 = vunpack.c.h.b16 %v1883
      %v1964 = vunpack.c.l.b16 %v1884
      %v1965 = vunpack.c.h.b16 %v1884
      %v1966 = vunpack.c.l.b16 %v1885
      %v1967 = vunpack.c.h.b16 %v1885
      %v1968 = vunpack.c.l.b16 %v1886
      %v1969 = vunpack.c.h.b16 %v1886
      %v1970 = vunpack.c.l.b16 %v1887
      %v1971 = vunpack.c.h.b16 %v1887
      %v1972 = vunpack.c.l.b16 %v1888
      %v1973 = vunpack.c.h.b16 %v1888
      %v1974 = vunpack.c.l.b16 %v1889
      %v1975 = vunpack.c.h.b16 %v1889
      %v1976 = vunpack.c.l.b16 %v1890
      %v1977 = vunpack.c.h.b16 %v1890
      %v1978 = vunpack.c.l.b16 %v1891
      %v1979 = vunpack.c.h.b16 %v1891
      %v1980 = vunpack.c.l.b16 %v1892
      %v1981 = vunpack.c.h.b16 %v1892
      %v1982 = vunpack.c.l.b16 %v1893
      %v1983 = vunpack.c.h.b16 %v1893
      %v1984 = vunpack.c.l.b16 %v1894
      %v1985 = vunpack.c.h.b16 %v1894
      %v1986 = vunpack.c.l.b16 %v1895
      %v1987 = vunpack.c.h.b16 %v1895
      %v1988 = vunpack.c.l.b16 %v1896
      %v1989 = vunpack.c.h.b16 %v1896
      %v1990 = vunpack.c.l.b16 %v1897
      %v1991 = vunpack.c.h.b16 %v1897
      %v1992 = vunpack.c.l.b16 %v1898
      %v1993 = vunpack.c.h.b16 %v1898
      %v1994 = vunpack.c.l.b16 %v1899
      %v1995 = vunpack.c.h.b16 %v1899
      %v1996 = vpack.c.b16 %v1934, %v1932
      %v1997 = vpack.c.b16 %v1935, %v1933
      %v1998 = vpack.c.b16 %v1938, %v1936
      %v1999 = vpack.c.b16 %v1939, %v1937
      %v2000 = vpack.c.b16 %v1942, %v1940
      %v2001 = vpack.c.b16 %v1943, %v1941
      %v2002 = vpack.c.b16 %v1946, %v1944
      %v2003 = vpack.c.b16 %v1947, %v1945
      %v2004 = vpack.c.b16 %v1950, %v1948
      %v2005 = vpack.c.b16 %v1951, %v1949
      %v2006 = vpack.c.b16 %v1954, %v1952
      %v2007 = vpack.c.b16 %v1955, %v1953
      %v2008 = vpack.c.b16 %v1958, %v1956
      %v2009 = vpack.c.b16 %v1959, %v1957
      %v2010 = vpack.c.b16 %v1962, %v1960
      %v2011 = vpack.c.b16 %v1963, %v1961
      %v2012 = vpack.c.b16 %v1966, %v1964
      %v2013 = vpack.c.b16 %v1967, %v1965
      %v2014 = vpack.c.b16 %v1970, %v1968
      %v2015 = vpack.c.b16 %v1971, %v1969
      %v2016 = vpack.c.b16 %v1974, %v1972
      %v2017 = vpack.c.b16 %v1975, %v1973
      %v2018 = vpack.c.b16 %v1978, %v1976
      %v2019 = vpack.c.b16 %v1979, %v1977
      %v2020 = vpack.c.b16 %v1982, %v1980
      %v2021 = vpack.c.b16 %v1983, %v1981
      %v2022 = vpack.c.b16 %v1986, %v1984
      %v2023 = vpack.c.b16 %v1987, %v1985
      %v2024 = vpack.c.b16 %v1990, %v1988
      %v2025 = vpack.c.b16 %v1991, %v1989
      %v2026 = vpack.c.b16 %v1994, %v1992
      %v2027 = vpack.c.b16 %v1995, %v1993
      %2060 = vmatprep.subr.bf16.mxu0 %v1997
      %2061 = vmatpush1.bf16.msra.mxu0 %v1996
      %2062 = vmatprep.subr.bf16.mxu0 %v1999
      %2063 = vmatpush1.bf16.msra.mxu0 %v1998
      %2064 = vmatprep.subr.bf16.mxu0 %v2001
      %2065 = vmatpush1.bf16.msra.mxu0 %v2000
      %2066 = vmatprep.subr.bf16.mxu0 %v2003
      %2067 = vmatpush1.bf16.msra.mxu0 %v2002
      %2068 = vmatprep.subr.bf16.mxu0 %v2005
      %2069 = vmatpush1.bf16.msra.mxu0 %v2004
      %2070 = vmatprep.subr.bf16.mxu0 %v2007
      %2071 = vmatpush1.bf16.msra.mxu0 %v2006
      %2072 = vmatprep.subr.bf16.mxu0 %v2009
      %2073 = vmatpush1.bf16.msra.mxu0 %v2008
      %2074 = vmatprep.subr.bf16.mxu0 %v2011
      %2075 = vmatpush1.bf16.msra.mxu0 %v2010
      %2076 = vmatprep.subr.bf16.mxu0 %v2013
      %2077 = vmatpush1.bf16.msra.mxu0 %v2012
      %2078 = vmatprep.subr.bf16.mxu0 %v2015
      %2079 = vmatpush1.bf16.msra.mxu0 %v2014
      %2080 = vmatprep.subr.bf16.mxu0 %v2017
      %2081 = vmatpush1.bf16.msra.mxu0 %v2016
      %2082 = vmatprep.subr.bf16.mxu0 %v2019
      %2083 = vmatpush1.bf16.msra.mxu0 %v2018
      %2084 = vmatprep.subr.bf16.mxu0 %v2021
      %2085 = vmatpush1.bf16.msra.mxu0 %v2020
      %2086 = vmatprep.subr.bf16.mxu0 %v2023
      %2087 = vmatpush1.bf16.msra.mxu0 %v2022
      %2088 = vmatprep.subr.bf16.mxu0 %v2025
      %2089 = vmatpush1.bf16.msra.mxu0 %v2024
      %2090 = vmatprep.subr.bf16.mxu0 %v2027
      %2091 = vmatpush1.bf16.msra.mxu0 %v2026
      %2092 = vmatprep.mubr.bf16.mxu0 %v712
      %2093 = vmatmul.mubr.bf16.gmra.mrb[0].mxu0 %v711
      %v2094 = vpop.f32.mrb[0].mxu0
      %v2095 = vadd.f32 0.0, %v2094
      %v2096 = vpop.f32.mrb[0].mxu0
      %v2097 = vadd.f32 0.0, %v2096
      %v2098 = vpop.f32.mrb[0].mxu0
      %v2099 = vpop.f32.mrb[0].mxu0
      %2100 = vdwg.mxu0
      %s2101 = scalar_lea.vmem %s3, 16
      %v2102 = vld [vmem:[%s2101] sm:$0xf]
      %v2103 = vpack.c.bf16 %v2095, %v2095
      %v2104 = vpack.c.bf16 %v2097, %v2097
      %v2106 = vsel %vm370, %v2102, 0
      %v2109 = vsel %vm374, %v2103, 0
      %v2112 = vsel %vm374, %v2104, 0
      %2114 = vmatprep.subr.bf16.mxu0 %v2112
      %2115 = vmatpush1.bf16.msra.mxu0 %v2109
      %2116 = vmatprep.subr.bf16.mxu0 0
      %2117 = vmatpush1.bf16.msra.mxu0 0
      %2118 = vmatprep.subr.bf16.mxu0 0
      %2119 = vmatpush1.bf16.msra.mxu0 0
      %2120 = vmatprep.subr.bf16.mxu0 0
      %2121 = vmatpush1.bf16.msra.mxu0 0
      %2122 = vmatprep.subr.bf16.mxu0 0
      %2123 = vmatpush1.bf16.msra.mxu0 0
      %2124 = vmatprep.subr.bf16.mxu0 0
      %2125 = vmatpush1.bf16.msra.mxu0 0
      %2126 = vmatprep.subr.bf16.mxu0 0
      %2127 = vmatpush1.bf16.msra.mxu0 0
      %2128 = vmatprep.subr.bf16.mxu0 0
      %2129 = vmatpush1.bf16.msra.mxu0 0
      %2130 = vmatprep.subr.bf16.mxu0 0
      %2131 = vmatpush1.bf16.msra.mxu0 0
      %2132 = vmatprep.subr.bf16.mxu0 0
      %2133 = vmatpush1.bf16.msra.mxu0 0
      %2134 = vmatprep.subr.bf16.mxu0 0
      %2135 = vmatpush1.bf16.msra.mxu0 0
      %2136 = vmatprep.subr.bf16.mxu0 0
      %2137 = vmatpush1.bf16.msra.mxu0 0
      %2138 = vmatprep.subr.bf16.mxu0 0
      %2139 = vmatpush1.bf16.msra.mxu0 0
      %2140 = vmatprep.subr.bf16.mxu0 0
      %2141 = vmatpush1.bf16.msra.mxu0 0
      %2142 = vmatprep.subr.bf16.mxu0 0
      %2143 = vmatpush1.bf16.msra.mxu0 0
      %2144 = vmatprep.subr.bf16.mxu0 0
      %2145 = vmatpush1.bf16.msra.mxu0 0
      %2146 = vmatprep.mubr.bf16.mxu0 0
      %2147 = vmatmul.mubr.bf16.gmra.mrb[0].mxu0 %v2106
      %v2148 = vpop.f32.mrb[0].mxu0
      %v2149 = vadd.f32 0.0, %v2148
      %v2150 = vpop.f32.mrb[0].mxu0
      %v2151 = vadd.f32 0.0, %v2150
      %v2152 = vpop.f32.mrb[0].mxu0
      %v2153 = vpop.f32.mrb[0].mxu0
      %2154 = vdwg.mxu0
      %v2155 = vadd.f32 %v1865, %v2149
      %v2156 = vadd.f32 %v1866, %v2151
      %s2157 = scalar_lea.vmem %s8, 1280
      %v2158 = vld [vmem:[%s2157] sm:$0xff]
      %v2159 = vld [vmem:[%s2157 + $0x8] sm:$0xff]
      %v2160 = vld [vmem:[%s2157 + $0x10] sm:$0xff]
      %v2161 = vld [vmem:[%s2157 + $0x18] sm:$0xff]
      %v2162 = vld [vmem:[%s2157 + $0x20] sm:$0xff]
      %v2163 = vld [vmem:[%s2157 + $0x28] sm:$0xff]
      %v2164 = vld [vmem:[%s2157 + $0x30] sm:$0xff]
      %v2165 = vld [vmem:[%s2157 + $0x38] sm:$0xff]
      %v2166 = vld [vmem:[%s2157 + $0x40] sm:$0xff]
      %v2167 = vld [vmem:[%s2157 + $0x48] sm:$0xff]
      %v2168 = vld [vmem:[%s2157 + $0x50] sm:$0xff]
      %v2169 = vld [vmem:[%s2157 + $0x58] sm:$0xff]
      %v2170 = vld [vmem:[%s2157 + $0x60] sm:$0xff]
      %v2171 = vld [vmem:[%s2157 + $0x68] sm:$0xff]
      %v2172 = vld [vmem:[%s2157 + $0x70] sm:$0xff]
      %v2173 = vld [vmem:[%s2157 + $0x78] sm:$0xff]
      %v2174 = vld [vmem:[%s2157 + $0x80] sm:$0xff]
      %v2175 = vld [vmem:[%s2157 + $0x88] sm:$0xff]
      %v2176 = vld [vmem:[%s2157 + $0x90] sm:$0xff]
      %v2177 = vld [vmem:[%s2157 + $0x98] sm:$0xff]
      %v2178 = vld [vmem:[%s2157 + $0xa0] sm:$0xff]
      %v2179 = vld [vmem:[%s2157 + $0xa8] sm:$0xff]
      %v2180 = vld [vmem:[%s2157 + $0xb0] sm:$0xff]
      %v2181 = vld [vmem:[%s2157 + $0xb8] sm:$0xff]
      %v2182 = vld [vmem:[%s2157 + $0xc0] sm:$0xff]
      %v2183 = vld [vmem:[%s2157 + $0xc8] sm:$0xff]
      %v2184 = vld [vmem:[%s2157 + $0xd0] sm:$0xff]
      %v2185 = vld [vmem:[%s2157 + $0xd8] sm:$0xff]
      %v2186 = vld [vmem:[%s2157 + $0xe0] sm:$0xff]
      %v2187 = vld [vmem:[%s2157 + $0xe8] sm:$0xff]
      %v2188 = vld [vmem:[%s2157 + $0xf0] sm:$0xff]
      %v2189 = vld [vmem:[%s2157 + $0xf8] sm:$0xff]
      %v2222 = vunpack.c.l.b16 %v2158
      %v2223 = vunpack.c.h.b16 %v2158
      %v2224 = vunpack.c.l.b16 %v2159
      %v2225 = vunpack.c.h.b16 %v2159
      %v2226 = vunpack.c.l.b16 %v2160
      %v2227 = vunpack.c.h.b16 %v2160
      %v2228 = vunpack.c.l.b16 %v2161
      %v2229 = vunpack.c.h.b16 %v2161
      %v2230 = vunpack.c.l.b16 %v2162
      %v2231 = vunpack.c.h.b16 %v2162
      %v2232 = vunpack.c.l.b16 %v2163
      %v2233 = vunpack.c.h.b16 %v2163
      %v2234 = vunpack.c.l.b16 %v2164
      %v2235 = vunpack.c.h.b16 %v2164
      %v2236 = vunpack.c.l.b16 %v2165
      %v2237 = vunpack.c.h.b16 %v2165
      %v2238 = vunpack.c.l.b16 %v2166
      %v2239 = vunpack.c.h.b16 %v2166
      %v2240 = vunpack.c.l.b16 %v2167
      %v2241 = vunpack.c.h.b16 %v2167
      %v2242 = vunpack.c.l.b16 %v2168
      %v2243 = vunpack.c.h.b16 %v2168
      %v2244 = vunpack.c.l.b16 %v2169
      %v2245 = vunpack.c.h.b16 %v2169
      %v2246 = vunpack.c.l.b16 %v2170
      %v2247 = vunpack.c.h.b16 %v2170
      %v2248 = vunpack.c.l.b16 %v2171
      %v2249 = vunpack.c.h.b16 %v2171
      %v2250 = vunpack.c.l.b16 %v2172
      %v2251 = vunpack.c.h.b16 %v2172
      %v2252 = vunpack.c.l.b16 %v2173
      %v2253 = vunpack.c.h.b16 %v2173
      %v2254 = vunpack.c.l.b16 %v2174
      %v2255 = vunpack.c.h.b16 %v2174
      %v2256 = vunpack.c.l.b16 %v2175
      %v2257 = vunpack.c.h.b16 %v2175
      %v2258 = vunpack.c.l.b16 %v2176
      %v2259 = vunpack.c.h.b16 %v2176
      %v2260 = vunpack.c.l.b16 %v2177
      %v2261 = vunpack.c.h.b16 %v2177
      %v2262 = vunpack.c.l.b16 %v2178
      %v2263 = vunpack.c.h.b16 %v2178
      %v2264 = vunpack.c.l.b16 %v2179
      %v2265 = vunpack.c.h.b16 %v2179
      %v2266 = vunpack.c.l.b16 %v2180
      %v2267 = vunpack.c.h.b16 %v2180
      %v2268 = vunpack.c.l.b16 %v2181
      %v2269 = vunpack.c.h.b16 %v2181
      %v2270 = vunpack.c.l.b16 %v2182
      %v2271 = vunpack.c.h.b16 %v2182
      %v2272 = vunpack.c.l.b16 %v2183
      %v2273 = vunpack.c.h.b16 %v2183
      %v2274 = vunpack.c.l.b16 %v2184
      %v2275 = vunpack.c.h.b16 %v2184
      %v2276 = vunpack.c.l.b16 %v2185
      %v2277 = vunpack.c.h.b16 %v2185
      %v2278 = vunpack.c.l.b16 %v2186
      %v2279 = vunpack.c.h.b16 %v2186
      %v2280 = vunpack.c.l.b16 %v2187
      %v2281 = vunpack.c.h.b16 %v2187
      %v2282 = vunpack.c.l.b16 %v2188
      %v2283 = vunpack.c.h.b16 %v2188
      %v2284 = vunpack.c.l.b16 %v2189
      %v2285 = vunpack.c.h.b16 %v2189
      %v2286 = vpack.c.b16 %v2224, %v2222
      %v2287 = vpack.c.b16 %v2225, %v2223
      %v2288 = vpack.c.b16 %v2228, %v2226
      %v2289 = vpack.c.b16 %v2229, %v2227
      %v2290 = vpack.c.b16 %v2232, %v2230
      %v2291 = vpack.c.b16 %v2233, %v2231
      %v2292 = vpack.c.b16 %v2236, %v2234
      %v2293 = vpack.c.b16 %v2237, %v2235
      %v2294 = vpack.c.b16 %v2240, %v2238
      %v2295 = vpack.c.b16 %v2241, %v2239
      %v2296 = vpack.c.b16 %v2244, %v2242
      %v2297 = vpack.c.b16 %v2245, %v2243
      %v2298 = vpack.c.b16 %v2248, %v2246
      %v2299 = vpack.c.b16 %v2249, %v2247
      %v2300 = vpack.c.b16 %v2252, %v2250
      %v2301 = vpack.c.b16 %v2253, %v2251
      %v2302 = vpack.c.b16 %v2256, %v2254
      %v2303 = vpack.c.b16 %v2257, %v2255
      %v2304 = vpack.c.b16 %v2260, %v2258
      %v2305 = vpack.c.b16 %v2261, %v2259
      %v2306 = vpack.c.b16 %v2264, %v2262
      %v2307 = vpack.c.b16 %v2265, %v2263
      %v2308 = vpack.c.b16 %v2268, %v2266
      %v2309 = vpack.c.b16 %v2269, %v2267
      %v2310 = vpack.c.b16 %v2272, %v2270
      %v2311 = vpack.c.b16 %v2273, %v2271
      %v2312 = vpack.c.b16 %v2276, %v2274
      %v2313 = vpack.c.b16 %v2277, %v2275
      %v2314 = vpack.c.b16 %v2280, %v2278
      %v2315 = vpack.c.b16 %v2281, %v2279
      %v2316 = vpack.c.b16 %v2284, %v2282
      %v2317 = vpack.c.b16 %v2285, %v2283
      %2350 = vmatprep.subr.bf16.mxu0 %v2287
      %2351 = vmatpush1.bf16.msra.mxu0 %v2286
      %2352 = vmatprep.subr.bf16.mxu0 %v2289
      %2353 = vmatpush1.bf16.msra.mxu0 %v2288
      %2354 = vmatprep.subr.bf16.mxu0 %v2291
      %2355 = vmatpush1.bf16.msra.mxu0 %v2290
      %2356 = vmatprep.subr.bf16.mxu0 %v2293
      %2357 = vmatpush1.bf16.msra.mxu0 %v2292
      %2358 = vmatprep.subr.bf16.mxu0 %v2295
      %2359 = vmatpush1.bf16.msra.mxu0 %v2294
      %2360 = vmatprep.subr.bf16.mxu0 %v2297
      %2361 = vmatpush1.bf16.msra.mxu0 %v2296
      %2362 = vmatprep.subr.bf16.mxu0 %v2299
      %2363 = vmatpush1.bf16.msra.mxu0 %v2298
      %2364 = vmatprep.subr.bf16.mxu0 %v2301
      %2365 = vmatpush1.bf16.msra.mxu0 %v2300
      %2366 = vmatprep.subr.bf16.mxu0 %v2303
      %2367 = vmatpush1.bf16.msra.mxu0 %v2302
      %2368 = vmatprep.subr.bf16.mxu0 %v2305
      %2369 = vmatpush1.bf16.msra.mxu0 %v2304
      %2370 = vmatprep.subr.bf16.mxu0 %v2307
      %2371 = vmatpush1.bf16.msra.mxu0 %v2306
      %2372 = vmatprep.subr.bf16.mxu0 %v2309
      %2373 = vmatpush1.bf16.msra.mxu0 %v2308
      %2374 = vmatprep.subr.bf16.mxu0 %v2311
      %2375 = vmatpush1.bf16.msra.mxu0 %v2310
      %2376 = vmatprep.subr.bf16.mxu0 %v2313
      %2377 = vmatpush1.bf16.msra.mxu0 %v2312
      %2378 = vmatprep.subr.bf16.mxu0 %v2315
      %2379 = vmatpush1.bf16.msra.mxu0 %v2314
      %2380 = vmatprep.subr.bf16.mxu0 %v2317
      %2381 = vmatpush1.bf16.msra.mxu0 %v2316
      %2382 = vmatprep.mubr.bf16.mxu0 %v712
      %2383 = vmatmul.mubr.bf16.gmra.mrb[0].mxu0 %v711
      %v2384 = vpop.f32.mrb[0].mxu0
      %v2385 = vadd.f32 0.0, %v2384
      %v2386 = vpop.f32.mrb[0].mxu0
      %v2387 = vadd.f32 0.0, %v2386
      %v2388 = vpop.f32.mrb[0].mxu0
      %v2389 = vpop.f32.mrb[0].mxu0
      %2390 = vdwg.mxu0
      %s2391 = scalar_lea.vmem %s3, 20
      %v2392 = vld [vmem:[%s2391] sm:$0xf]
      %v2393 = vpack.c.bf16 %v2385, %v2385
      %v2394 = vpack.c.bf16 %v2387, %v2387
      %v2396 = vsel %vm370, %v2392, 0
      %v2399 = vsel %vm374, %v2393, 0
      %v2402 = vsel %vm374, %v2394, 0
      %2404 = vmatprep.subr.bf16.mxu0 %v2402
      %2405 = vmatpush1.bf16.msra.mxu0 %v2399
      %2406 = vmatprep.subr.bf16.mxu0 0
      %2407 = vmatpush1.bf16.msra.mxu0 0
      %2408 = vmatprep.subr.bf16.mxu0 0
      %2409 = vmatpush1.bf16.msra.mxu0 0
      %2410 = vmatprep.subr.bf16.mxu0 0
      %2411 = vmatpush1.bf16.msra.mxu0 0
      %2412 = vmatprep.subr.bf16.mxu0 0
      %2413 = vmatpush1.bf16.msra.mxu0 0
      %2414 = vmatprep.subr.bf16.mxu0 0
      %2415 = vmatpush1.bf16.msra.mxu0 0
      %2416 = vmatprep.subr.bf16.mxu0 0
      %2417 = vmatpush1.bf16.msra.mxu0 0
      %2418 = vmatprep.subr.bf16.mxu0 0
      %2419 = vmatpush1.bf16.msra.mxu0 0
      %2420 = vmatprep.subr.bf16.mxu0 0
      %2421 = vmatpush1.bf16.msra.mxu0 0
      %2422 = vmatprep.subr.bf16.mxu0 0
      %2423 = vmatpush1.bf16.msra.mxu0 0
      %2424 = vmatprep.subr.bf16.mxu0 0
      %2425 = vmatpush1.bf16.msra.mxu0 0
      %2426 = vmatprep.subr.bf16.mxu0 0
      %2427 = vmatpush1.bf16.msra.mxu0 0
      %2428 = vmatprep.subr.bf16.mxu0 0
      %2429 = vmatpush1.bf16.msra.mxu0 0
      %2430 = vmatprep.subr.bf16.mxu0 0
      %2431 = vmatpush1.bf16.msra.mxu0 0
      %2432 = vmatprep.subr.bf16.mxu0 0
      %2433 = vmatpush1.bf16.msra.mxu0 0
      %2434 = vmatprep.subr.bf16.mxu0 0
      %2435 = vmatpush1.bf16.msra.mxu0 0
      %2436 = vmatprep.mubr.bf16.mxu0 0
      %2437 = vmatmul.mubr.bf16.gmra.mrb[0].mxu0 %v2396
      %v2438 = vpop.f32.mrb[0].mxu0
      %v2439 = vadd.f32 0.0, %v2438
      %v2440 = vpop.f32.mrb[0].mxu0
      %v2441 = vadd.f32 0.0, %v2440
      %v2442 = vpop.f32.mrb[0].mxu0
      %v2443 = vpop.f32.mrb[0].mxu0
      %2444 = vdwg.mxu0
      %v2445 = vadd.f32 %v2155, %v2439
      %v2446 = vadd.f32 %v2156, %v2441
      %s2447 = scalar_lea.vmem %s8, 1536
      %v2448 = vld [vmem:[%s2447] sm:$0xff]
      %v2449 = vld [vmem:[%s2447 + $0x8] sm:$0xff]
      %v2450 = vld [vmem:[%s2447 + $0x10] sm:$0xff]
      %v2451 = vld [vmem:[%s2447 + $0x18] sm:$0xff]
      %v2452 = vld [vmem:[%s2447 + $0x20] sm:$0xff]
      %v2453 = vld [vmem:[%s2447 + $0x28] sm:$0xff]
      %v2454 = vld [vmem:[%s2447 + $0x30] sm:$0xff]
      %v2455 = vld [vmem:[%s2447 + $0x38] sm:$0xff]
      %v2456 = vld [vmem:[%s2447 + $0x40] sm:$0xff]
      %v2457 = vld [vmem:[%s2447 + $0x48] sm:$0xff]
      %v2458 = vld [vmem:[%s2447 + $0x50] sm:$0xff]
      %v2459 = vld [vmem:[%s2447 + $0x58] sm:$0xff]
      %v2460 = vld [vmem:[%s2447 + $0x60] sm:$0xff]
      %v2461 = vld [vmem:[%s2447 + $0x68] sm:$0xff]
      %v2462 = vld [vmem:[%s2447 + $0x70] sm:$0xff]
      %v2463 = vld [vmem:[%s2447 + $0x78] sm:$0xff]
      %v2464 = vld [vmem:[%s2447 + $0x80] sm:$0xff]
      %v2465 = vld [vmem:[%s2447 + $0x88] sm:$0xff]
      %v2466 = vld [vmem:[%s2447 + $0x90] sm:$0xff]
      %v2467 = vld [vmem:[%s2447 + $0x98] sm:$0xff]
      %v2468 = vld [vmem:[%s2447 + $0xa0] sm:$0xff]
      %v2469 = vld [vmem:[%s2447 + $0xa8] sm:$0xff]
      %v2470 = vld [vmem:[%s2447 + $0xb0] sm:$0xff]
      %v2471 = vld [vmem:[%s2447 + $0xb8] sm:$0xff]
      %v2472 = vld [vmem:[%s2447 + $0xc0] sm:$0xff]
      %v2473 = vld [vmem:[%s2447 + $0xc8] sm:$0xff]
      %v2474 = vld [vmem:[%s2447 + $0xd0] sm:$0xff]
      %v2475 = vld [vmem:[%s2447 + $0xd8] sm:$0xff]
      %v2476 = vld [vmem:[%s2447 + $0xe0] sm:$0xff]
      %v2477 = vld [vmem:[%s2447 + $0xe8] sm:$0xff]
      %v2478 = vld [vmem:[%s2447 + $0xf0] sm:$0xff]
      %v2479 = vld [vmem:[%s2447 + $0xf8] sm:$0xff]
      %v2512 = vunpack.c.l.b16 %v2448
      %v2513 = vunpack.c.h.b16 %v2448
      %v2514 = vunpack.c.l.b16 %v2449
      %v2515 = vunpack.c.h.b16 %v2449
      %v2516 = vunpack.c.l.b16 %v2450
      %v2517 = vunpack.c.h.b16 %v2450
      %v2518 = vunpack.c.l.b16 %v2451
      %v2519 = vunpack.c.h.b16 %v2451
      %v2520 = vunpack.c.l.b16 %v2452
      %v2521 = vunpack.c.h.b16 %v2452
      %v2522 = vunpack.c.l.b16 %v2453
      %v2523 = vunpack.c.h.b16 %v2453
      %v2524 = vunpack.c.l.b16 %v2454
      %v2525 = vunpack.c.h.b16 %v2454
      %v2526 = vunpack.c.l.b16 %v2455
      %v2527 = vunpack.c.h.b16 %v2455
      %v2528 = vunpack.c.l.b16 %v2456
      %v2529 = vunpack.c.h.b16 %v2456
      %v2530 = vunpack.c.l.b16 %v2457
      %v2531 = vunpack.c.h.b16 %v2457
      %v2532 = vunpack.c.l.b16 %v2458
      %v2533 = vunpack.c.h.b16 %v2458
      %v2534 = vunpack.c.l.b16 %v2459
      %v2535 = vunpack.c.h.b16 %v2459
      %v2536 = vunpack.c.l.b16 %v2460
      %v2537 = vunpack.c.h.b16 %v2460
      %v2538 = vunpack.c.l.b16 %v2461
      %v2539 = vunpack.c.h.b16 %v2461
      %v2540 = vunpack.c.l.b16 %v2462
      %v2541 = vunpack.c.h.b16 %v2462
      %v2542 = vunpack.c.l.b16 %v2463
      %v2543 = vunpack.c.h.b16 %v2463
      %v2544 = vunpack.c.l.b16 %v2464
      %v2545 = vunpack.c.h.b16 %v2464
      %v2546 = vunpack.c.l.b16 %v2465
      %v2547 = vunpack.c.h.b16 %v2465
      %v2548 = vunpack.c.l.b16 %v2466
      %v2549 = vunpack.c.h.b16 %v2466
      %v2550 = vunpack.c.l.b16 %v2467
      %v2551 = vunpack.c.h.b16 %v2467
      %v2552 = vunpack.c.l.b16 %v2468
      %v2553 = vunpack.c.h.b16 %v2468
      %v2554 = vunpack.c.l.b16 %v2469
      %v2555 = vunpack.c.h.b16 %v2469
      %v2556 = vunpack.c.l.b16 %v2470
      %v2557 = vunpack.c.h.b16 %v2470
      %v2558 = vunpack.c.l.b16 %v2471
      %v2559 = vunpack.c.h.b16 %v2471
      %v2560 = vunpack.c.l.b16 %v2472
      %v2561 = vunpack.c.h.b16 %v2472
      %v2562 = vunpack.c.l.b16 %v2473
      %v2563 = vunpack.c.h.b16 %v2473
      %v2564 = vunpack.c.l.b16 %v2474
      %v2565 = vunpack.c.h.b16 %v2474
      %v2566 = vunpack.c.l.b16 %v2475
      %v2567 = vunpack.c.h.b16 %v2475
      %v2568 = vunpack.c.l.b16 %v2476
      %v2569 = vunpack.c.h.b16 %v2476
      %v2570 = vunpack.c.l.b16 %v2477
      %v2571 = vunpack.c.h.b16 %v2477
      %v2572 = vunpack.c.l.b16 %v2478
      %v2573 = vunpack.c.h.b16 %v2478
      %v2574 = vunpack.c.l.b16 %v2479
      %v2575 = vunpack.c.h.b16 %v2479
      %v2576 = vpack.c.b16 %v2514, %v2512
      %v2577 = vpack.c.b16 %v2515, %v2513
      %v2578 = vpack.c.b16 %v2518, %v2516
      %v2579 = vpack.c.b16 %v2519, %v2517
      %v2580 = vpack.c.b16 %v2522, %v2520
      %v2581 = vpack.c.b16 %v2523, %v2521
      %v2582 = vpack.c.b16 %v2526, %v2524
      %v2583 = vpack.c.b16 %v2527, %v2525
      %v2584 = vpack.c.b16 %v2530, %v2528
      %v2585 = vpack.c.b16 %v2531, %v2529
      %v2586 = vpack.c.b16 %v2534, %v2532
      %v2587 = vpack.c.b16 %v2535, %v2533
      %v2588 = vpack.c.b16 %v2538, %v2536
      %v2589 = vpack.c.b16 %v2539, %v2537
      %v2590 = vpack.c.b16 %v2542, %v2540
      %v2591 = vpack.c.b16 %v2543, %v2541
      %v2592 = vpack.c.b16 %v2546, %v2544
      %v2593 = vpack.c.b16 %v2547, %v2545
      %v2594 = vpack.c.b16 %v2550, %v2548
      %v2595 = vpack.c.b16 %v2551, %v2549
      %v2596 = vpack.c.b16 %v2554, %v2552
      %v2597 = vpack.c.b16 %v2555, %v2553
      %v2598 = vpack.c.b16 %v2558, %v2556
      %v2599 = vpack.c.b16 %v2559, %v2557
      %v2600 = vpack.c.b16 %v2562, %v2560
      %v2601 = vpack.c.b16 %v2563, %v2561
      %v2602 = vpack.c.b16 %v2566, %v2564
      %v2603 = vpack.c.b16 %v2567, %v2565
      %v2604 = vpack.c.b16 %v2570, %v2568
      %v2605 = vpack.c.b16 %v2571, %v2569
      %v2606 = vpack.c.b16 %v2574, %v2572
      %v2607 = vpack.c.b16 %v2575, %v2573
      %2640 = vmatprep.subr.bf16.mxu0 %v2577
      %2641 = vmatpush1.bf16.msra.mxu0 %v2576
      %2642 = vmatprep.subr.bf16.mxu0 %v2579
      %2643 = vmatpush1.bf16.msra.mxu0 %v2578
      %2644 = vmatprep.subr.bf16.mxu0 %v2581
      %2645 = vmatpush1.bf16.msra.mxu0 %v2580
      %2646 = vmatprep.subr.bf16.mxu0 %v2583
      %2647 = vmatpush1.bf16.msra.mxu0 %v2582
      %2648 = vmatprep.subr.bf16.mxu0 %v2585
      %2649 = vmatpush1.bf16.msra.mxu0 %v2584
      %2650 = vmatprep.subr.bf16.mxu0 %v2587
      %2651 = vmatpush1.bf16.msra.mxu0 %v2586
      %2652 = vmatprep.subr.bf16.mxu0 %v2589
      %2653 = vmatpush1.bf16.msra.mxu0 %v2588
      %2654 = vmatprep.subr.bf16.mxu0 %v2591
      %2655 = vmatpush1.bf16.msra.mxu0 %v2590
      %2656 = vmatprep.subr.bf16.mxu0 %v2593
      %2657 = vmatpush1.bf16.msra.mxu0 %v2592
      %2658 = vmatprep.subr.bf16.mxu0 %v2595
      %2659 = vmatpush1.bf16.msra.mxu0 %v2594
      %2660 = vmatprep.subr.bf16.mxu0 %v2597
      %2661 = vmatpush1.bf16.msra.mxu0 %v2596
      %2662 = vmatprep.subr.bf16.mxu0 %v2599
      %2663 = vmatpush1.bf16.msra.mxu0 %v2598
      %2664 = vmatprep.subr.bf16.mxu0 %v2601
      %2665 = vmatpush1.bf16.msra.mxu0 %v2600
      %2666 = vmatprep.subr.bf16.mxu0 %v2603
      %2667 = vmatpush1.bf16.msra.mxu0 %v2602
      %2668 = vmatprep.subr.bf16.mxu0 %v2605
      %2669 = vmatpush1.bf16.msra.mxu0 %v2604
      %2670 = vmatprep.subr.bf16.mxu0 %v2607
      %2671 = vmatpush1.bf16.msra.mxu0 %v2606
      %2672 = vmatprep.mubr.bf16.mxu0 %v712
      %2673 = vmatmul.mubr.bf16.gmra.mrb[0].mxu0 %v711
      %v2674 = vpop.f32.mrb[0].mxu0
      %v2675 = vadd.f32 0.0, %v2674
      %v2676 = vpop.f32.mrb[0].mxu0
      %v2677 = vadd.f32 0.0, %v2676
      %v2678 = vpop.f32.mrb[0].mxu0
      %v2679 = vpop.f32.mrb[0].mxu0
      %2680 = vdwg.mxu0
      %s2681 = scalar_lea.vmem %s3, 24
      %v2682 = vld [vmem:[%s2681] sm:$0xf]
      %v2683 = vpack.c.bf16 %v2675, %v2675
      %v2684 = vpack.c.bf16 %v2677, %v2677
      %v2686 = vsel %vm370, %v2682, 0
      %v2689 = vsel %vm374, %v2683, 0
      %v2692 = vsel %vm374, %v2684, 0
      %2694 = vmatprep.subr.bf16.mxu0 %v2692
      %2695 = vmatpush1.bf16.msra.mxu0 %v2689
      %2696 = vmatprep.subr.bf16.mxu0 0
      %2697 = vmatpush1.bf16.msra.mxu0 0
      %2698 = vmatprep.subr.bf16.mxu0 0
      %2699 = vmatpush1.bf16.msra.mxu0 0
      %2700 = vmatprep.subr.bf16.mxu0 0
      %2701 = vmatpush1.bf16.msra.mxu0 0
      %2702 = vmatprep.subr.bf16.mxu0 0
      %2703 = vmatpush1.bf16.msra.mxu0 0
      %2704 = vmatprep.subr.bf16.mxu0 0
      %2705 = vmatpush1.bf16.msra.mxu0 0
      %2706 = vmatprep.subr.bf16.mxu0 0
      %2707 = vmatpush1.bf16.msra.mxu0 0
      %2708 = vmatprep.subr.bf16.mxu0 0
      %2709 = vmatpush1.bf16.msra.mxu0 0
      %2710 = vmatprep.subr.bf16.mxu0 0
      %2711 = vmatpush1.bf16.msra.mxu0 0
      %2712 = vmatprep.subr.bf16.mxu0 0
      %2713 = vmatpush1.bf16.msra.mxu0 0
      %2714 = vmatprep.subr.bf16.mxu0 0
      %2715 = vmatpush1.bf16.msra.mxu0 0
      %2716 = vmatprep.subr.bf16.mxu0 0
      %2717 = vmatpush1.bf16.msra.mxu0 0
      %2718 = vmatprep.subr.bf16.mxu0 0
      %2719 = vmatpush1.bf16.msra.mxu0 0
      %2720 = vmatprep.subr.bf16.mxu0 0
      %2721 = vmatpush1.bf16.msra.mxu0 0
      %2722 = vmatprep.subr.bf16.mxu0 0
      %2723 = vmatpush1.bf16.msra.mxu0 0
      %2724 = vmatprep.subr.bf16.mxu0 0
      %2725 = vmatpush1.bf16.msra.mxu0 0
      %2726 = vmatprep.mubr.bf16.mxu0 0
      %2727 = vmatmul.mubr.bf16.gmra.mrb[0].mxu0 %v2686
      %v2728 = vpop.f32.mrb[0].mxu0
      %v2729 = vadd.f32 0.0, %v2728
      %v2730 = vpop.f32.mrb[0].mxu0
      %v2731 = vadd.f32 0.0, %v2730
      %v2732 = vpop.f32.mrb[0].mxu0
      %v2733 = vpop.f32.mrb[0].mxu0
      %2734 = vdwg.mxu0
      %v2735 = vadd.f32 %v2445, %v2729
      %v2736 = vadd.f32 %v2446, %v2731
      %s2737 = scalar_lea.vmem %s8, 1792
      %v2738 = vld [vmem:[%s2737] sm:$0xff]
      %v2739 = vld [vmem:[%s2737 + $0x8] sm:$0xff]
      %v2740 = vld [vmem:[%s2737 + $0x10] sm:$0xff]
      %v2741 = vld [vmem:[%s2737 + $0x18] sm:$0xff]
      %v2742 = vld [vmem:[%s2737 + $0x20] sm:$0xff]
      %v2743 = vld [vmem:[%s2737 + $0x28] sm:$0xff]
      %v2744 = vld [vmem:[%s2737 + $0x30] sm:$0xff]
      %v2745 = vld [vmem:[%s2737 + $0x38] sm:$0xff]
      %v2746 = vld [vmem:[%s2737 + $0x40] sm:$0xff]
      %v2747 = vld [vmem:[%s2737 + $0x48] sm:$0xff]
      %v2748 = vld [vmem:[%s2737 + $0x50] sm:$0xff]
      %v2749 = vld [vmem:[%s2737 + $0x58] sm:$0xff]
      %v2750 = vld [vmem:[%s2737 + $0x60] sm:$0xff]
      %v2751 = vld [vmem:[%s2737 + $0x68] sm:$0xff]
      %v2752 = vld [vmem:[%s2737 + $0x70] sm:$0xff]
      %v2753 = vld [vmem:[%s2737 + $0x78] sm:$0xff]
      %v2754 = vld [vmem:[%s2737 + $0x80] sm:$0xff]
      %v2755 = vld [vmem:[%s2737 + $0x88] sm:$0xff]
      %v2756 = vld [vmem:[%s2737 + $0x90] sm:$0xff]
      %v2757 = vld [vmem:[%s2737 + $0x98] sm:$0xff]
      %v2758 = vld [vmem:[%s2737 + $0xa0] sm:$0xff]
      %v2759 = vld [vmem:[%s2737 + $0xa8] sm:$0xff]
      %v2760 = vld [vmem:[%s2737 + $0xb0] sm:$0xff]
      %v2761 = vld [vmem:[%s2737 + $0xb8] sm:$0xff]
      %v2762 = vld [vmem:[%s2737 + $0xc0] sm:$0xff]
      %v2763 = vld [vmem:[%s2737 + $0xc8] sm:$0xff]
      %v2764 = vld [vmem:[%s2737 + $0xd0] sm:$0xff]
      %v2765 = vld [vmem:[%s2737 + $0xd8] sm:$0xff]
      %v2766 = vld [vmem:[%s2737 + $0xe0] sm:$0xff]
      %v2767 = vld [vmem:[%s2737 + $0xe8] sm:$0xff]
      %v2768 = vld [vmem:[%s2737 + $0xf0] sm:$0xff]
      %v2769 = vld [vmem:[%s2737 + $0xf8] sm:$0xff]
      %v2802 = vunpack.c.l.b16 %v2738
      %v2803 = vunpack.c.h.b16 %v2738
      %v2804 = vunpack.c.l.b16 %v2739
      %v2805 = vunpack.c.h.b16 %v2739
      %v2806 = vunpack.c.l.b16 %v2740
      %v2807 = vunpack.c.h.b16 %v2740
      %v2808 = vunpack.c.l.b16 %v2741
      %v2809 = vunpack.c.h.b16 %v2741
      %v2810 = vunpack.c.l.b16 %v2742
      %v2811 = vunpack.c.h.b16 %v2742
      %v2812 = vunpack.c.l.b16 %v2743
      %v2813 = vunpack.c.h.b16 %v2743
      %v2814 = vunpack.c.l.b16 %v2744
      %v2815 = vunpack.c.h.b16 %v2744
      %v2816 = vunpack.c.l.b16 %v2745
      %v2817 = vunpack.c.h.b16 %v2745
      %v2818 = vunpack.c.l.b16 %v2746
      %v2819 = vunpack.c.h.b16 %v2746
      %v2820 = vunpack.c.l.b16 %v2747
      %v2821 = vunpack.c.h.b16 %v2747
      %v2822 = vunpack.c.l.b16 %v2748
      %v2823 = vunpack.c.h.b16 %v2748
      %v2824 = vunpack.c.l.b16 %v2749
      %v2825 = vunpack.c.h.b16 %v2749
      %v2826 = vunpack.c.l.b16 %v2750
      %v2827 = vunpack.c.h.b16 %v2750
      %v2828 = vunpack.c.l.b16 %v2751
      %v2829 = vunpack.c.h.b16 %v2751
      %v2830 = vunpack.c.l.b16 %v2752
      %v2831 = vunpack.c.h.b16 %v2752
      %v2832 = vunpack.c.l.b16 %v2753
      %v2833 = vunpack.c.h.b16 %v2753
      %v2834 = vunpack.c.l.b16 %v2754
      %v2835 = vunpack.c.h.b16 %v2754
      %v2836 = vunpack.c.l.b16 %v2755
      %v2837 = vunpack.c.h.b16 %v2755
      %v2838 = vunpack.c.l.b16 %v2756
      %v2839 = vunpack.c.h.b16 %v2756
      %v2840 = vunpack.c.l.b16 %v2757
      %v2841 = vunpack.c.h.b16 %v2757
      %v2842 = vunpack.c.l.b16 %v2758
      %v2843 = vunpack.c.h.b16 %v2758
      %v2844 = vunpack.c.l.b16 %v2759
      %v2845 = vunpack.c.h.b16 %v2759
      %v2846 = vunpack.c.l.b16 %v2760
      %v2847 = vunpack.c.h.b16 %v2760
      %v2848 = vunpack.c.l.b16 %v2761
      %v2849 = vunpack.c.h.b16 %v2761
      %v2850 = vunpack.c.l.b16 %v2762
      %v2851 = vunpack.c.h.b16 %v2762
      %v2852 = vunpack.c.l.b16 %v2763
      %v2853 = vunpack.c.h.b16 %v2763
      %v2854 = vunpack.c.l.b16 %v2764
      %v2855 = vunpack.c.h.b16 %v2764
      %v2856 = vunpack.c.l.b16 %v2765
      %v2857 = vunpack.c.h.b16 %v2765
      %v2858 = vunpack.c.l.b16 %v2766
      %v2859 = vunpack.c.h.b16 %v2766
      %v2860 = vunpack.c.l.b16 %v2767
      %v2861 = vunpack.c.h.b16 %v2767
      %v2862 = vunpack.c.l.b16 %v2768
      %v2863 = vunpack.c.h.b16 %v2768
      %v2864 = vunpack.c.l.b16 %v2769
      %v2865 = vunpack.c.h.b16 %v2769
      %v2866 = vpack.c.b16 %v2804, %v2802
      %v2867 = vpack.c.b16 %v2805, %v2803
      %v2868 = vpack.c.b16 %v2808, %v2806
      %v2869 = vpack.c.b16 %v2809, %v2807
      %v2870 = vpack.c.b16 %v2812, %v2810
      %v2871 = vpack.c.b16 %v2813, %v2811
      %v2872 = vpack.c.b16 %v2816, %v2814
      %v2873 = vpack.c.b16 %v2817, %v2815
      %v2874 = vpack.c.b16 %v2820, %v2818
      %v2875 = vpack.c.b16 %v2821, %v2819
      %v2876 = vpack.c.b16 %v2824, %v2822
      %v2877 = vpack.c.b16 %v2825, %v2823
      %v2878 = vpack.c.b16 %v2828, %v2826
      %v2879 = vpack.c.b16 %v2829, %v2827
      %v2880 = vpack.c.b16 %v2832, %v2830
      %v2881 = vpack.c.b16 %v2833, %v2831
      %v2882 = vpack.c.b16 %v2836, %v2834
      %v2883 = vpack.c.b16 %v2837, %v2835
      %v2884 = vpack.c.b16 %v2840, %v2838
      %v2885 = vpack.c.b16 %v2841, %v2839
      %v2886 = vpack.c.b16 %v2844, %v2842
      %v2887 = vpack.c.b16 %v2845, %v2843
      %v2888 = vpack.c.b16 %v2848, %v2846
      %v2889 = vpack.c.b16 %v2849, %v2847
      %v2890 = vpack.c.b16 %v2852, %v2850
      %v2891 = vpack.c.b16 %v2853, %v2851
      %v2892 = vpack.c.b16 %v2856, %v2854
      %v2893 = vpack.c.b16 %v2857, %v2855
      %v2894 = vpack.c.b16 %v2860, %v2858
      %v2895 = vpack.c.b16 %v2861, %v2859
      %v2896 = vpack.c.b16 %v2864, %v2862
      %v2897 = vpack.c.b16 %v2865, %v2863
      %2930 = vmatprep.subr.bf16.mxu0 %v2867
      %2931 = vmatpush1.bf16.msra.mxu0 %v2866
      %2932 = vmatprep.subr.bf16.mxu0 %v2869
      %2933 = vmatpush1.bf16.msra.mxu0 %v2868
      %2934 = vmatprep.subr.bf16.mxu0 %v2871
      %2935 = vmatpush1.bf16.msra.mxu0 %v2870
      %2936 = vmatprep.subr.bf16.mxu0 %v2873
      %2937 = vmatpush1.bf16.msra.mxu0 %v2872
      %2938 = vmatprep.subr.bf16.mxu0 %v2875
      %2939 = vmatpush1.bf16.msra.mxu0 %v2874
      %2940 = vmatprep.subr.bf16.mxu0 %v2877
      %2941 = vmatpush1.bf16.msra.mxu0 %v2876
      %2942 = vmatprep.subr.bf16.mxu0 %v2879
      %2943 = vmatpush1.bf16.msra.mxu0 %v2878
      %2944 = vmatprep.subr.bf16.mxu0 %v2881
      %2945 = vmatpush1.bf16.msra.mxu0 %v2880
      %2946 = vmatprep.subr.bf16.mxu0 %v2883
      %2947 = vmatpush1.bf16.msra.mxu0 %v2882
      %2948 = vmatprep.subr.bf16.mxu0 %v2885
      %2949 = vmatpush1.bf16.msra.mxu0 %v2884
      %2950 = vmatprep.subr.bf16.mxu0 %v2887
      %2951 = vmatpush1.bf16.msra.mxu0 %v2886
      %2952 = vmatprep.subr.bf16.mxu0 %v2889
      %2953 = vmatpush1.bf16.msra.mxu0 %v2888
      %2954 = vmatprep.subr.bf16.mxu0 %v2891
      %2955 = vmatpush1.bf16.msra.mxu0 %v2890
      %2956 = vmatprep.subr.bf16.mxu0 %v2893
      %2957 = vmatpush1.bf16.msra.mxu0 %v2892
      %2958 = vmatprep.subr.bf16.mxu0 %v2895
      %2959 = vmatpush1.bf16.msra.mxu0 %v2894
      %2960 = vmatprep.subr.bf16.mxu0 %v2897
      %2961 = vmatpush1.bf16.msra.mxu0 %v2896
      %2962 = vmatprep.mubr.bf16.mxu0 %v712
      %2963 = vmatmul.mubr.bf16.gmra.mrb[0].mxu0 %v711
      %v2964 = vpop.f32.mrb[0].mxu0
      %v2965 = vadd.f32 0.0, %v2964
      %v2966 = vpop.f32.mrb[0].mxu0
      %v2967 = vadd.f32 0.0, %v2966
      %v2968 = vpop.f32.mrb[0].mxu0
      %v2969 = vpop.f32.mrb[0].mxu0
      %2970 = vdwg.mxu0
      %s2971 = scalar_lea.vmem %s3, 28
      %v2972 = vld [vmem:[%s2971] sm:$0xf]
      %v2973 = vpack.c.bf16 %v2965, %v2965
      %v2974 = vpack.c.bf16 %v2967, %v2967
      %v2976 = vsel %vm370, %v2972, 0
      %v2979 = vsel %vm374, %v2973, 0
      %v2982 = vsel %vm374, %v2974, 0
      %2984 = vmatprep.subr.bf16.mxu0 %v2982
      %2985 = vmatpush1.bf16.msra.mxu0 %v2979
      %2986 = vmatprep.subr.bf16.mxu0 0
      %2987 = vmatpush1.bf16.msra.mxu0 0
      %2988 = vmatprep.subr.bf16.mxu0 0
      %2989 = vmatpush1.bf16.msra.mxu0 0
      %2990 = vmatprep.subr.bf16.mxu0 0
      %2991 = vmatpush1.bf16.msra.mxu0 0
      %2992 = vmatprep.subr.bf16.mxu0 0
      %2993 = vmatpush1.bf16.msra.mxu0 0
      %2994 = vmatprep.subr.bf16.mxu0 0
      %2995 = vmatpush1.bf16.msra.mxu0 0
      %2996 = vmatprep.subr.bf16.mxu0 0
      %2997 = vmatpush1.bf16.msra.mxu0 0
      %2998 = vmatprep.subr.bf16.mxu0 0
      %2999 = vmatpush1.bf16.msra.mxu0 0
      %3000 = vmatprep.subr.bf16.mxu0 0
      %3001 = vmatpush1.bf16.msra.mxu0 0
      %3002 = vmatprep.subr.bf16.mxu0 0
      %3003 = vmatpush1.bf16.msra.mxu0 0
      %3004 = vmatprep.subr.bf16.mxu0 0
      %3005 = vmatpush1.bf16.msra.mxu0 0
      %3006 = vmatprep.subr.bf16.mxu0 0
      %3007 = vmatpush1.bf16.msra.mxu0 0
      %3008 = vmatprep.subr.bf16.mxu0 0
      %3009 = vmatpush1.bf16.msra.mxu0 0
      %3010 = vmatprep.subr.bf16.mxu0 0
      %3011 = vmatpush1.bf16.msra.mxu0 0
      %3012 = vmatprep.subr.bf16.mxu0 0
      %3013 = vmatpush1.bf16.msra.mxu0 0
      %3014 = vmatprep.subr.bf16.mxu0 0
      %3015 = vmatpush1.bf16.msra.mxu0 0
      %3016 = vmatprep.mubr.bf16.mxu0 0
      %3017 = vmatmul.mubr.bf16.gmra.mrb[0].mxu0 %v2976
      %v3018 = vpop.f32.mrb[0].mxu0
      %v3019 = vadd.f32 0.0, %v3018
      %v3020 = vpop.f32.mrb[0].mxu0
      %v3021 = vadd.f32 0.0, %v3020
      %v3022 = vpop.f32.mrb[0].mxu0
      %v3023 = vpop.f32.mrb[0].mxu0
      %3024 = vdwg.mxu0
      %v3025 = vadd.f32 %v2735, %v3019
      %v3026 = vadd.f32 %v2736, %v3021
      %s3027 = scalar_lea.vmem %s8, 2048
      %v3028 = vld [vmem:[%s3027] sm:$0xff]
      %v3029 = vld [vmem:[%s3027 + $0x8] sm:$0xff]
      %v3030 = vld [vmem:[%s3027 + $0x10] sm:$0xff]
      %v3031 = vld [vmem:[%s3027 + $0x18] sm:$0xff]
      %v3032 = vld [vmem:[%s3027 + $0x20] sm:$0xff]
      %v3033 = vld [vmem:[%s3027 + $0x28] sm:$0xff]
      %v3034 = vld [vmem:[%s3027 + $0x30] sm:$0xff]
      %v3035 = vld [vmem:[%s3027 + $0x38] sm:$0xff]
      %v3036 = vld [vmem:[%s3027 + $0x40] sm:$0xff]
      %v3037 = vld [vmem:[%s3027 + $0x48] sm:$0xff]
      %v3038 = vld [vmem:[%s3027 + $0x50] sm:$0xff]
      %v3039 = vld [vmem:[%s3027 + $0x58] sm:$0xff]
      %v3040 = vld [vmem:[%s3027 + $0x60] sm:$0xff]
      %v3041 = vld [vmem:[%s3027 + $0x68] sm:$0xff]
      %v3042 = vld [vmem:[%s3027 + $0x70] sm:$0xff]
      %v3043 = vld [vmem:[%s3027 + $0x78] sm:$0xff]
      %v3044 = vld [vmem:[%s3027 + $0x80] sm:$0xff]
      %v3045 = vld [vmem:[%s3027 + $0x88] sm:$0xff]
      %v3046 = vld [vmem:[%s3027 + $0x90] sm:$0xff]
      %v3047 = vld [vmem:[%s3027 + $0x98] sm:$0xff]
      %v3048 = vld [vmem:[%s3027 + $0xa0] sm:$0xff]
      %v3049 = vld [vmem:[%s3027 + $0xa8] sm:$0xff]
      %v3050 = vld [vmem:[%s3027 + $0xb0] sm:$0xff]
      %v3051 = vld [vmem:[%s3027 + $0xb8] sm:$0xff]
      %v3052 = vld [vmem:[%s3027 + $0xc0] sm:$0xff]
      %v3053 = vld [vmem:[%s3027 + $0xc8] sm:$0xff]
      %v3054 = vld [vmem:[%s3027 + $0xd0] sm:$0xff]
      %v3055 = vld [vmem:[%s3027 + $0xd8] sm:$0xff]
      %v3056 = vld [vmem:[%s3027 + $0xe0] sm:$0xff]
      %v3057 = vld [vmem:[%s3027 + $0xe8] sm:$0xff]
      %v3058 = vld [vmem:[%s3027 + $0xf0] sm:$0xff]
      %v3059 = vld [vmem:[%s3027 + $0xf8] sm:$0xff]
      %v3092 = vunpack.c.l.b16 %v3028
      %v3093 = vunpack.c.h.b16 %v3028
      %v3094 = vunpack.c.l.b16 %v3029
      %v3095 = vunpack.c.h.b16 %v3029
      %v3096 = vunpack.c.l.b16 %v3030
      %v3097 = vunpack.c.h.b16 %v3030
      %v3098 = vunpack.c.l.b16 %v3031
      %v3099 = vunpack.c.h.b16 %v3031
      %v3100 = vunpack.c.l.b16 %v3032
      %v3101 = vunpack.c.h.b16 %v3032
      %v3102 = vunpack.c.l.b16 %v3033
      %v3103 = vunpack.c.h.b16 %v3033
      %v3104 = vunpack.c.l.b16 %v3034
      %v3105 = vunpack.c.h.b16 %v3034
      %v3106 = vunpack.c.l.b16 %v3035
      %v3107 = vunpack.c.h.b16 %v3035
      %v3108 = vunpack.c.l.b16 %v3036
      %v3109 = vunpack.c.h.b16 %v3036
      %v3110 = vunpack.c.l.b16 %v3037
      %v3111 = vunpack.c.h.b16 %v3037
      %v3112 = vunpack.c.l.b16 %v3038
      %v3113 = vunpack.c.h.b16 %v3038
      %v3114 = vunpack.c.l.b16 %v3039
      %v3115 = vunpack.c.h.b16 %v3039
      %v3116 = vunpack.c.l.b16 %v3040
      %v3117 = vunpack.c.h.b16 %v3040
      %v3118 = vunpack.c.l.b16 %v3041
      %v3119 = vunpack.c.h.b16 %v3041
      %v3120 = vunpack.c.l.b16 %v3042
      %v3121 = vunpack.c.h.b16 %v3042
      %v3122 = vunpack.c.l.b16 %v3043
      %v3123 = vunpack.c.h.b16 %v3043
      %v3124 = vunpack.c.l.b16 %v3044
      %v3125 = vunpack.c.h.b16 %v3044
      %v3126 = vunpack.c.l.b16 %v3045
      %v3127 = vunpack.c.h.b16 %v3045
      %v3128 = vunpack.c.l.b16 %v3046
      %v3129 = vunpack.c.h.b16 %v3046
      %v3130 = vunpack.c.l.b16 %v3047
      %v3131 = vunpack.c.h.b16 %v3047
      %v3132 = vunpack.c.l.b16 %v3048
      %v3133 = vunpack.c.h.b16 %v3048
      %v3134 = vunpack.c.l.b16 %v3049
      %v3135 = vunpack.c.h.b16 %v3049
      %v3136 = vunpack.c.l.b16 %v3050
      %v3137 = vunpack.c.h.b16 %v3050
      %v3138 = vunpack.c.l.b16 %v3051
      %v3139 = vunpack.c.h.b16 %v3051
      %v3140 = vunpack.c.l.b16 %v3052
      %v3141 = vunpack.c.h.b16 %v3052
      %v3142 = vunpack.c.l.b16 %v3053
      %v3143 = vunpack.c.h.b16 %v3053
      %v3144 = vunpack.c.l.b16 %v3054
      %v3145 = vunpack.c.h.b16 %v3054
      %v3146 = vunpack.c.l.b16 %v3055
      %v3147 = vunpack.c.h.b16 %v3055
      %v3148 = vunpack.c.l.b16 %v3056
      %v3149 = vunpack.c.h.b16 %v3056
      %v3150 = vunpack.c.l.b16 %v3057
      %v3151 = vunpack.c.h.b16 %v3057
      %v3152 = vunpack.c.l.b16 %v3058
      %v3153 = vunpack.c.h.b16 %v3058
      %v3154 = vunpack.c.l.b16 %v3059
      %v3155 = vunpack.c.h.b16 %v3059
      %v3156 = vpack.c.b16 %v3094, %v3092
      %v3157 = vpack.c.b16 %v3095, %v3093
      %v3158 = vpack.c.b16 %v3098, %v3096
      %v3159 = vpack.c.b16 %v3099, %v3097
      %v3160 = vpack.c.b16 %v3102, %v3100
      %v3161 = vpack.c.b16 %v3103, %v3101
      %v3162 = vpack.c.b16 %v3106, %v3104
      %v3163 = vpack.c.b16 %v3107, %v3105
      %v3164 = vpack.c.b16 %v3110, %v3108
      %v3165 = vpack.c.b16 %v3111, %v3109
      %v3166 = vpack.c.b16 %v3114, %v3112
      %v3167 = vpack.c.b16 %v3115, %v3113
      %v3168 = vpack.c.b16 %v3118, %v3116
      %v3169 = vpack.c.b16 %v3119, %v3117
      %v3170 = vpack.c.b16 %v3122, %v3120
      %v3171 = vpack.c.b16 %v3123, %v3121
      %v3172 = vpack.c.b16 %v3126, %v3124
      %v3173 = vpack.c.b16 %v3127, %v3125
      %v3174 = vpack.c.b16 %v3130, %v3128
      %v3175 = vpack.c.b16 %v3131, %v3129
      %v3176 = vpack.c.b16 %v3134, %v3132
      %v3177 = vpack.c.b16 %v3135, %v3133
      %v3178 = vpack.c.b16 %v3138, %v3136
      %v3179 = vpack.c.b16 %v3139, %v3137
      %v3180 = vpack.c.b16 %v3142, %v3140
      %v3181 = vpack.c.b16 %v3143, %v3141
      %v3182 = vpack.c.b16 %v3146, %v3144
      %v3183 = vpack.c.b16 %v3147, %v3145
      %v3184 = vpack.c.b16 %v3150, %v3148
      %v3185 = vpack.c.b16 %v3151, %v3149
      %v3186 = vpack.c.b16 %v3154, %v3152
      %v3187 = vpack.c.b16 %v3155, %v3153
      %3220 = vmatprep.subr.bf16.mxu0 %v3157
      %3221 = vmatpush1.bf16.msra.mxu0 %v3156
      %3222 = vmatprep.subr.bf16.mxu0 %v3159
      %3223 = vmatpush1.bf16.msra.mxu0 %v3158
      %3224 = vmatprep.subr.bf16.mxu0 %v3161
      %3225 = vmatpush1.bf16.msra.mxu0 %v3160
      %3226 = vmatprep.subr.bf16.mxu0 %v3163
      %3227 = vmatpush1.bf16.msra.mxu0 %v3162
      %3228 = vmatprep.subr.bf16.mxu0 %v3165
      %3229 = vmatpush1.bf16.msra.mxu0 %v3164
      %3230 = vmatprep.subr.bf16.mxu0 %v3167
      %3231 = vmatpush1.bf16.msra.mxu0 %v3166
      %3232 = vmatprep.subr.bf16.mxu0 %v3169
      %3233 = vmatpush1.bf16.msra.mxu0 %v3168
      %3234 = vmatprep.subr.bf16.mxu0 %v3171
      %3235 = vmatpush1.bf16.msra.mxu0 %v3170
      %3236 = vmatprep.subr.bf16.mxu0 %v3173
      %3237 = vmatpush1.bf16.msra.mxu0 %v3172
      %3238 = vmatprep.subr.bf16.mxu0 %v3175
      %3239 = vmatpush1.bf16.msra.mxu0 %v3174
      %3240 = vmatprep.subr.bf16.mxu0 %v3177
      %3241 = vmatpush1.bf16.msra.mxu0 %v3176
      %3242 = vmatprep.subr.bf16.mxu0 %v3179
      %3243 = vmatpush1.bf16.msra.mxu0 %v3178
      %3244 = vmatprep.subr.bf16.mxu0 %v3181
      %3245 = vmatpush1.bf16.msra.mxu0 %v3180
      %3246 = vmatprep.subr.bf16.mxu0 %v3183
      %3247 = vmatpush1.bf16.msra.mxu0 %v3182
      %3248 = vmatprep.subr.bf16.mxu0 %v3185
      %3249 = vmatpush1.bf16.msra.mxu0 %v3184
      %3250 = vmatprep.subr.bf16.mxu0 %v3187
      %3251 = vmatpush1.bf16.msra.mxu0 %v3186
      %3252 = vmatprep.mubr.bf16.mxu0 %v712
      %3253 = vmatmul.mubr.bf16.gmra.mrb[0].mxu0 %v711
      %v3254 = vpop.f32.mrb[0].mxu0
      %v3255 = vadd.f32 0.0, %v3254
      %v3256 = vpop.f32.mrb[0].mxu0
      %v3257 = vadd.f32 0.0, %v3256
      %v3258 = vpop.f32.mrb[0].mxu0
      %v3259 = vpop.f32.mrb[0].mxu0
      %3260 = vdwg.mxu0
      %s3261 = scalar_lea.vmem %s3, 32
      %v3262 = vld [vmem:[%s3261] sm:$0xf]
      %v3263 = vpack.c.bf16 %v3255, %v3255
      %v3264 = vpack.c.bf16 %v3257, %v3257
      %v3266 = vsel %vm370, %v3262, 0
      %v3269 = vsel %vm374, %v3263, 0
      %v3272 = vsel %vm374, %v3264, 0
      %3274 = vmatprep.subr.bf16.mxu0 %v3272
      %3275 = vmatpush1.bf16.msra.mxu0 %v3269
      %3276 = vmatprep.subr.bf16.mxu0 0
      %3277 = vmatpush1.bf16.msra.mxu0 0
      %3278 = vmatprep.subr.bf16.mxu0 0
      %3279 = vmatpush1.bf16.msra.mxu0 0
      %3280 = vmatprep.subr.bf16.mxu0 0
      %3281 = vmatpush1.bf16.msra.mxu0 0
      %3282 = vmatprep.subr.bf16.mxu0 0
      %3283 = vmatpush1.bf16.msra.mxu0 0
      %3284 = vmatprep.subr.bf16.mxu0 0
      %3285 = vmatpush1.bf16.msra.mxu0 0
      %3286 = vmatprep.subr.bf16.mxu0 0
      %3287 = vmatpush1.bf16.msra.mxu0 0
      %3288 = vmatprep.subr.bf16.mxu0 0
      %3289 = vmatpush1.bf16.msra.mxu0 0
      %3290 = vmatprep.subr.bf16.mxu0 0
      %3291 = vmatpush1.bf16.msra.mxu0 0
      %3292 = vmatprep.subr.bf16.mxu0 0
      %3293 = vmatpush1.bf16.msra.mxu0 0
      %3294 = vmatprep.subr.bf16.mxu0 0
      %3295 = vmatpush1.bf16.msra.mxu0 0
      %3296 = vmatprep.subr.bf16.mxu0 0
      %3297 = vmatpush1.bf16.msra.mxu0 0
      %3298 = vmatprep.subr.bf16.mxu0 0
      %3299 = vmatpush1.bf16.msra.mxu0 0
      %3300 = vmatprep.subr.bf16.mxu0 0
      %3301 = vmatpush1.bf16.msra.mxu0 0
      %3302 = vmatprep.subr.bf16.mxu0 0
      %3303 = vmatpush1.bf16.msra.mxu0 0
      %3304 = vmatprep.subr.bf16.mxu0 0
      %3305 = vmatpush1.bf16.msra.mxu0 0
      %3306 = vmatprep.mubr.bf16.mxu0 0
      %3307 = vmatmul.mubr.bf16.gmra.mrb[0].mxu0 %v3266
      %v3308 = vpop.f32.mrb[0].mxu0
      %v3309 = vadd.f32 0.0, %v3308
      %v3310 = vpop.f32.mrb[0].mxu0
      %v3311 = vadd.f32 0.0, %v3310
      %v3312 = vpop.f32.mrb[0].mxu0
      %v3313 = vpop.f32.mrb[0].mxu0
      %3314 = vdwg.mxu0
      %v3315 = vadd.f32 %v3025, %v3309
      %v3316 = vadd.f32 %v3026, %v3311
      %v3317 = vld [vmem:[%s4] sm:$0xff]
      %3319 = vset.pattern.permute.xlu0 0
      %3320 = vperm.xlu0 %3319, %v3317
      %v3321 = vpop.permute.xlu0 %3320
      %v3323 = vadd.f32 %v3315, %v3321
      %v3324 = vadd.f32 %v3316, %v3321
      %v3325 = vmax.f32 %v3323, 0.0
      %v3326 = vmax.f32 %v3324, 0.0
      %v3327 = vadd.f32 %v709, %v3325
      %v3328 = vadd.f32 %v710, %v3326
      %v3329 = vpack.c.bf16 %v3327, %v3327
      %v3330 = vpack.c.bf16 %v3328, %v3328
      %3331 = vmatprep.subr.bf16.mxu0 %v842
      %3332 = vmatpush1.bf16.msra.mxu0 %v841
      %3333 = vmatprep.subr.bf16.mxu0 %v844
      %3334 = vmatpush1.bf16.msra.mxu0 %v843
      %3335 = vmatprep.subr.bf16.mxu0 %v846
      %3336 = vmatpush1.bf16.msra.mxu0 %v845
      %3337 = vmatprep.subr.bf16.mxu0 %v848
      %3338 = vmatpush1.bf16.msra.mxu0 %v847
      %3339 = vmatprep.subr.bf16.mxu0 %v850
      %3340 = vmatpush1.bf16.msra.mxu0 %v849
      %3341 = vmatprep.subr.bf16.mxu0 %v852
      %3342 = vmatpush1.bf16.msra.mxu0 %v851
      %3343 = vmatprep.subr.bf16.mxu0 %v854
      %3344 = vmatpush1.bf16.msra.mxu0 %v853
      %3345 = vmatprep.subr.bf16.mxu0 %v856
      %3346 = vmatpush1.bf16.msra.mxu0 %v855
      %3347 = vmatprep.subr.bf16.mxu0 %v858
      %3348 = vmatpush1.bf16.msra.mxu0 %v857
      %3349 = vmatprep.subr.bf16.mxu0 %v860
      %3350 = vmatpush1.bf16.msra.mxu0 %v859
      %3351 = vmatprep.subr.bf16.mxu0 %v862
      %3352 = vmatpush1.bf16.msra.mxu0 %v861
      %3353 = vmatprep.subr.bf16.mxu0 %v864
      %3354 = vmatpush1.bf16.msra.mxu0 %v863
      %3355 = vmatprep.subr.bf16.mxu0 %v866
      %3356 = vmatpush1.bf16.msra.mxu0 %v865
      %3357 = vmatprep.subr.bf16.mxu0 %v868
      %3358 = vmatpush1.bf16.msra.mxu0 %v867
      %3359 = vmatprep.subr.bf16.mxu0 %v870
      %3360 = vmatpush1.bf16.msra.mxu0 %v869
      %3361 = vmatprep.subr.bf16.mxu0 %v872
      %3362 = vmatpush1.bf16.msra.mxu0 %v871
      %3363 = vmatprep.mubr.bf16.mxu0 %v3330
      %3364 = vmatmul.mubr.bf16.gmra.mrb[0].mxu0 %v3329
      %v3365 = vpop.f32.mrb[0].mxu0
      %v3366 = vadd.f32 0.0, %v3365
      %v3367 = vpop.f32.mrb[0].mxu0
      %v3368 = vadd.f32 0.0, %v3367
      %v3369 = vpop.f32.mrb[0].mxu0
      %v3370 = vpop.f32.mrb[0].mxu0
      %3371 = vdwg.mxu0
      %v3372 = vpack.c.bf16 %v3366, %v3366
      %v3373 = vpack.c.bf16 %v3368, %v3368
      %3374 = vmatprep.subr.bf16.mxu0 %v1079
      %3375 = vmatpush1.bf16.msra.mxu0 %v1078
      %3376 = vmatprep.subr.bf16.mxu0 %v1081
      %3377 = vmatpush1.bf16.msra.mxu0 %v1080
      %3378 = vmatprep.subr.bf16.mxu0 %v1083
      %3379 = vmatpush1.bf16.msra.mxu0 %v1082
      %3380 = vmatprep.subr.bf16.mxu0 %v1085
      %3381 = vmatpush1.bf16.msra.mxu0 %v1084
      %3382 = vmatprep.subr.bf16.mxu0 %v1087
      %3383 = vmatpush1.bf16.msra.mxu0 %v1086
      %3384 = vmatprep.subr.bf16.mxu0 %v1089
      %3385 = vmatpush1.bf16.msra.mxu0 %v1088
      %3386 = vmatprep.subr.bf16.mxu0 %v1091
      %3387 = vmatpush1.bf16.msra.mxu0 %v1090
      %3388 = vmatprep.subr.bf16.mxu0 %v1093
      %3389 = vmatpush1.bf16.msra.mxu0 %v1092
      %3390 = vmatprep.subr.bf16.mxu0 %v1095
      %3391 = vmatpush1.bf16.msra.mxu0 %v1094
      %3392 = vmatprep.subr.bf16.mxu0 %v1097
      %3393 = vmatpush1.bf16.msra.mxu0 %v1096
      %3394 = vmatprep.subr.bf16.mxu0 %v1099
      %3395 = vmatpush1.bf16.msra.mxu0 %v1098
      %3396 = vmatprep.subr.bf16.mxu0 %v1101
      %3397 = vmatpush1.bf16.msra.mxu0 %v1100
      %3398 = vmatprep.subr.bf16.mxu0 %v1103
      %3399 = vmatpush1.bf16.msra.mxu0 %v1102
      %3400 = vmatprep.subr.bf16.mxu0 %v1105
      %3401 = vmatpush1.bf16.msra.mxu0 %v1104
      %3402 = vmatprep.subr.bf16.mxu0 %v1107
      %3403 = vmatpush1.bf16.msra.mxu0 %v1106
      %3404 = vmatprep.subr.bf16.mxu0 %v1109
      %3405 = vmatpush1.bf16.msra.mxu0 %v1108
      %3406 = vmatprep.mubr.bf16.mxu0 %v3330
      %3407 = vmatmul.mubr.bf16.gmra.mrb[0].mxu0 %v3329
      %v3408 = vpop.f32.mrb[0].mxu0
      %v3409 = vadd.f32 0.0, %v3408
      %v3410 = vpop.f32.mrb[0].mxu0
      %v3411 = vadd.f32 0.0, %v3410
      %v3412 = vpop.f32.mrb[0].mxu0
      %v3413 = vpop.f32.mrb[0].mxu0
      %3414 = vdwg.mxu0
      %v3415 = vpack.c.bf16 %v3409, %v3409
      %v3416 = vpack.c.bf16 %v3411, %v3411
      %v3418 = vsel %vm374, %v3415, 0
      %v3421 = vsel %vm374, %v3416, 0
      %3423 = vmatprep.subr.bf16.mxu0 %v3421
      %3424 = vmatpush1.bf16.msra.mxu0 %v3418
      %3425 = vmatprep.subr.bf16.mxu0 0
      %3426 = vmatpush1.bf16.msra.mxu0 0
      %3427 = vmatprep.subr.bf16.mxu0 0
      %3428 = vmatpush1.bf16.msra.mxu0 0
      %3429 = vmatprep.subr.bf16.mxu0 0
      %3430 = vmatpush1.bf16.msra.mxu0 0
      %3431 = vmatprep.subr.bf16.mxu0 0
      %3432 = vmatpush1.bf16.msra.mxu0 0
      %3433 = vmatprep.subr.bf16.mxu0 0
      %3434 = vmatpush1.bf16.msra.mxu0 0
      %3435 = vmatprep.subr.bf16.mxu0 0
      %3436 = vmatpush1.bf16.msra.mxu0 0
      %3437 = vmatprep.subr.bf16.mxu0 0
      %3438 = vmatpush1.bf16.msra.mxu0 0
      %3439 = vmatprep.subr.bf16.mxu0 0
      %3440 = vmatpush1.bf16.msra.mxu0 0
      %3441 = vmatprep.subr.bf16.mxu0 0
      %3442 = vmatpush1.bf16.msra.mxu0 0
      %3443 = vmatprep.subr.bf16.mxu0 0
      %3444 = vmatpush1.bf16.msra.mxu0 0
      %3445 = vmatprep.subr.bf16.mxu0 0
      %3446 = vmatpush1.bf16.msra.mxu0 0
      %3447 = vmatprep.subr.bf16.mxu0 0
      %3448 = vmatpush1.bf16.msra.mxu0 0
      %3449 = vmatprep.subr.bf16.mxu0 0
      %3450 = vmatpush1.bf16.msra.mxu0 0
      %3451 = vmatprep.subr.bf16.mxu0 0
      %3452 = vmatpush1.bf16.msra.mxu0 0
      %3453 = vmatprep.subr.bf16.mxu0 0
      %3454 = vmatpush1.bf16.msra.mxu0 0
      %3455 = vmatprep.mubr.bf16.mxu0 0
      %3456 = vmatmul.mubr.bf16.gmra.mrb[0].mxu0 %v1188
      %v3457 = vpop.f32.mrb[0].mxu0
      %v3458 = vadd.f32 0.0, %v3457
      %v3459 = vpop.f32.mrb[0].mxu0
      %v3460 = vadd.f32 0.0, %v3459
      %v3461 = vpop.f32.mrb[0].mxu0
      %v3462 = vpop.f32.mrb[0].mxu0
      %3463 = vdwg.mxu0
      %v3465 = vsel %vm374, %v3372, 0
      %v3468 = vsel %vm374, %v3373, 0
      %3470 = vmatprep.subr.bf16.mxu0 %v3468
      %3471 = vmatpush1.bf16.msra.mxu0 %v3465
      %3472 = vmatprep.subr.bf16.mxu0 0
      %3473 = vmatpush1.bf16.msra.mxu0 0
      %3474 = vmatprep.subr.bf16.mxu0 0
      %3475 = vmatpush1.bf16.msra.mxu0 0
      %3476 = vmatprep.subr.bf16.mxu0 0
      %3477 = vmatpush1.bf16.msra.mxu0 0
      %3478 = vmatprep.subr.bf16.mxu0 0
      %3479 = vmatpush1.bf16.msra.mxu0 0
      %3480 = vmatprep.subr.bf16.mxu0 0
      %3481 = vmatpush1.bf16.msra.mxu0 0
      %3482 = vmatprep.subr.bf16.mxu0 0
      %3483 = vmatpush1.bf16.msra.mxu0 0
      %3484 = vmatprep.subr.bf16.mxu0 0
      %3485 = vmatpush1.bf16.msra.mxu0 0
      %3486 = vmatprep.subr.bf16.mxu0 0
      %3487 = vmatpush1.bf16.msra.mxu0 0
      %3488 = vmatprep.subr.bf16.mxu0 0
      %3489 = vmatpush1.bf16.msra.mxu0 0
      %3490 = vmatprep.subr.bf16.mxu0 0
      %3491 = vmatpush1.bf16.msra.mxu0 0
      %3492 = vmatprep.subr.bf16.mxu0 0
      %3493 = vmatpush1.bf16.msra.mxu0 0
      %3494 = vmatprep.subr.bf16.mxu0 0
      %3495 = vmatpush1.bf16.msra.mxu0 0
      %3496 = vmatprep.subr.bf16.mxu0 0
      %3497 = vmatpush1.bf16.msra.mxu0 0
      %3498 = vmatprep.subr.bf16.mxu0 0
      %3499 = vmatpush1.bf16.msra.mxu0 0
      %3500 = vmatprep.subr.bf16.mxu0 0
      %3501 = vmatpush1.bf16.msra.mxu0 0
      %3502 = vmatprep.mubr.bf16.mxu0 0
      %3503 = vmatmul.mubr.bf16.gmra.mrb[0].mxu0 %v1238
      %v3504 = vpop.f32.mrb[0].mxu0
      %v3505 = vadd.f32 %v3458, %v3504
      %v3506 = vpop.f32.mrb[0].mxu0
      %v3507 = vadd.f32 %v3460, %v3506
      %v3508 = vpop.f32.mrb[0].mxu0
      %v3509 = vpop.f32.mrb[0].mxu0
      %3510 = vdwg.mxu0
      %3511 = vmatprep.subr.bf16.mxu0 %v1417
      %3512 = vmatpush1.bf16.msra.mxu0 %v1416
      %3513 = vmatprep.subr.bf16.mxu0 %v1419
      %3514 = vmatpush1.bf16.msra.mxu0 %v1418
      %3515 = vmatprep.subr.bf16.mxu0 %v1421
      %3516 = vmatpush1.bf16.msra.mxu0 %v1420
      %3517 = vmatprep.subr.bf16.mxu0 %v1423
      %3518 = vmatpush1.bf16.msra.mxu0 %v1422
      %3519 = vmatprep.subr.bf16.mxu0 %v1425
      %3520 = vmatpush1.bf16.msra.mxu0 %v1424
      %3521 = vmatprep.subr.bf16.mxu0 %v1427
      %3522 = vmatpush1.bf16.msra.mxu0 %v1426
      %3523 = vmatprep.subr.bf16.mxu0 %v1429
      %3524 = vmatpush1.bf16.msra.mxu0 %v1428
      %3525 = vmatprep.subr.bf16.mxu0 %v1431
      %3526 = vmatpush1.bf16.msra.mxu0 %v1430
      %3527 = vmatprep.subr.bf16.mxu0 %v1433
      %3528 = vmatpush1.bf16.msra.mxu0 %v1432
      %3529 = vmatprep.subr.bf16.mxu0 %v1435
      %3530 = vmatpush1.bf16.msra.mxu0 %v1434
      %3531 = vmatprep.subr.bf16.mxu0 %v1437
      %3532 = vmatpush1.bf16.msra.mxu0 %v1436
      %3533 = vmatprep.subr.bf16.mxu0 %v1439
      %3534 = vmatpush1.bf16.msra.mxu0 %v1438
      %3535 = vmatprep.subr.bf16.mxu0 %v1441
      %3536 = vmatpush1.bf16.msra.mxu0 %v1440
      %3537 = vmatprep.subr.bf16.mxu0 %v1443
      %3538 = vmatpush1.bf16.msra.mxu0 %v1442
      %3539 = vmatprep.subr.bf16.mxu0 %v1445
      %3540 = vmatpush1.bf16.msra.mxu0 %v1444
      %3541 = vmatprep.subr.bf16.mxu0 %v1447
      %3542 = vmatpush1.bf16.msra.mxu0 %v1446
      %3543 = vmatprep.mubr.bf16.mxu0 %v3330
      %3544 = vmatmul.mubr.bf16.gmra.mrb[0].mxu0 %v3329
      %v3545 = vpop.f32.mrb[0].mxu0
      %v3546 = vadd.f32 0.0, %v3545
      %v3547 = vpop.f32.mrb[0].mxu0
      %v3548 = vadd.f32 0.0, %v3547
      %v3549 = vpop.f32.mrb[0].mxu0
      %v3550 = vpop.f32.mrb[0].mxu0
      %3551 = vdwg.mxu0
      %v3552 = vpack.c.bf16 %v3546, %v3546
      %v3553 = vpack.c.bf16 %v3548, %v3548
      %v3555 = vsel %vm374, %v3552, 0
      %v3558 = vsel %vm374, %v3553, 0
      %3560 = vmatprep.subr.bf16.mxu0 %v3558
      %3561 = vmatpush1.bf16.msra.mxu0 %v3555
      %3562 = vmatprep.subr.bf16.mxu0 0
      %3563 = vmatpush1.bf16.msra.mxu0 0
      %3564 = vmatprep.subr.bf16.mxu0 0
      %3565 = vmatpush1.bf16.msra.mxu0 0
      %3566 = vmatprep.subr.bf16.mxu0 0
      %3567 = vmatpush1.bf16.msra.mxu0 0
      %3568 = vmatprep.subr.bf16.mxu0 0
      %3569 = vmatpush1.bf16.msra.mxu0 0
      %3570 = vmatprep.subr.bf16.mxu0 0
      %3571 = vmatpush1.bf16.msra.mxu0 0
      %3572 = vmatprep.subr.bf16.mxu0 0
      %3573 = vmatpush1.bf16.msra.mxu0 0
      %3574 = vmatprep.subr.bf16.mxu0 0
      %3575 = vmatpush1.bf16.msra.mxu0 0
      %3576 = vmatprep.subr.bf16.mxu0 0
      %3577 = vmatpush1.bf16.msra.mxu0 0
      %3578 = vmatprep.subr.bf16.mxu0 0
      %3579 = vmatpush1.bf16.msra.mxu0 0
      %3580 = vmatprep.subr.bf16.mxu0 0
      %3581 = vmatpush1.bf16.msra.mxu0 0
      %3582 = vmatprep.subr.bf16.mxu0 0
      %3583 = vmatpush1.bf16.msra.mxu0 0
      %3584 = vmatprep.subr.bf16.mxu0 0
      %3585 = vmatpush1.bf16.msra.mxu0 0
      %3586 = vmatprep.subr.bf16.mxu0 0
      %3587 = vmatpush1.bf16.msra.mxu0 0
      %3588 = vmatprep.subr.bf16.mxu0 0
      %3589 = vmatpush1.bf16.msra.mxu0 0
      %3590 = vmatprep.subr.bf16.mxu0 0
      %3591 = vmatpush1.bf16.msra.mxu0 0
      %3592 = vmatprep.mubr.bf16.mxu0 0
      %3593 = vmatmul.mubr.bf16.gmra.mrb[0].mxu0 %v1526
      %v3594 = vpop.f32.mrb[0].mxu0
      %v3595 = vadd.f32 0.0, %v3594
      %v3596 = vpop.f32.mrb[0].mxu0
      %v3597 = vadd.f32 0.0, %v3596
      %v3598 = vpop.f32.mrb[0].mxu0
      %v3599 = vpop.f32.mrb[0].mxu0
      %3600 = vdwg.mxu0
      %v3601 = vadd.f32 %v3505, %v3595
      %v3602 = vadd.f32 %v3507, %v3597
      %3603 = vmatprep.subr.bf16.mxu0 %v1707
      %3604 = vmatpush1.bf16.msra.mxu0 %v1706
      %3605 = vmatprep.subr.bf16.mxu0 %v1709
      %3606 = vmatpush1.bf16.msra.mxu0 %v1708
      %3607 = vmatprep.subr.bf16.mxu0 %v1711
      %3608 = vmatpush1.bf16.msra.mxu0 %v1710
      %3609 = vmatprep.subr.bf16.mxu0 %v1713
      %3610 = vmatpush1.bf16.msra.mxu0 %v1712
      %3611 = vmatprep.subr.bf16.mxu0 %v1715
      %3612 = vmatpush1.bf16.msra.mxu0 %v1714
      %3613 = vmatprep.subr.bf16.mxu0 %v1717
      %3614 = vmatpush1.bf16.msra.mxu0 %v1716
      %3615 = vmatprep.subr.bf16.mxu0 %v1719
      %3616 = vmatpush1.bf16.msra.mxu0 %v1718
      %3617 = vmatprep.subr.bf16.mxu0 %v1721
      %3618 = vmatpush1.bf16.msra.mxu0 %v1720
      %3619 = vmatprep.subr.bf16.mxu0 %v1723
      %3620 = vmatpush1.bf16.msra.mxu0 %v1722
      %3621 = vmatprep.subr.bf16.mxu0 %v1725
      %3622 = vmatpush1.bf16.msra.mxu0 %v1724
      %3623 = vmatprep.subr.bf16.mxu0 %v1727
      %3624 = vmatpush1.bf16.msra.mxu0 %v1726
      %3625 = vmatprep.subr.bf16.mxu0 %v1729
      %3626 = vmatpush1.bf16.msra.mxu0 %v1728
      %3627 = vmatprep.subr.bf16.mxu0 %v1731
      %3628 = vmatpush1.bf16.msra.mxu0 %v1730
      %3629 = vmatprep.subr.bf16.mxu0 %v1733
      %3630 = vmatpush1.bf16.msra.mxu0 %v1732
      %3631 = vmatprep.subr.bf16.mxu0 %v1735
      %3632 = vmatpush1.bf16.msra.mxu0 %v1734
      %3633 = vmatprep.subr.bf16.mxu0 %v1737
      %3634 = vmatpush1.bf16.msra.mxu0 %v1736
      %3635 = vmatprep.mubr.bf16.mxu0 %v3330
      %3636 = vmatmul.mubr.bf16.gmra.mrb[0].mxu0 %v3329
      %v3637 = vpop.f32.mrb[0].mxu0
      %v3638 = vadd.f32 0.0, %v3637
      %v3639 = vpop.f32.mrb[0].mxu0
      %v3640 = vadd.f32 0.0, %v3639
      %v3641 = vpop.f32.mrb[0].mxu0
      %v3642 = vpop.f32.mrb[0].mxu0
      %3643 = vdwg.mxu0
      %v3644 = vpack.c.bf16 %v3638, %v3638
      %v3645 = vpack.c.bf16 %v3640, %v3640
      %v3647 = vsel %vm374, %v3644, 0
      %v3650 = vsel %vm374, %v3645, 0
      %3652 = vmatprep.subr.bf16.mxu0 %v3650
      %3653 = vmatpush1.bf16.msra.mxu0 %v3647
      %3654 = vmatprep.subr.bf16.mxu0 0
      %3655 = vmatpush1.bf16.msra.mxu0 0
      %3656 = vmatprep.subr.bf16.mxu0 0
      %3657 = vmatpush1.bf16.msra.mxu0 0
      %3658 = vmatprep.subr.bf16.mxu0 0
      %3659 = vmatpush1.bf16.msra.mxu0 0
      %3660 = vmatprep.subr.bf16.mxu0 0
      %3661 = vmatpush1.bf16.msra.mxu0 0
      %3662 = vmatprep.subr.bf16.mxu0 0
      %3663 = vmatpush1.bf16.msra.mxu0 0
      %3664 = vmatprep.subr.bf16.mxu0 0
      %3665 = vmatpush1.bf16.msra.mxu0 0
      %3666 = vmatprep.subr.bf16.mxu0 0
      %3667 = vmatpush1.bf16.msra.mxu0 0
      %3668 = vmatprep.subr.bf16.mxu0 0
      %3669 = vmatpush1.bf16.msra.mxu0 0
      %3670 = vmatprep.subr.bf16.mxu0 0
      %3671 = vmatpush1.bf16.msra.mxu0 0
      %3672 = vmatprep.subr.bf16.mxu0 0
      %3673 = vmatpush1.bf16.msra.mxu0 0
      %3674 = vmatprep.subr.bf16.mxu0 0
      %3675 = vmatpush1.bf16.msra.mxu0 0
      %3676 = vmatprep.subr.bf16.mxu0 0
      %3677 = vmatpush1.bf16.msra.mxu0 0
      %3678 = vmatprep.subr.bf16.mxu0 0
      %3679 = vmatpush1.bf16.msra.mxu0 0
      %3680 = vmatprep.subr.bf16.mxu0 0
      %3681 = vmatpush1.bf16.msra.mxu0 0
      %3682 = vmatprep.subr.bf16.mxu0 0
      %3683 = vmatpush1.bf16.msra.mxu0 0
      %3684 = vmatprep.mubr.bf16.mxu0 0
      %3685 = vmatmul.mubr.bf16.gmra.mrb[0].mxu0 %v1816
      %v3686 = vpop.f32.mrb[0].mxu0
      %v3687 = vadd.f32 0.0, %v3686
      %v3688 = vpop.f32.mrb[0].mxu0
      %v3689 = vadd.f32 0.0, %v3688
      %v3690 = vpop.f32.mrb[0].mxu0
      %v3691 = vpop.f32.mrb[0].mxu0
      %3692 = vdwg.mxu0
      %v3693 = vadd.f32 %v3601, %v3687
      %v3694 = vadd.f32 %v3602, %v3689
      %3695 = vmatprep.subr.bf16.mxu0 %v1997
      %3696 = vmatpush1.bf16.msra.mxu0 %v1996
      %3697 = vmatprep.subr.bf16.mxu0 %v1999
      %3698 = vmatpush1.bf16.msra.mxu0 %v1998
      %3699 = vmatprep.subr.bf16.mxu0 %v2001
      %3700 = vmatpush1.bf16.msra.mxu0 %v2000
      %3701 = vmatprep.subr.bf16.mxu0 %v2003
      %3702 = vmatpush1.bf16.msra.mxu0 %v2002
      %3703 = vmatprep.subr.bf16.mxu0 %v2005
      %3704 = vmatpush1.bf16.msra.mxu0 %v2004
      %3705 = vmatprep.subr.bf16.mxu0 %v2007
      %3706 = vmatpush1.bf16.msra.mxu0 %v2006
      %3707 = vmatprep.subr.bf16.mxu0 %v2009
      %3708 = vmatpush1.bf16.msra.mxu0 %v2008
      %3709 = vmatprep.subr.bf16.mxu0 %v2011
      %3710 = vmatpush1.bf16.msra.mxu0 %v2010
      %3711 = vmatprep.subr.bf16.mxu0 %v2013
      %3712 = vmatpush1.bf16.msra.mxu0 %v2012
      %3713 = vmatprep.subr.bf16.mxu0 %v2015
      %3714 = vmatpush1.bf16.msra.mxu0 %v2014
      %3715 = vmatprep.subr.bf16.mxu0 %v2017
      %3716 = vmatpush1.bf16.msra.mxu0 %v2016
      %3717 = vmatprep.subr.bf16.mxu0 %v2019
      %3718 = vmatpush1.bf16.msra.mxu0 %v2018
      %3719 = vmatprep.subr.bf16.mxu0 %v2021
      %3720 = vmatpush1.bf16.msra.mxu0 %v2020
      %3721 = vmatprep.subr.bf16.mxu0 %v2023
      %3722 = vmatpush1.bf16.msra.mxu0 %v2022
      %3723 = vmatprep.subr.bf16.mxu0 %v2025
      %3724 = vmatpush1.bf16.msra.mxu0 %v2024
      %3725 = vmatprep.subr.bf16.mxu0 %v2027
      %3726 = vmatpush1.bf16.msra.mxu0 %v2026
      %3727 = vmatprep.mubr.bf16.mxu0 %v3330
      %3728 = vmatmul.mubr.bf16.gmra.mrb[0].mxu0 %v3329
      %v3729 = vpop.f32.mrb[0].mxu0
      %v3730 = vadd.f32 0.0, %v3729
      %v3731 = vpop.f32.mrb[0].mxu0
      %v3732 = vadd.f32 0.0, %v3731
      %v3733 = vpop.f32.mrb[0].mxu0
      %v3734 = vpop.f32.mrb[0].mxu0
      %3735 = vdwg.mxu0
      %v3736 = vpack.c.bf16 %v3730, %v3730
      %v3737 = vpack.c.bf16 %v3732, %v3732
      %v3739 = vsel %vm374, %v3736, 0
      %v3742 = vsel %vm374, %v3737, 0
      %3744 = vmatprep.subr.bf16.mxu0 %v3742
      %3745 = vmatpush1.bf16.msra.mxu0 %v3739
      %3746 = vmatprep.subr.bf16.mxu0 0
      %3747 = vmatpush1.bf16.msra.mxu0 0
      %3748 = vmatprep.subr.bf16.mxu0 0
      %3749 = vmatpush1.bf16.msra.mxu0 0
      %3750 = vmatprep.subr.bf16.mxu0 0
      %3751 = vmatpush1.bf16.msra.mxu0 0
      %3752 = vmatprep.subr.bf16.mxu0 0
      %3753 = vmatpush1.bf16.msra.mxu0 0
      %3754 = vmatprep.subr.bf16.mxu0 0
      %3755 = vmatpush1.bf16.msra.mxu0 0
      %3756 = vmatprep.subr.bf16.mxu0 0
      %3757 = vmatpush1.bf16.msra.mxu0 0
      %3758 = vmatprep.subr.bf16.mxu0 0
      %3759 = vmatpush1.bf16.msra.mxu0 0
      %3760 = vmatprep.subr.bf16.mxu0 0
      %3761 = vmatpush1.bf16.msra.mxu0 0
      %3762 = vmatprep.subr.bf16.mxu0 0
      %3763 = vmatpush1.bf16.msra.mxu0 0
      %3764 = vmatprep.subr.bf16.mxu0 0
      %3765 = vmatpush1.bf16.msra.mxu0 0
      %3766 = vmatprep.subr.bf16.mxu0 0
      %3767 = vmatpush1.bf16.msra.mxu0 0
      %3768 = vmatprep.subr.bf16.mxu0 0
      %3769 = vmatpush1.bf16.msra.mxu0 0
      %3770 = vmatprep.subr.bf16.mxu0 0
      %3771 = vmatpush1.bf16.msra.mxu0 0
      %3772 = vmatprep.subr.bf16.mxu0 0
      %3773 = vmatpush1.bf16.msra.mxu0 0
      %3774 = vmatprep.subr.bf16.mxu0 0
      %3775 = vmatpush1.bf16.msra.mxu0 0
      %3776 = vmatprep.mubr.bf16.mxu0 0
      %3777 = vmatmul.mubr.bf16.gmra.mrb[0].mxu0 %v2106
      %v3778 = vpop.f32.mrb[0].mxu0
      %v3779 = vadd.f32 0.0, %v3778
      %v3780 = vpop.f32.mrb[0].mxu0
      %v3781 = vadd.f32 0.0, %v3780
      %v3782 = vpop.f32.mrb[0].mxu0
      %v3783 = vpop.f32.mrb[0].mxu0
      %3784 = vdwg.mxu0
      %v3785 = vadd.f32 %v3693, %v3779
      %v3786 = vadd.f32 %v3694, %v3781
      %3787 = vmatprep.subr.bf16.mxu0 %v2287
      %3788 = vmatpush1.bf16.msra.mxu0 %v2286
      %3789 = vmatprep.subr.bf16.mxu0 %v2289
      %3790 = vmatpush1.bf16.msra.mxu0 %v2288
      %3791 = vmatprep.subr.bf16.mxu0 %v2291
      %3792 = vmatpush1.bf16.msra.mxu0 %v2290
      %3793 = vmatprep.subr.bf16.mxu0 %v2293
      %3794 = vmatpush1.bf16.msra.mxu0 %v2292
      %3795 = vmatprep.subr.bf16.mxu0 %v2295
      %3796 = vmatpush1.bf16.msra.mxu0 %v2294
      %3797 = vmatprep.subr.bf16.mxu0 %v2297
      %3798 = vmatpush1.bf16.msra.mxu0 %v2296
      %3799 = vmatprep.subr.bf16.mxu0 %v2299
      %3800 = vmatpush1.bf16.msra.mxu0 %v2298
      %3801 = vmatprep.subr.bf16.mxu0 %v2301
      %3802 = vmatpush1.bf16.msra.mxu0 %v2300
      %3803 = vmatprep.subr.bf16.mxu0 %v2303
      %3804 = vmatpush1.bf16.msra.mxu0 %v2302
      %3805 = vmatprep.subr.bf16.mxu0 %v2305
      %3806 = vmatpush1.bf16.msra.mxu0 %v2304
      %3807 = vmatprep.subr.bf16.mxu0 %v2307
      %3808 = vmatpush1.bf16.msra.mxu0 %v2306
      %3809 = vmatprep.subr.bf16.mxu0 %v2309
      %3810 = vmatpush1.bf16.msra.mxu0 %v2308
      %3811 = vmatprep.subr.bf16.mxu0 %v2311
      %3812 = vmatpush1.bf16.msra.mxu0 %v2310
      %3813 = vmatprep.subr.bf16.mxu0 %v2313
      %3814 = vmatpush1.bf16.msra.mxu0 %v2312
      %3815 = vmatprep.subr.bf16.mxu0 %v2315
      %3816 = vmatpush1.bf16.msra.mxu0 %v2314
      %3817 = vmatprep.subr.bf16.mxu0 %v2317
      %3818 = vmatpush1.bf16.msra.mxu0 %v2316
      %3819 = vmatprep.mubr.bf16.mxu0 %v3330
      %3820 = vmatmul.mubr.bf16.gmra.mrb[0].mxu0 %v3329
      %v3821 = vpop.f32.mrb[0].mxu0
      %v3822 = vadd.f32 0.0, %v3821
      %v3823 = vpop.f32.mrb[0].mxu0
      %v3824 = vadd.f32 0.0, %v3823
      %v3825 = vpop.f32.mrb[0].mxu0
      %v3826 = vpop.f32.mrb[0].mxu0
      %3827 = vdwg.mxu0
      %v3828 = vpack.c.bf16 %v3822, %v3822
      %v3829 = vpack.c.bf16 %v3824, %v3824
      %v3831 = vsel %vm374, %v3828, 0
      %v3834 = vsel %vm374, %v3829, 0
      %3836 = vmatprep.subr.bf16.mxu0 %v3834
      %3837 = vmatpush1.bf16.msra.mxu0 %v3831
      %3838 = vmatprep.subr.bf16.mxu0 0
      %3839 = vmatpush1.bf16.msra.mxu0 0
      %3840 = vmatprep.subr.bf16.mxu0 0
      %3841 = vmatpush1.bf16.msra.mxu0 0
      %3842 = vmatprep.subr.bf16.mxu0 0
      %3843 = vmatpush1.bf16.msra.mxu0 0
      %3844 = vmatprep.subr.bf16.mxu0 0
      %3845 = vmatpush1.bf16.msra.mxu0 0
      %3846 = vmatprep.subr.bf16.mxu0 0
      %3847 = vmatpush1.bf16.msra.mxu0 0
      %3848 = vmatprep.subr.bf16.mxu0 0
      %3849 = vmatpush1.bf16.msra.mxu0 0
      %3850 = vmatprep.subr.bf16.mxu0 0
      %3851 = vmatpush1.bf16.msra.mxu0 0
      %3852 = vmatprep.subr.bf16.mxu0 0
      %3853 = vmatpush1.bf16.msra.mxu0 0
      %3854 = vmatprep.subr.bf16.mxu0 0
      %3855 = vmatpush1.bf16.msra.mxu0 0
      %3856 = vmatprep.subr.bf16.mxu0 0
      %3857 = vmatpush1.bf16.msra.mxu0 0
      %3858 = vmatprep.subr.bf16.mxu0 0
      %3859 = vmatpush1.bf16.msra.mxu0 0
      %3860 = vmatprep.subr.bf16.mxu0 0
      %3861 = vmatpush1.bf16.msra.mxu0 0
      %3862 = vmatprep.subr.bf16.mxu0 0
      %3863 = vmatpush1.bf16.msra.mxu0 0
      %3864 = vmatprep.subr.bf16.mxu0 0
      %3865 = vmatpush1.bf16.msra.mxu0 0
      %3866 = vmatprep.subr.bf16.mxu0 0
      %3867 = vmatpush1.bf16.msra.mxu0 0
      %3868 = vmatprep.mubr.bf16.mxu0 0
      %3869 = vmatmul.mubr.bf16.gmra.mrb[0].mxu0 %v2396
      %v3870 = vpop.f32.mrb[0].mxu0
      %v3871 = vadd.f32 0.0, %v3870
      %v3872 = vpop.f32.mrb[0].mxu0
      %v3873 = vadd.f32 0.0, %v3872
      %v3874 = vpop.f32.mrb[0].mxu0
      %v3875 = vpop.f32.mrb[0].mxu0
      %3876 = vdwg.mxu0
      %v3877 = vadd.f32 %v3785, %v3871
      %v3878 = vadd.f32 %v3786, %v3873
      %3879 = vmatprep.subr.bf16.mxu0 %v2577
      %3880 = vmatpush1.bf16.msra.mxu0 %v2576
      %3881 = vmatprep.subr.bf16.mxu0 %v2579
      %3882 = vmatpush1.bf16.msra.mxu0 %v2578
      %3883 = vmatprep.subr.bf16.mxu0 %v2581
      %3884 = vmatpush1.bf16.msra.mxu0 %v2580
      %3885 = vmatprep.subr.bf16.mxu0 %v2583
      %3886 = vmatpush1.bf16.msra.mxu0 %v2582
      %3887 = vmatprep.subr.bf16.mxu0 %v2585
      %3888 = vmatpush1.bf16.msra.mxu0 %v2584
      %3889 = vmatprep.subr.bf16.mxu0 %v2587
      %3890 = vmatpush1.bf16.msra.mxu0 %v2586
      %3891 = vmatprep.subr.bf16.mxu0 %v2589
      %3892 = vmatpush1.bf16.msra.mxu0 %v2588
      %3893 = vmatprep.subr.bf16.mxu0 %v2591
      %3894 = vmatpush1.bf16.msra.mxu0 %v2590
      %3895 = vmatprep.subr.bf16.mxu0 %v2593
      %3896 = vmatpush1.bf16.msra.mxu0 %v2592
      %3897 = vmatprep.subr.bf16.mxu0 %v2595
      %3898 = vmatpush1.bf16.msra.mxu0 %v2594
      %3899 = vmatprep.subr.bf16.mxu0 %v2597
      %3900 = vmatpush1.bf16.msra.mxu0 %v2596
      %3901 = vmatprep.subr.bf16.mxu0 %v2599
      %3902 = vmatpush1.bf16.msra.mxu0 %v2598
      %3903 = vmatprep.subr.bf16.mxu0 %v2601
      %3904 = vmatpush1.bf16.msra.mxu0 %v2600
      %3905 = vmatprep.subr.bf16.mxu0 %v2603
      %3906 = vmatpush1.bf16.msra.mxu0 %v2602
      %3907 = vmatprep.subr.bf16.mxu0 %v2605
      %3908 = vmatpush1.bf16.msra.mxu0 %v2604
      %3909 = vmatprep.subr.bf16.mxu0 %v2607
      %3910 = vmatpush1.bf16.msra.mxu0 %v2606
      %3911 = vmatprep.mubr.bf16.mxu0 %v3330
      %3912 = vmatmul.mubr.bf16.gmra.mrb[0].mxu0 %v3329
      %v3913 = vpop.f32.mrb[0].mxu0
      %v3914 = vadd.f32 0.0, %v3913
      %v3915 = vpop.f32.mrb[0].mxu0
      %v3916 = vadd.f32 0.0, %v3915
      %v3917 = vpop.f32.mrb[0].mxu0
      %v3918 = vpop.f32.mrb[0].mxu0
      %3919 = vdwg.mxu0
      %v3920 = vpack.c.bf16 %v3914, %v3914
      %v3921 = vpack.c.bf16 %v3916, %v3916
      %v3923 = vsel %vm374, %v3920, 0
      %v3926 = vsel %vm374, %v3921, 0
      %3928 = vmatprep.subr.bf16.mxu0 %v3926
      %3929 = vmatpush1.bf16.msra.mxu0 %v3923
      %3930 = vmatprep.subr.bf16.mxu0 0
      %3931 = vmatpush1.bf16.msra.mxu0 0
      %3932 = vmatprep.subr.bf16.mxu0 0
      %3933 = vmatpush1.bf16.msra.mxu0 0
      %3934 = vmatprep.subr.bf16.mxu0 0
      %3935 = vmatpush1.bf16.msra.mxu0 0
      %3936 = vmatprep.subr.bf16.mxu0 0
      %3937 = vmatpush1.bf16.msra.mxu0 0
      %3938 = vmatprep.subr.bf16.mxu0 0
      %3939 = vmatpush1.bf16.msra.mxu0 0
      %3940 = vmatprep.subr.bf16.mxu0 0
      %3941 = vmatpush1.bf16.msra.mxu0 0
      %3942 = vmatprep.subr.bf16.mxu0 0
      %3943 = vmatpush1.bf16.msra.mxu0 0
      %3944 = vmatprep.subr.bf16.mxu0 0
      %3945 = vmatpush1.bf16.msra.mxu0 0
      %3946 = vmatprep.subr.bf16.mxu0 0
      %3947 = vmatpush1.bf16.msra.mxu0 0
      %3948 = vmatprep.subr.bf16.mxu0 0
      %3949 = vmatpush1.bf16.msra.mxu0 0
      %3950 = vmatprep.subr.bf16.mxu0 0
      %3951 = vmatpush1.bf16.msra.mxu0 0
      %3952 = vmatprep.subr.bf16.mxu0 0
      %3953 = vmatpush1.bf16.msra.mxu0 0
      %3954 = vmatprep.subr.bf16.mxu0 0
      %3955 = vmatpush1.bf16.msra.mxu0 0
      %3956 = vmatprep.subr.bf16.mxu0 0
      %3957 = vmatpush1.bf16.msra.mxu0 0
      %3958 = vmatprep.subr.bf16.mxu0 0
      %3959 = vmatpush1.bf16.msra.mxu0 0
      %3960 = vmatprep.mubr.bf16.mxu0 0
      %3961 = vmatmul.mubr.bf16.gmra.mrb[0].mxu0 %v2686
      %v3962 = vpop.f32.mrb[0].mxu0
      %v3963 = vadd.f32 0.0, %v3962
      %v3964 = vpop.f32.mrb[0].mxu0
      %v3965 = vadd.f32 0.0, %v3964
      %v3966 = vpop.f32.mrb[0].mxu0
      %v3967 = vpop.f32.mrb[0].mxu0
      %3968 = vdwg.mxu0
      %v3969 = vadd.f32 %v3877, %v3963
      %v3970 = vadd.f32 %v3878, %v3965
      %3971 = vmatprep.subr.bf16.mxu0 %v2867
      %3972 = vmatpush1.bf16.msra.mxu0 %v2866
      %3973 = vmatprep.subr.bf16.mxu0 %v2869
      %3974 = vmatpush1.bf16.msra.mxu0 %v2868
      %3975 = vmatprep.subr.bf16.mxu0 %v2871
      %3976 = vmatpush1.bf16.msra.mxu0 %v2870
      %3977 = vmatprep.subr.bf16.mxu0 %v2873
      %3978 = vmatpush1.bf16.msra.mxu0 %v2872
      %3979 = vmatprep.subr.bf16.mxu0 %v2875
      %3980 = vmatpush1.bf16.msra.mxu0 %v2874
      %3981 = vmatprep.subr.bf16.mxu0 %v2877
      %3982 = vmatpush1.bf16.msra.mxu0 %v2876
      %3983 = vmatprep.subr.bf16.mxu0 %v2879
      %3984 = vmatpush1.bf16.msra.mxu0 %v2878
      %3985 = vmatprep.subr.bf16.mxu0 %v2881
      %3986 = vmatpush1.bf16.msra.mxu0 %v2880
      %3987 = vmatprep.subr.bf16.mxu0 %v2883
      %3988 = vmatpush1.bf16.msra.mxu0 %v2882
      %3989 = vmatprep.subr.bf16.mxu0 %v2885
      %3990 = vmatpush1.bf16.msra.mxu0 %v2884
      %3991 = vmatprep.subr.bf16.mxu0 %v2887
      %3992 = vmatpush1.bf16.msra.mxu0 %v2886
      %3993 = vmatprep.subr.bf16.mxu0 %v2889
      %3994 = vmatpush1.bf16.msra.mxu0 %v2888
      %3995 = vmatprep.subr.bf16.mxu0 %v2891
      %3996 = vmatpush1.bf16.msra.mxu0 %v2890
      %3997 = vmatprep.subr.bf16.mxu0 %v2893
      %3998 = vmatpush1.bf16.msra.mxu0 %v2892
      %3999 = vmatprep.subr.bf16.mxu0 %v2895
      %4000 = vmatpush1.bf16.msra.mxu0 %v2894
      %4001 = vmatprep.subr.bf16.mxu0 %v2897
      %4002 = vmatpush1.bf16.msra.mxu0 %v2896
      %4003 = vmatprep.mubr.bf16.mxu0 %v3330
      %4004 = vmatmul.mubr.bf16.gmra.mrb[0].mxu0 %v3329
      %v4005 = vpop.f32.mrb[0].mxu0
      %v4006 = vadd.f32 0.0, %v4005
      %v4007 = vpop.f32.mrb[0].mxu0
      %v4008 = vadd.f32 0.0, %v4007
      %v4009 = vpop.f32.mrb[0].mxu0
      %v4010 = vpop.f32.mrb[0].mxu0
      %4011 = vdwg.mxu0
      %v4012 = vpack.c.bf16 %v4006, %v4006
      %v4013 = vpack.c.bf16 %v4008, %v4008
      %v4015 = vsel %vm374, %v4012, 0
      %v4018 = vsel %vm374, %v4013, 0
      %4020 = vmatprep.subr.bf16.mxu0 %v4018
      %4021 = vmatpush1.bf16.msra.mxu0 %v4015
      %4022 = vmatprep.subr.bf16.mxu0 0
      %4023 = vmatpush1.bf16.msra.mxu0 0
      %4024 = vmatprep.subr.bf16.mxu0 0
      %4025 = vmatpush1.bf16.msra.mxu0 0
      %4026 = vmatprep.subr.bf16.mxu0 0
      %4027 = vmatpush1.bf16.msra.mxu0 0
      %4028 = vmatprep.subr.bf16.mxu0 0
      %4029 = vmatpush1.bf16.msra.mxu0 0
      %4030 = vmatprep.subr.bf16.mxu0 0
      %4031 = vmatpush1.bf16.msra.mxu0 0
      %4032 = vmatprep.subr.bf16.mxu0 0
      %4033 = vmatpush1.bf16.msra.mxu0 0
      %4034 = vmatprep.subr.bf16.mxu0 0
      %4035 = vmatpush1.bf16.msra.mxu0 0
      %4036 = vmatprep.subr.bf16.mxu0 0
      %4037 = vmatpush1.bf16.msra.mxu0 0
      %4038 = vmatprep.subr.bf16.mxu0 0
      %4039 = vmatpush1.bf16.msra.mxu0 0
      %4040 = vmatprep.subr.bf16.mxu0 0
      %4041 = vmatpush1.bf16.msra.mxu0 0
      %4042 = vmatprep.subr.bf16.mxu0 0
      %4043 = vmatpush1.bf16.msra.mxu0 0
      %4044 = vmatprep.subr.bf16.mxu0 0
      %4045 = vmatpush1.bf16.msra.mxu0 0
      %4046 = vmatprep.subr.bf16.mxu0 0
      %4047 = vmatpush1.bf16.msra.mxu0 0
      %4048 = vmatprep.subr.bf16.mxu0 0
      %4049 = vmatpush1.bf16.msra.mxu0 0
      %4050 = vmatprep.subr.bf16.mxu0 0
      %4051 = vmatpush1.bf16.msra.mxu0 0
      %4052 = vmatprep.mubr.bf16.mxu0 0
      %4053 = vmatmul.mubr.bf16.gmra.mrb[0].mxu0 %v2976
      %v4054 = vpop.f32.mrb[0].mxu0
      %v4055 = vadd.f32 0.0, %v4054
      %v4056 = vpop.f32.mrb[0].mxu0
      %v4057 = vadd.f32 0.0, %v4056
      %v4058 = vpop.f32.mrb[0].mxu0
      %v4059 = vpop.f32.mrb[0].mxu0
      %4060 = vdwg.mxu0
      %v4061 = vadd.f32 %v3969, %v4055
      %v4062 = vadd.f32 %v3970, %v4057
      %4063 = vmatprep.subr.bf16.mxu0 %v3157
      %4064 = vmatpush1.bf16.msra.mxu0 %v3156
      %4065 = vmatprep.subr.bf16.mxu0 %v3159
      %4066 = vmatpush1.bf16.msra.mxu0 %v3158
      %4067 = vmatprep.subr.bf16.mxu0 %v3161
      %4068 = vmatpush1.bf16.msra.mxu0 %v3160
      %4069 = vmatprep.subr.bf16.mxu0 %v3163
      %4070 = vmatpush1.bf16.msra.mxu0 %v3162
      %4071 = vmatprep.subr.bf16.mxu0 %v3165
      %4072 = vmatpush1.bf16.msra.mxu0 %v3164
      %4073 = vmatprep.subr.bf16.mxu0 %v3167
      %4074 = vmatpush1.bf16.msra.mxu0 %v3166
      %4075 = vmatprep.subr.bf16.mxu0 %v3169
      %4076 = vmatpush1.bf16.msra.mxu0 %v3168
      %4077 = vmatprep.subr.bf16.mxu0 %v3171
      %4078 = vmatpush1.bf16.msra.mxu0 %v3170
      %4079 = vmatprep.subr.bf16.mxu0 %v3173
      %4080 = vmatpush1.bf16.msra.mxu0 %v3172
      %4081 = vmatprep.subr.bf16.mxu0 %v3175
      %4082 = vmatpush1.bf16.msra.mxu0 %v3174
      %4083 = vmatprep.subr.bf16.mxu0 %v3177
      %4084 = vmatpush1.bf16.msra.mxu0 %v3176
      %4085 = vmatprep.subr.bf16.mxu0 %v3179
      %4086 = vmatpush1.bf16.msra.mxu0 %v3178
      %4087 = vmatprep.subr.bf16.mxu0 %v3181
      %4088 = vmatpush1.bf16.msra.mxu0 %v3180
      %4089 = vmatprep.subr.bf16.mxu0 %v3183
      %4090 = vmatpush1.bf16.msra.mxu0 %v3182
      %4091 = vmatprep.subr.bf16.mxu0 %v3185
      %4092 = vmatpush1.bf16.msra.mxu0 %v3184
      %4093 = vmatprep.subr.bf16.mxu0 %v3187
      %4094 = vmatpush1.bf16.msra.mxu0 %v3186
      %4095 = vmatprep.mubr.bf16.mxu0 %v3330
      %4096 = vmatmul.mubr.bf16.gmra.mrb[0].mxu0 %v3329
      %v4097 = vpop.f32.mrb[0].mxu0
      %v4098 = vadd.f32 0.0, %v4097
      %v4099 = vpop.f32.mrb[0].mxu0
      %v4100 = vadd.f32 0.0, %v4099
      %v4101 = vpop.f32.mrb[0].mxu0
      %v4102 = vpop.f32.mrb[0].mxu0
      %4103 = vdwg.mxu0
      %v4104 = vpack.c.bf16 %v4098, %v4098
      %v4105 = vpack.c.bf16 %v4100, %v4100
      %v4107 = vsel %vm374, %v4104, 0
      %v4110 = vsel %vm374, %v4105, 0
      %4112 = vmatprep.subr.bf16.mxu0 %v4110
      %4113 = vmatpush1.bf16.msra.mxu0 %v4107
      %4114 = vmatprep.subr.bf16.mxu0 0
      %4115 = vmatpush1.bf16.msra.mxu0 0
      %4116 = vmatprep.subr.bf16.mxu0 0
      %4117 = vmatpush1.bf16.msra.mxu0 0
      %4118 = vmatprep.subr.bf16.mxu0 0
      %4119 = vmatpush1.bf16.msra.mxu0 0
      %4120 = vmatprep.subr.bf16.mxu0 0
      %4121 = vmatpush1.bf16.msra.mxu0 0
      %4122 = vmatprep.subr.bf16.mxu0 0
      %4123 = vmatpush1.bf16.msra.mxu0 0
      %4124 = vmatprep.subr.bf16.mxu0 0
      %4125 = vmatpush1.bf16.msra.mxu0 0
      %4126 = vmatprep.subr.bf16.mxu0 0
      %4127 = vmatpush1.bf16.msra.mxu0 0
      %4128 = vmatprep.subr.bf16.mxu0 0
      %4129 = vmatpush1.bf16.msra.mxu0 0
      %4130 = vmatprep.subr.bf16.mxu0 0
      %4131 = vmatpush1.bf16.msra.mxu0 0
      %4132 = vmatprep.subr.bf16.mxu0 0
      %4133 = vmatpush1.bf16.msra.mxu0 0
      %4134 = vmatprep.subr.bf16.mxu0 0
      %4135 = vmatpush1.bf16.msra.mxu0 0
      %4136 = vmatprep.subr.bf16.mxu0 0
      %4137 = vmatpush1.bf16.msra.mxu0 0
      %4138 = vmatprep.subr.bf16.mxu0 0
      %4139 = vmatpush1.bf16.msra.mxu0 0
      %4140 = vmatprep.subr.bf16.mxu0 0
      %4141 = vmatpush1.bf16.msra.mxu0 0
      %4142 = vmatprep.subr.bf16.mxu0 0
      %4143 = vmatpush1.bf16.msra.mxu0 0
      %4144 = vmatprep.mubr.bf16.mxu0 0
      %4145 = vmatmul.mubr.bf16.gmra.mrb[0].mxu0 %v3266
      %v4146 = vpop.f32.mrb[0].mxu0
      %v4147 = vadd.f32 0.0, %v4146
      %v4148 = vpop.f32.mrb[0].mxu0
      %v4149 = vadd.f32 0.0, %v4148
      %v4150 = vpop.f32.mrb[0].mxu0
      %v4151 = vpop.f32.mrb[0].mxu0
      %4152 = vdwg.mxu0
      %v4153 = vadd.f32 %v4061, %v4147
      %v4154 = vadd.f32 %v4062, %v4149
      %v4155 = vadd.f32 %v4153, %v3321
      %v4156 = vadd.f32 %v4154, %v3321
      %v4157 = vmax.f32 %v4155, 0.0
      %v4158 = vmax.f32 %v4156, 0.0
      %v4159 = vadd.f32 %v3327, %v4157
      %v4160 = vadd.f32 %v3328, %v4158
      %v4161 = vpack.c.bf16 %v4159, %v4159
      %v4162 = vpack.c.bf16 %v4160, %v4160
      %4163 = vmatprep.subr.bf16.mxu0 %v842
      %4164 = vmatpush1.bf16.msra.mxu0 %v841
      %4165 = vmatprep.subr.bf16.mxu0 %v844
      %4166 = vmatpush1.bf16.msra.mxu0 %v843
      %4167 = vmatprep.subr.bf16.mxu0 %v846
      %4168 = vmatpush1.bf16.msra.mxu0 %v845
      %4169 = vmatprep.subr.bf16.mxu0 %v848
      %4170 = vmatpush1.bf16.msra.mxu0 %v847
      %4171 = vmatprep.subr.bf16.mxu0 %v850
      %4172 = vmatpush1.bf16.msra.mxu0 %v849
      %4173 = vmatprep.subr.bf16.mxu0 %v852
      %4174 = vmatpush1.bf16.msra.mxu0 %v851
      %4175 = vmatprep.subr.bf16.mxu0 %v854
      %4176 = vmatpush1.bf16.msra.mxu0 %v853
      %4177 = vmatprep.subr.bf16.mxu0 %v856
      %4178 = vmatpush1.bf16.msra.mxu0 %v855
      %4179 = vmatprep.subr.bf16.mxu0 %v858
      %4180 = vmatpush1.bf16.msra.mxu0 %v857
      %4181 = vmatprep.subr.bf16.mxu0 %v860
      %4182 = vmatpush1.bf16.msra.mxu0 %v859
      %4183 = vmatprep.subr.bf16.mxu0 %v862
      %4184 = vmatpush1.bf16.msra.mxu0 %v861
      %4185 = vmatprep.subr.bf16.mxu0 %v864
      %4186 = vmatpush1.bf16.msra.mxu0 %v863
      %4187 = vmatprep.subr.bf16.mxu0 %v866
      %4188 = vmatpush1.bf16.msra.mxu0 %v865
      %4189 = vmatprep.subr.bf16.mxu0 %v868
      %4190 = vmatpush1.bf16.msra.mxu0 %v867
      %4191 = vmatprep.subr.bf16.mxu0 %v870
      %4192 = vmatpush1.bf16.msra.mxu0 %v869
      %4193 = vmatprep.subr.bf16.mxu0 %v872
      %4194 = vmatpush1.bf16.msra.mxu0 %v871
      %4195 = vmatprep.mubr.bf16.mxu0 %v4162
      %4196 = vmatmul.mubr.bf16.gmra.mrb[0].mxu0 %v4161
      %v4197 = vpop.f32.mrb[0].mxu0
      %v4198 = vadd.f32 0.0, %v4197
      %v4199 = vpop.f32.mrb[0].mxu0
      %v4200 = vadd.f32 0.0, %v4199
      %v4201 = vpop.f32.mrb[0].mxu0
      %v4202 = vpop.f32.mrb[0].mxu0
      %4203 = vdwg.mxu0
      %v4204 = vpack.c.bf16 %v4198, %v4198
      %v4205 = vpack.c.bf16 %v4200, %v4200
      %4206 = vmatprep.subr.bf16.mxu0 %v1079
      %4207 = vmatpush1.bf16.msra.mxu0 %v1078
      %4208 = vmatprep.subr.bf16.mxu0 %v1081
      %4209 = vmatpush1.bf16.msra.mxu0 %v1080
      %4210 = vmatprep.subr.bf16.mxu0 %v1083
      %4211 = vmatpush1.bf16.msra.mxu0 %v1082
      %4212 = vmatprep.subr.bf16.mxu0 %v1085
      %4213 = vmatpush1.bf16.msra.mxu0 %v1084
      %4214 = vmatprep.subr.bf16.mxu0 %v1087
      %4215 = vmatpush1.bf16.msra.mxu0 %v1086
      %4216 = vmatprep.subr.bf16.mxu0 %v1089
      %4217 = vmatpush1.bf16.msra.mxu0 %v1088
      %4218 = vmatprep.subr.bf16.mxu0 %v1091
      %4219 = vmatpush1.bf16.msra.mxu0 %v1090
      %4220 = vmatprep.subr.bf16.mxu0 %v1093
      %4221 = vmatpush1.bf16.msra.mxu0 %v1092
      %4222 = vmatprep.subr.bf16.mxu0 %v1095
      %4223 = vmatpush1.bf16.msra.mxu0 %v1094
      %4224 = vmatprep.subr.bf16.mxu0 %v1097
      %4225 = vmatpush1.bf16.msra.mxu0 %v1096
      %4226 = vmatprep.subr.bf16.mxu0 %v1099
      %4227 = vmatpush1.bf16.msra.mxu0 %v1098
      %4228 = vmatprep.subr.bf16.mxu0 %v1101
      %4229 = vmatpush1.bf16.msra.mxu0 %v1100
      %4230 = vmatprep.subr.bf16.mxu0 %v1103
      %4231 = vmatpush1.bf16.msra.mxu0 %v1102
      %4232 = vmatprep.subr.bf16.mxu0 %v1105
      %4233 = vmatpush1.bf16.msra.mxu0 %v1104
      %4234 = vmatprep.subr.bf16.mxu0 %v1107
      %4235 = vmatpush1.bf16.msra.mxu0 %v1106
      %4236 = vmatprep.subr.bf16.mxu0 %v1109
      %4237 = vmatpush1.bf16.msra.mxu0 %v1108
      %4238 = vmatprep.mubr.bf16.mxu0 %v4162
      %4239 = vmatmul.mubr.bf16.gmra.mrb[0].mxu0 %v4161
      %v4240 = vpop.f32.mrb[0].mxu0
      %v4241 = vadd.f32 0.0, %v4240
      %v4242 = vpop.f32.mrb[0].mxu0
      %v4243 = vadd.f32 0.0, %v4242
      %v4244 = vpop.f32.mrb[0].mxu0
      %v4245 = vpop.f32.mrb[0].mxu0
      %4246 = vdwg.mxu0
      %v4247 = vpack.c.bf16 %v4241, %v4241
      %v4248 = vpack.c.bf16 %v4243, %v4243
      %v4250 = vsel %vm374, %v4247, 0
      %v4253 = vsel %vm374, %v4248, 0
      %4255 = vmatprep.subr.bf16.mxu0 %v4253
      %4256 = vmatpush1.bf16.msra.mxu0 %v4250
      %4257 = vmatprep.subr.bf16.mxu0 0
      %4258 = vmatpush1.bf16.msra.mxu0 0
      %4259 = vmatprep.subr.bf16.mxu0 0
      %4260 = vmatpush1.bf16.msra.mxu0 0
      %4261 = vmatprep.subr.bf16.mxu0 0
      %4262 = vmatpush1.bf16.msra.mxu0 0
      %4263 = vmatprep.subr.bf16.mxu0 0
      %4264 = vmatpush1.bf16.msra.mxu0 0
      %4265 = vmatprep.subr.bf16.mxu0 0
      %4266 = vmatpush1.bf16.msra.mxu0 0
      %4267 = vmatprep.subr.bf16.mxu0 0
      %4268 = vmatpush1.bf16.msra.mxu0 0
      %4269 = vmatprep.subr.bf16.mxu0 0
      %4270 = vmatpush1.bf16.msra.mxu0 0
      %4271 = vmatprep.subr.bf16.mxu0 0
      %4272 = vmatpush1.bf16.msra.mxu0 0
      %4273 = vmatprep.subr.bf16.mxu0 0
      %4274 = vmatpush1.bf16.msra.mxu0 0
      %4275 = vmatprep.subr.bf16.mxu0 0
      %4276 = vmatpush1.bf16.msra.mxu0 0
      %4277 = vmatprep.subr.bf16.mxu0 0
      %4278 = vmatpush1.bf16.msra.mxu0 0
      %4279 = vmatprep.subr.bf16.mxu0 0
      %4280 = vmatpush1.bf16.msra.mxu0 0
      %4281 = vmatprep.subr.bf16.mxu0 0
      %4282 = vmatpush1.bf16.msra.mxu0 0
      %4283 = vmatprep.subr.bf16.mxu0 0
      %4284 = vmatpush1.bf16.msra.mxu0 0
      %4285 = vmatprep.subr.bf16.mxu0 0
      %4286 = vmatpush1.bf16.msra.mxu0 0
      %4287 = vmatprep.mubr.bf16.mxu0 0
      %4288 = vmatmul.mubr.bf16.gmra.mrb[0].mxu0 %v1188
      %v4289 = vpop.f32.mrb[0].mxu0
      %v4290 = vadd.f32 0.0, %v4289
      %v4291 = vpop.f32.mrb[0].mxu0
      %v4292 = vadd.f32 0.0, %v4291
      %v4293 = vpop.f32.mrb[0].mxu0
      %v4294 = vpop.f32.mrb[0].mxu0
      %4295 = vdwg.mxu0
      %v4297 = vsel %vm374, %v4204, 0
      %v4300 = vsel %vm374, %v4205, 0
      %4302 = vmatprep.subr.bf16.mxu0 %v4300
      %4303 = vmatpush1.bf16.msra.mxu0 %v4297
      %4304 = vmatprep.subr.bf16.mxu0 0
      %4305 = vmatpush1.bf16.msra.mxu0 0
      %4306 = vmatprep.subr.bf16.mxu0 0
      %4307 = vmatpush1.bf16.msra.mxu0 0
      %4308 = vmatprep.subr.bf16.mxu0 0
      %4309 = vmatpush1.bf16.msra.mxu0 0
      %4310 = vmatprep.subr.bf16.mxu0 0
      %4311 = vmatpush1.bf16.msra.mxu0 0
      %4312 = vmatprep.subr.bf16.mxu0 0
      %4313 = vmatpush1.bf16.msra.mxu0 0
      %4314 = vmatprep.subr.bf16.mxu0 0
      %4315 = vmatpush1.bf16.msra.mxu0 0
      %4316 = vmatprep.subr.bf16.mxu0 0
      %4317 = vmatpush1.bf16.msra.mxu0 0
      %4318 = vmatprep.subr.bf16.mxu0 0
      %4319 = vmatpush1.bf16.msra.mxu0 0
      %4320 = vmatprep.subr.bf16.mxu0 0
      %4321 = vmatpush1.bf16.msra.mxu0 0
      %4322 = vmatprep.subr.bf16.mxu0 0
      %4323 = vmatpush1.bf16.msra.mxu0 0
      %4324 = vmatprep.subr.bf16.mxu0 0
      %4325 = vmatpush1.bf16.msra.mxu0 0
      %4326 = vmatprep.subr.bf16.mxu0 0
      %4327 = vmatpush1.bf16.msra.mxu0 0
      %4328 = vmatprep.subr.bf16.mxu0 0
      %4329 = vmatpush1.bf16.msra.mxu0 0
      %4330 = vmatprep.subr.bf16.mxu0 0
      %4331 = vmatpush1.bf16.msra.mxu0 0
      %4332 = vmatprep.subr.bf16.mxu0 0
      %4333 = vmatpush1.bf16.msra.mxu0 0
      %4334 = vmatprep.mubr.bf16.mxu0 0
      %4335 = vmatmul.mubr.bf16.gmra.mrb[0].mxu0 %v1238
      %v4336 = vpop.f32.mrb[0].mxu0
      %v4337 = vadd.f32 %v4290, %v4336
      %v4338 = vpop.f32.mrb[0].mxu0
      %v4339 = vadd.f32 %v4292, %v4338
      %v4340 = vpop.f32.mrb[0].mxu0
      %v4341 = vpop.f32.mrb[0].mxu0
      %4342 = vdwg.mxu0
      %4343 = vmatprep.subr.bf16.mxu0 %v1417
      %4344 = vmatpush1.bf16.msra.mxu0 %v1416
      %4345 = vmatprep.subr.bf16.mxu0 %v1419
      %4346 = vmatpush1.bf16.msra.mxu0 %v1418
      %4347 = vmatprep.subr.bf16.mxu0 %v1421
      %4348 = vmatpush1.bf16.msra.mxu0 %v1420
      %4349 = vmatprep.subr.bf16.mxu0 %v1423
      %4350 = vmatpush1.bf16.msra.mxu0 %v1422
      %4351 = vmatprep.subr.bf16.mxu0 %v1425
      %4352 = vmatpush1.bf16.msra.mxu0 %v1424
      %4353 = vmatprep.subr.bf16.mxu0 %v1427
      %4354 = vmatpush1.bf16.msra.mxu0 %v1426
      %4355 = vmatprep.subr.bf16.mxu0 %v1429
      %4356 = vmatpush1.bf16.msra.mxu0 %v1428
      %4357 = vmatprep.subr.bf16.mxu0 %v1431
      %4358 = vmatpush1.bf16.msra.mxu0 %v1430
      %4359 = vmatprep.subr.bf16.mxu0 %v1433
      %4360 = vmatpush1.bf16.msra.mxu0 %v1432
      %4361 = vmatprep.subr.bf16.mxu0 %v1435
      %4362 = vmatpush1.bf16.msra.mxu0 %v1434
      %4363 = vmatprep.subr.bf16.mxu0 %v1437
      %4364 = vmatpush1.bf16.msra.mxu0 %v1436
      %4365 = vmatprep.subr.bf16.mxu0 %v1439
      %4366 = vmatpush1.bf16.msra.mxu0 %v1438
      %4367 = vmatprep.subr.bf16.mxu0 %v1441
      %4368 = vmatpush1.bf16.msra.mxu0 %v1440
      %4369 = vmatprep.subr.bf16.mxu0 %v1443
      %4370 = vmatpush1.bf16.msra.mxu0 %v1442
      %4371 = vmatprep.subr.bf16.mxu0 %v1445
      %4372 = vmatpush1.bf16.msra.mxu0 %v1444
      %4373 = vmatprep.subr.bf16.mxu0 %v1447
      %4374 = vmatpush1.bf16.msra.mxu0 %v1446
      %4375 = vmatprep.mubr.bf16.mxu0 %v4162
      %4376 = vmatmul.mubr.bf16.gmra.mrb[0].mxu0 %v4161
      %v4377 = vpop.f32.mrb[0].mxu0
      %v4378 = vadd.f32 0.0, %v4377
      %v4379 = vpop.f32.mrb[0].mxu0
      %v4380 = vadd.f32 0.0, %v4379
      %v4381 = vpop.f32.mrb[0].mxu0
      %v4382 = vpop.f32.mrb[0].mxu0
      %4383 = vdwg.mxu0
      %v4384 = vpack.c.bf16 %v4378, %v4378
      %v4385 = vpack.c.bf16 %v4380, %v4380
      %v4387 = vsel %vm374, %v4384, 0
      %v4390 = vsel %vm374, %v4385, 0
      %4392 = vmatprep.subr.bf16.mxu0 %v4390
      %4393 = vmatpush1.bf16.msra.mxu0 %v4387
      %4394 = vmatprep.subr.bf16.mxu0 0
      %4395 = vmatpush1.bf16.msra.mxu0 0
      %4396 = vmatprep.subr.bf16.mxu0 0
      %4397 = vmatpush1.bf16.msra.mxu0 0
      %4398 = vmatprep.subr.bf16.mxu0 0
      %4399 = vmatpush1.bf16.msra.mxu0 0
      %4400 = vmatprep.subr.bf16.mxu0 0
      %4401 = vmatpush1.bf16.msra.mxu0 0
      %4402 = vmatprep.subr.bf16.mxu0 0
      %4403 = vmatpush1.bf16.msra.mxu0 0
      %4404 = vmatprep.subr.bf16.mxu0 0
      %4405 = vmatpush1.bf16.msra.mxu0 0
      %4406 = vmatprep.subr.bf16.mxu0 0
      %4407 = vmatpush1.bf16.msra.mxu0 0
      %4408 = vmatprep.subr.bf16.mxu0 0
      %4409 = vmatpush1.bf16.msra.mxu0 0
      %4410 = vmatprep.subr.bf16.mxu0 0
      %4411 = vmatpush1.bf16.msra.mxu0 0
      %4412 = vmatprep.subr.bf16.mxu0 0
      %4413 = vmatpush1.bf16.msra.mxu0 0
      %4414 = vmatprep.subr.bf16.mxu0 0
      %4415 = vmatpush1.bf16.msra.mxu0 0
      %4416 = vmatprep.subr.bf16.mxu0 0
      %4417 = vmatpush1.bf16.msra.mxu0 0
      %4418 = vmatprep.subr.bf16.mxu0 0
      %4419 = vmatpush1.bf16.msra.mxu0 0
      %4420 = vmatprep.subr.bf16.mxu0 0
      %4421 = vmatpush1.bf16.msra.mxu0 0
      %4422 = vmatprep.subr.bf16.mxu0 0
      %4423 = vmatpush1.bf16.msra.mxu0 0
      %4424 = vmatprep.mubr.bf16.mxu0 0
      %4425 = vmatmul.mubr.bf16.gmra.mrb[0].mxu0 %v1526
      %v4426 = vpop.f32.mrb[0].mxu0
      %v4427 = vadd.f32 0.0, %v4426
      %v4428 = vpop.f32.mrb[0].mxu0
      %v4429 = vadd.f32 0.0, %v4428
      %v4430 = vpop.f32.mrb[0].mxu0
      %v4431 = vpop.f32.mrb[0].mxu0
      %4432 = vdwg.mxu0
      %v4433 = vadd.f32 %v4337, %v4427
      %v4434 = vadd.f32 %v4339, %v4429
      %4435 = vmatprep.subr.bf16.mxu0 %v1707
      %4436 = vmatpush1.bf16.msra.mxu0 %v1706
      %4437 = vmatprep.subr.bf16.mxu0 %v1709
      %4438 = vmatpush1.bf16.msra.mxu0 %v1708
      %4439 = vmatprep.subr.bf16.mxu0 %v1711
      %4440 = vmatpush1.bf16.msra.mxu0 %v1710
      %4441 = vmatprep.subr.bf16.mxu0 %v1713
      %4442 = vmatpush1.bf16.msra.mxu0 %v1712
      %4443 = vmatprep.subr.bf16.mxu0 %v1715
      %4444 = vmatpush1.bf16.msra.mxu0 %v1714
      %4445 = vmatprep.subr.bf16.mxu0 %v1717
      %4446 = vmatpush1.bf16.msra.mxu0 %v1716
      %4447 = vmatprep.subr.bf16.mxu0 %v1719
      %4448 = vmatpush1.bf16.msra.mxu0 %v1718
      %4449 = vmatprep.subr.bf16.mxu0 %v1721
      %4450 = vmatpush1.bf16.msra.mxu0 %v1720
      %4451 = vmatprep.subr.bf16.mxu0 %v1723
      %4452 = vmatpush1.bf16.msra.mxu0 %v1722
      %4453 = vmatprep.subr.bf16.mxu0 %v1725
      %4454 = vmatpush1.bf16.msra.mxu0 %v1724
      %4455 = vmatprep.subr.bf16.mxu0 %v1727
      %4456 = vmatpush1.bf16.msra.mxu0 %v1726
      %4457 = vmatprep.subr.bf16.mxu0 %v1729
      %4458 = vmatpush1.bf16.msra.mxu0 %v1728
      %4459 = vmatprep.subr.bf16.mxu0 %v1731
      %4460 = vmatpush1.bf16.msra.mxu0 %v1730
      %4461 = vmatprep.subr.bf16.mxu0 %v1733
      %4462 = vmatpush1.bf16.msra.mxu0 %v1732
      %4463 = vmatprep.subr.bf16.mxu0 %v1735
      %4464 = vmatpush1.bf16.msra.mxu0 %v1734
      %4465 = vmatprep.subr.bf16.mxu0 %v1737
      %4466 = vmatpush1.bf16.msra.mxu0 %v1736
      %4467 = vmatprep.mubr.bf16.mxu0 %v4162
      %4468 = vmatmul.mubr.bf16.gmra.mrb[0].mxu0 %v4161
      %v4469 = vpop.f32.mrb[0].mxu0
      %v4470 = vadd.f32 0.0, %v4469
      %v4471 = vpop.f32.mrb[0].mxu0
      %v4472 = vadd.f32 0.0, %v4471
      %v4473 = vpop.f32.mrb[0].mxu0
      %v4474 = vpop.f32.mrb[0].mxu0
      %4475 = vdwg.mxu0
      %v4476 = vpack.c.bf16 %v4470, %v4470
      %v4477 = vpack.c.bf16 %v4472, %v4472
      %v4479 = vsel %vm374, %v4476, 0
      %v4482 = vsel %vm374, %v4477, 0
      %4484 = vmatprep.subr.bf16.mxu0 %v4482
      %4485 = vmatpush1.bf16.msra.mxu0 %v4479
      %4486 = vmatprep.subr.bf16.mxu0 0
      %4487 = vmatpush1.bf16.msra.mxu0 0
      %4488 = vmatprep.subr.bf16.mxu0 0
      %4489 = vmatpush1.bf16.msra.mxu0 0
      %4490 = vmatprep.subr.bf16.mxu0 0
      %4491 = vmatpush1.bf16.msra.mxu0 0
      %4492 = vmatprep.subr.bf16.mxu0 0
      %4493 = vmatpush1.bf16.msra.mxu0 0
      %4494 = vmatprep.subr.bf16.mxu0 0
      %4495 = vmatpush1.bf16.msra.mxu0 0
      %4496 = vmatprep.subr.bf16.mxu0 0
      %4497 = vmatpush1.bf16.msra.mxu0 0
      %4498 = vmatprep.subr.bf16.mxu0 0
      %4499 = vmatpush1.bf16.msra.mxu0 0
      %4500 = vmatprep.subr.bf16.mxu0 0
      %4501 = vmatpush1.bf16.msra.mxu0 0
      %4502 = vmatprep.subr.bf16.mxu0 0
      %4503 = vmatpush1.bf16.msra.mxu0 0
      %4504 = vmatprep.subr.bf16.mxu0 0
      %4505 = vmatpush1.bf16.msra.mxu0 0
      %4506 = vmatprep.subr.bf16.mxu0 0
      %4507 = vmatpush1.bf16.msra.mxu0 0
      %4508 = vmatprep.subr.bf16.mxu0 0
      %4509 = vmatpush1.bf16.msra.mxu0 0
      %4510 = vmatprep.subr.bf16.mxu0 0
      %4511 = vmatpush1.bf16.msra.mxu0 0
      %4512 = vmatprep.subr.bf16.mxu0 0
      %4513 = vmatpush1.bf16.msra.mxu0 0
      %4514 = vmatprep.subr.bf16.mxu0 0
      %4515 = vmatpush1.bf16.msra.mxu0 0
      %4516 = vmatprep.mubr.bf16.mxu0 0
      %4517 = vmatmul.mubr.bf16.gmra.mrb[0].mxu0 %v1816
      %v4518 = vpop.f32.mrb[0].mxu0
      %v4519 = vadd.f32 0.0, %v4518
      %v4520 = vpop.f32.mrb[0].mxu0
      %v4521 = vadd.f32 0.0, %v4520
      %v4522 = vpop.f32.mrb[0].mxu0
      %v4523 = vpop.f32.mrb[0].mxu0
      %4524 = vdwg.mxu0
      %v4525 = vadd.f32 %v4433, %v4519
      %v4526 = vadd.f32 %v4434, %v4521
      %4527 = vmatprep.subr.bf16.mxu0 %v1997
      %4528 = vmatpush1.bf16.msra.mxu0 %v1996
      %4529 = vmatprep.subr.bf16.mxu0 %v1999
      %4530 = vmatpush1.bf16.msra.mxu0 %v1998
      %4531 = vmatprep.subr.bf16.mxu0 %v2001
      %4532 = vmatpush1.bf16.msra.mxu0 %v2000
      %4533 = vmatprep.subr.bf16.mxu0 %v2003
      %4534 = vmatpush1.bf16.msra.mxu0 %v2002
      %4535 = vmatprep.subr.bf16.mxu0 %v2005
      %4536 = vmatpush1.bf16.msra.mxu0 %v2004
      %4537 = vmatprep.subr.bf16.mxu0 %v2007
      %4538 = vmatpush1.bf16.msra.mxu0 %v2006
      %4539 = vmatprep.subr.bf16.mxu0 %v2009
      %4540 = vmatpush1.bf16.msra.mxu0 %v2008
      %4541 = vmatprep.subr.bf16.mxu0 %v2011
      %4542 = vmatpush1.bf16.msra.mxu0 %v2010
      %4543 = vmatprep.subr.bf16.mxu0 %v2013
      %4544 = vmatpush1.bf16.msra.mxu0 %v2012
      %4545 = vmatprep.subr.bf16.mxu0 %v2015
      %4546 = vmatpush1.bf16.msra.mxu0 %v2014
      %4547 = vmatprep.subr.bf16.mxu0 %v2017
      %4548 = vmatpush1.bf16.msra.mxu0 %v2016
      %4549 = vmatprep.subr.bf16.mxu0 %v2019
      %4550 = vmatpush1.bf16.msra.mxu0 %v2018
      %4551 = vmatprep.subr.bf16.mxu0 %v2021
      %4552 = vmatpush1.bf16.msra.mxu0 %v2020
      %4553 = vmatprep.subr.bf16.mxu0 %v2023
      %4554 = vmatpush1.bf16.msra.mxu0 %v2022
      %4555 = vmatprep.subr.bf16.mxu0 %v2025
      %4556 = vmatpush1.bf16.msra.mxu0 %v2024
      %4557 = vmatprep.subr.bf16.mxu0 %v2027
      %4558 = vmatpush1.bf16.msra.mxu0 %v2026
      %4559 = vmatprep.mubr.bf16.mxu0 %v4162
      %4560 = vmatmul.mubr.bf16.gmra.mrb[0].mxu0 %v4161
      %v4561 = vpop.f32.mrb[0].mxu0
      %v4562 = vadd.f32 0.0, %v4561
      %v4563 = vpop.f32.mrb[0].mxu0
      %v4564 = vadd.f32 0.0, %v4563
      %v4565 = vpop.f32.mrb[0].mxu0
      %v4566 = vpop.f32.mrb[0].mxu0
      %4567 = vdwg.mxu0
      %v4568 = vpack.c.bf16 %v4562, %v4562
      %v4569 = vpack.c.bf16 %v4564, %v4564
      %v4571 = vsel %vm374, %v4568, 0
      %v4574 = vsel %vm374, %v4569, 0
      %4576 = vmatprep.subr.bf16.mxu0 %v4574
      %4577 = vmatpush1.bf16.msra.mxu0 %v4571
      %4578 = vmatprep.subr.bf16.mxu0 0
      %4579 = vmatpush1.bf16.msra.mxu0 0
      %4580 = vmatprep.subr.bf16.mxu0 0
      %4581 = vmatpush1.bf16.msra.mxu0 0
      %4582 = vmatprep.subr.bf16.mxu0 0
      %4583 = vmatpush1.bf16.msra.mxu0 0
      %4584 = vmatprep.subr.bf16.mxu0 0
      %4585 = vmatpush1.bf16.msra.mxu0 0
      %4586 = vmatprep.subr.bf16.mxu0 0
      %4587 = vmatpush1.bf16.msra.mxu0 0
      %4588 = vmatprep.subr.bf16.mxu0 0
      %4589 = vmatpush1.bf16.msra.mxu0 0
      %4590 = vmatprep.subr.bf16.mxu0 0
      %4591 = vmatpush1.bf16.msra.mxu0 0
      %4592 = vmatprep.subr.bf16.mxu0 0
      %4593 = vmatpush1.bf16.msra.mxu0 0
      %4594 = vmatprep.subr.bf16.mxu0 0
      %4595 = vmatpush1.bf16.msra.mxu0 0
      %4596 = vmatprep.subr.bf16.mxu0 0
      %4597 = vmatpush1.bf16.msra.mxu0 0
      %4598 = vmatprep.subr.bf16.mxu0 0
      %4599 = vmatpush1.bf16.msra.mxu0 0
      %4600 = vmatprep.subr.bf16.mxu0 0
      %4601 = vmatpush1.bf16.msra.mxu0 0
      %4602 = vmatprep.subr.bf16.mxu0 0
      %4603 = vmatpush1.bf16.msra.mxu0 0
      %4604 = vmatprep.subr.bf16.mxu0 0
      %4605 = vmatpush1.bf16.msra.mxu0 0
      %4606 = vmatprep.subr.bf16.mxu0 0
      %4607 = vmatpush1.bf16.msra.mxu0 0
      %4608 = vmatprep.mubr.bf16.mxu0 0
      %4609 = vmatmul.mubr.bf16.gmra.mrb[0].mxu0 %v2106
      %v4610 = vpop.f32.mrb[0].mxu0
      %v4611 = vadd.f32 0.0, %v4610
      %v4612 = vpop.f32.mrb[0].mxu0
      %v4613 = vadd.f32 0.0, %v4612
      %v4614 = vpop.f32.mrb[0].mxu0
      %v4615 = vpop.f32.mrb[0].mxu0
      %4616 = vdwg.mxu0
      %v4617 = vadd.f32 %v4525, %v4611
      %v4618 = vadd.f32 %v4526, %v4613
      %4619 = vmatprep.subr.bf16.mxu0 %v2287
      %4620 = vmatpush1.bf16.msra.mxu0 %v2286
      %4621 = vmatprep.subr.bf16.mxu0 %v2289
      %4622 = vmatpush1.bf16.msra.mxu0 %v2288
      %4623 = vmatprep.subr.bf16.mxu0 %v2291
      %4624 = vmatpush1.bf16.msra.mxu0 %v2290
      %4625 = vmatprep.subr.bf16.mxu0 %v2293
      %4626 = vmatpush1.bf16.msra.mxu0 %v2292
      %4627 = vmatprep.subr.bf16.mxu0 %v2295
      %4628 = vmatpush1.bf16.msra.mxu0 %v2294
      %4629 = vmatprep.subr.bf16.mxu0 %v2297
      %4630 = vmatpush1.bf16.msra.mxu0 %v2296
      %4631 = vmatprep.subr.bf16.mxu0 %v2299
      %4632 = vmatpush1.bf16.msra.mxu0 %v2298
      %4633 = vmatprep.subr.bf16.mxu0 %v2301
      %4634 = vmatpush1.bf16.msra.mxu0 %v2300
      %4635 = vmatprep.subr.bf16.mxu0 %v2303
      %4636 = vmatpush1.bf16.msra.mxu0 %v2302
      %4637 = vmatprep.subr.bf16.mxu0 %v2305
      %4638 = vmatpush1.bf16.msra.mxu0 %v2304
      %4639 = vmatprep.subr.bf16.mxu0 %v2307
      %4640 = vmatpush1.bf16.msra.mxu0 %v2306
      %4641 = vmatprep.subr.bf16.mxu0 %v2309
      %4642 = vmatpush1.bf16.msra.mxu0 %v2308
      %4643 = vmatprep.subr.bf16.mxu0 %v2311
      %4644 = vmatpush1.bf16.msra.mxu0 %v2310
      %4645 = vmatprep.subr.bf16.mxu0 %v2313
      %4646 = vmatpush1.bf16.msra.mxu0 %v2312
      %4647 = vmatprep.subr.bf16.mxu0 %v2315
      %4648 = vmatpush1.bf16.msra.mxu0 %v2314
      %4649 = vmatprep.subr.bf16.mxu0 %v2317
      %4650 = vmatpush1.bf16.msra.mxu0 %v2316
      %4651 = vmatprep.mubr.bf16.mxu0 %v4162
      %4652 = vmatmul.mubr.bf16.gmra.mrb[0].mxu0 %v4161
      %v4653 = vpop.f32.mrb[0].mxu0
      %v4654 = vadd.f32 0.0, %v4653
      %v4655 = vpop.f32.mrb[0].mxu0
      %v4656 = vadd.f32 0.0, %v4655
      %v4657 = vpop.f32.mrb[0].mxu0
      %v4658 = vpop.f32.mrb[0].mxu0
      %4659 = vdwg.mxu0
      %v4660 = vpack.c.bf16 %v4654, %v4654
      %v4661 = vpack.c.bf16 %v4656, %v4656
      %v4663 = vsel %vm374, %v4660, 0
      %v4666 = vsel %vm374, %v4661, 0
      %4668 = vmatprep.subr.bf16.mxu0 %v4666
      %4669 = vmatpush1.bf16.msra.mxu0 %v4663
      %4670 = vmatprep.subr.bf16.mxu0 0
      %4671 = vmatpush1.bf16.msra.mxu0 0
      %4672 = vmatprep.subr.bf16.mxu0 0
      %4673 = vmatpush1.bf16.msra.mxu0 0
      %4674 = vmatprep.subr.bf16.mxu0 0
      %4675 = vmatpush1.bf16.msra.mxu0 0
      %4676 = vmatprep.subr.bf16.mxu0 0
      %4677 = vmatpush1.bf16.msra.mxu0 0
      %4678 = vmatprep.subr.bf16.mxu0 0
      %4679 = vmatpush1.bf16.msra.mxu0 0
      %4680 = vmatprep.subr.bf16.mxu0 0
      %4681 = vmatpush1.bf16.msra.mxu0 0
      %4682 = vmatprep.subr.bf16.mxu0 0
      %4683 = vmatpush1.bf16.msra.mxu0 0
      %4684 = vmatprep.subr.bf16.mxu0 0
      %4685 = vmatpush1.bf16.msra.mxu0 0
      %4686 = vmatprep.subr.bf16.mxu0 0
      %4687 = vmatpush1.bf16.msra.mxu0 0
      %4688 = vmatprep.subr.bf16.mxu0 0
      %4689 = vmatpush1.bf16.msra.mxu0 0
      %4690 = vmatprep.subr.bf16.mxu0 0
      %4691 = vmatpush1.bf16.msra.mxu0 0
      %4692 = vmatprep.subr.bf16.mxu0 0
      %4693 = vmatpush1.bf16.msra.mxu0 0
      %4694 = vmatprep.subr.bf16.mxu0 0
      %4695 = vmatpush1.bf16.msra.mxu0 0
      %4696 = vmatprep.subr.bf16.mxu0 0
      %4697 = vmatpush1.bf16.msra.mxu0 0
      %4698 = vmatprep.subr.bf16.mxu0 0
      %4699 = vmatpush1.bf16.msra.mxu0 0
      %4700 = vmatprep.mubr.bf16.mxu0 0
      %4701 = vmatmul.mubr.bf16.gmra.mrb[0].mxu0 %v2396
      %v4702 = vpop.f32.mrb[0].mxu0
      %v4703 = vadd.f32 0.0, %v4702
      %v4704 = vpop.f32.mrb[0].mxu0
      %v4705 = vadd.f32 0.0, %v4704
      %v4706 = vpop.f32.mrb[0].mxu0
      %v4707 = vpop.f32.mrb[0].mxu0
      %4708 = vdwg.mxu0
      %v4709 = vadd.f32 %v4617, %v4703
      %v4710 = vadd.f32 %v4618, %v4705
      %4711 = vmatprep.subr.bf16.mxu0 %v2577
      %4712 = vmatpush1.bf16.msra.mxu0 %v2576
      %4713 = vmatprep.subr.bf16.mxu0 %v2579
      %4714 = vmatpush1.bf16.msra.mxu0 %v2578
      %4715 = vmatprep.subr.bf16.mxu0 %v2581
      %4716 = vmatpush1.bf16.msra.mxu0 %v2580
      %4717 = vmatprep.subr.bf16.mxu0 %v2583
      %4718 = vmatpush1.bf16.msra.mxu0 %v2582
      %4719 = vmatprep.subr.bf16.mxu0 %v2585
      %4720 = vmatpush1.bf16.msra.mxu0 %v2584
      %4721 = vmatprep.subr.bf16.mxu0 %v2587
      %4722 = vmatpush1.bf16.msra.mxu0 %v2586
      %4723 = vmatprep.subr.bf16.mxu0 %v2589
      %4724 = vmatpush1.bf16.msra.mxu0 %v2588
      %4725 = vmatprep.subr.bf16.mxu0 %v2591
      %4726 = vmatpush1.bf16.msra.mxu0 %v2590
      %4727 = vmatprep.subr.bf16.mxu0 %v2593
      %4728 = vmatpush1.bf16.msra.mxu0 %v2592
      %4729 = vmatprep.subr.bf16.mxu0 %v2595
      %4730 = vmatpush1.bf16.msra.mxu0 %v2594
      %4731 = vmatprep.subr.bf16.mxu0 %v2597
      %4732 = vmatpush1.bf16.msra.mxu0 %v2596
      %4733 = vmatprep.subr.bf16.mxu0 %v2599
      %4734 = vmatpush1.bf16.msra.mxu0 %v2598
      %4735 = vmatprep.subr.bf16.mxu0 %v2601
      %4736 = vmatpush1.bf16.msra.mxu0 %v2600
      %4737 = vmatprep.subr.bf16.mxu0 %v2603
      %4738 = vmatpush1.bf16.msra.mxu0 %v2602
      %4739 = vmatprep.subr.bf16.mxu0 %v2605
      %4740 = vmatpush1.bf16.msra.mxu0 %v2604
      %4741 = vmatprep.subr.bf16.mxu0 %v2607
      %4742 = vmatpush1.bf16.msra.mxu0 %v2606
      %4743 = vmatprep.mubr.bf16.mxu0 %v4162
      %4744 = vmatmul.mubr.bf16.gmra.mrb[0].mxu0 %v4161
      %v4745 = vpop.f32.mrb[0].mxu0
      %v4746 = vadd.f32 0.0, %v4745
      %v4747 = vpop.f32.mrb[0].mxu0
      %v4748 = vadd.f32 0.0, %v4747
      %v4749 = vpop.f32.mrb[0].mxu0
      %v4750 = vpop.f32.mrb[0].mxu0
      %4751 = vdwg.mxu0
      %v4752 = vpack.c.bf16 %v4746, %v4746
      %v4753 = vpack.c.bf16 %v4748, %v4748
      %v4755 = vsel %vm374, %v4752, 0
      %v4758 = vsel %vm374, %v4753, 0
      %4760 = vmatprep.subr.bf16.mxu0 %v4758
      %4761 = vmatpush1.bf16.msra.mxu0 %v4755
      %4762 = vmatprep.subr.bf16.mxu0 0
      %4763 = vmatpush1.bf16.msra.mxu0 0
      %4764 = vmatprep.subr.bf16.mxu0 0
      %4765 = vmatpush1.bf16.msra.mxu0 0
      %4766 = vmatprep.subr.bf16.mxu0 0
      %4767 = vmatpush1.bf16.msra.mxu0 0
      %4768 = vmatprep.subr.bf16.mxu0 0
      %4769 = vmatpush1.bf16.msra.mxu0 0
      %4770 = vmatprep.subr.bf16.mxu0 0
      %4771 = vmatpush1.bf16.msra.mxu0 0
      %4772 = vmatprep.subr.bf16.mxu0 0
      %4773 = vmatpush1.bf16.msra.mxu0 0
      %4774 = vmatprep.subr.bf16.mxu0 0
      %4775 = vmatpush1.bf16.msra.mxu0 0
      %4776 = vmatprep.subr.bf16.mxu0 0
      %4777 = vmatpush1.bf16.msra.mxu0 0
      %4778 = vmatprep.subr.bf16.mxu0 0
      %4779 = vmatpush1.bf16.msra.mxu0 0
      %4780 = vmatprep.subr.bf16.mxu0 0
      %4781 = vmatpush1.bf16.msra.mxu0 0
      %4782 = vmatprep.subr.bf16.mxu0 0
      %4783 = vmatpush1.bf16.msra.mxu0 0
      %4784 = vmatprep.subr.bf16.mxu0 0
      %4785 = vmatpush1.bf16.msra.mxu0 0
      %4786 = vmatprep.subr.bf16.mxu0 0
      %4787 = vmatpush1.bf16.msra.mxu0 0
      %4788 = vmatprep.subr.bf16.mxu0 0
      %4789 = vmatpush1.bf16.msra.mxu0 0
      %4790 = vmatprep.subr.bf16.mxu0 0
      %4791 = vmatpush1.bf16.msra.mxu0 0
      %4792 = vmatprep.mubr.bf16.mxu0 0
      %4793 = vmatmul.mubr.bf16.gmra.mrb[0].mxu0 %v2686
      %v4794 = vpop.f32.mrb[0].mxu0
      %v4795 = vadd.f32 0.0, %v4794
      %v4796 = vpop.f32.mrb[0].mxu0
      %v4797 = vadd.f32 0.0, %v4796
      %v4798 = vpop.f32.mrb[0].mxu0
      %v4799 = vpop.f32.mrb[0].mxu0
      %4800 = vdwg.mxu0
      %v4801 = vadd.f32 %v4709, %v4795
      %v4802 = vadd.f32 %v4710, %v4797
      %4803 = vmatprep.subr.bf16.mxu0 %v2867
      %4804 = vmatpush1.bf16.msra.mxu0 %v2866
      %4805 = vmatprep.subr.bf16.mxu0 %v2869
      %4806 = vmatpush1.bf16.msra.mxu0 %v2868
      %4807 = vmatprep.subr.bf16.mxu0 %v2871
      %4808 = vmatpush1.bf16.msra.mxu0 %v2870
      %4809 = vmatprep.subr.bf16.mxu0 %v2873
      %4810 = vmatpush1.bf16.msra.mxu0 %v2872
      %4811 = vmatprep.subr.bf16.mxu0 %v2875
      %4812 = vmatpush1.bf16.msra.mxu0 %v2874
      %4813 = vmatprep.subr.bf16.mxu0 %v2877
      %4814 = vmatpush1.bf16.msra.mxu0 %v2876
      %4815 = vmatprep.subr.bf16.mxu0 %v2879
      %4816 = vmatpush1.bf16.msra.mxu0 %v2878
      %4817 = vmatprep.subr.bf16.mxu0 %v2881
      %4818 = vmatpush1.bf16.msra.mxu0 %v2880
      %4819 = vmatprep.subr.bf16.mxu0 %v2883
      %4820 = vmatpush1.bf16.msra.mxu0 %v2882
      %4821 = vmatprep.subr.bf16.mxu0 %v2885
      %4822 = vmatpush1.bf16.msra.mxu0 %v2884
      %4823 = vmatprep.subr.bf16.mxu0 %v2887
      %4824 = vmatpush1.bf16.msra.mxu0 %v2886
      %4825 = vmatprep.subr.bf16.mxu0 %v2889
      %4826 = vmatpush1.bf16.msra.mxu0 %v2888
      %4827 = vmatprep.subr.bf16.mxu0 %v2891
      %4828 = vmatpush1.bf16.msra.mxu0 %v2890
      %4829 = vmatprep.subr.bf16.mxu0 %v2893
      %4830 = vmatpush1.bf16.msra.mxu0 %v2892
      %4831 = vmatprep.subr.bf16.mxu0 %v2895
      %4832 = vmatpush1.bf16.msra.mxu0 %v2894
      %4833 = vmatprep.subr.bf16.mxu0 %v2897
      %4834 = vmatpush1.bf16.msra.mxu0 %v2896
      %4835 = vmatprep.mubr.bf16.mxu0 %v4162
      %4836 = vmatmul.mubr.bf16.gmra.mrb[0].mxu0 %v4161
      %v4837 = vpop.f32.mrb[0].mxu0
      %v4838 = vadd.f32 0.0, %v4837
      %v4839 = vpop.f32.mrb[0].mxu0
      %v4840 = vadd.f32 0.0, %v4839
      %v4841 = vpop.f32.mrb[0].mxu0
      %v4842 = vpop.f32.mrb[0].mxu0
      %4843 = vdwg.mxu0
      %v4844 = vpack.c.bf16 %v4838, %v4838
      %v4845 = vpack.c.bf16 %v4840, %v4840
      %v4847 = vsel %vm374, %v4844, 0
      %v4850 = vsel %vm374, %v4845, 0
      %4852 = vmatprep.subr.bf16.mxu0 %v4850
      %4853 = vmatpush1.bf16.msra.mxu0 %v4847
      %4854 = vmatprep.subr.bf16.mxu0 0
      %4855 = vmatpush1.bf16.msra.mxu0 0
      %4856 = vmatprep.subr.bf16.mxu0 0
      %4857 = vmatpush1.bf16.msra.mxu0 0
      %4858 = vmatprep.subr.bf16.mxu0 0
      %4859 = vmatpush1.bf16.msra.mxu0 0
      %4860 = vmatprep.subr.bf16.mxu0 0
      %4861 = vmatpush1.bf16.msra.mxu0 0
      %4862 = vmatprep.subr.bf16.mxu0 0
      %4863 = vmatpush1.bf16.msra.mxu0 0
      %4864 = vmatprep.subr.bf16.mxu0 0
      %4865 = vmatpush1.bf16.msra.mxu0 0
      %4866 = vmatprep.subr.bf16.mxu0 0
      %4867 = vmatpush1.bf16.msra.mxu0 0
      %4868 = vmatprep.subr.bf16.mxu0 0
      %4869 = vmatpush1.bf16.msra.mxu0 0
      %4870 = vmatprep.subr.bf16.mxu0 0
      %4871 = vmatpush1.bf16.msra.mxu0 0
      %4872 = vmatprep.subr.bf16.mxu0 0
      %4873 = vmatpush1.bf16.msra.mxu0 0
      %4874 = vmatprep.subr.bf16.mxu0 0
      %4875 = vmatpush1.bf16.msra.mxu0 0
      %4876 = vmatprep.subr.bf16.mxu0 0
      %4877 = vmatpush1.bf16.msra.mxu0 0
      %4878 = vmatprep.subr.bf16.mxu0 0
      %4879 = vmatpush1.bf16.msra.mxu0 0
      %4880 = vmatprep.subr.bf16.mxu0 0
      %4881 = vmatpush1.bf16.msra.mxu0 0
      %4882 = vmatprep.subr.bf16.mxu0 0
      %4883 = vmatpush1.bf16.msra.mxu0 0
      %4884 = vmatprep.mubr.bf16.mxu0 0
      %4885 = vmatmul.mubr.bf16.gmra.mrb[0].mxu0 %v2976
      %v4886 = vpop.f32.mrb[0].mxu0
      %v4887 = vadd.f32 0.0, %v4886
      %v4888 = vpop.f32.mrb[0].mxu0
      %v4889 = vadd.f32 0.0, %v4888
      %v4890 = vpop.f32.mrb[0].mxu0
      %v4891 = vpop.f32.mrb[0].mxu0
      %4892 = vdwg.mxu0
      %v4893 = vadd.f32 %v4801, %v4887
      %v4894 = vadd.f32 %v4802, %v4889
      %4895 = vmatprep.subr.bf16.mxu0 %v3157
      %4896 = vmatpush1.bf16.msra.mxu0 %v3156
      %4897 = vmatprep.subr.bf16.mxu0 %v3159
      %4898 = vmatpush1.bf16.msra.mxu0 %v3158
      %4899 = vmatprep.subr.bf16.mxu0 %v3161
      %4900 = vmatpush1.bf16.msra.mxu0 %v3160
      %4901 = vmatprep.subr.bf16.mxu0 %v3163
      %4902 = vmatpush1.bf16.msra.mxu0 %v3162
      %4903 = vmatprep.subr.bf16.mxu0 %v3165
      %4904 = vmatpush1.bf16.msra.mxu0 %v3164
      %4905 = vmatprep.subr.bf16.mxu0 %v3167
      %4906 = vmatpush1.bf16.msra.mxu0 %v3166
      %4907 = vmatprep.subr.bf16.mxu0 %v3169
      %4908 = vmatpush1.bf16.msra.mxu0 %v3168
      %4909 = vmatprep.subr.bf16.mxu0 %v3171
      %4910 = vmatpush1.bf16.msra.mxu0 %v3170
      %4911 = vmatprep.subr.bf16.mxu0 %v3173
      %4912 = vmatpush1.bf16.msra.mxu0 %v3172
      %4913 = vmatprep.subr.bf16.mxu0 %v3175
      %4914 = vmatpush1.bf16.msra.mxu0 %v3174
      %4915 = vmatprep.subr.bf16.mxu0 %v3177
      %4916 = vmatpush1.bf16.msra.mxu0 %v3176
      %4917 = vmatprep.subr.bf16.mxu0 %v3179
      %4918 = vmatpush1.bf16.msra.mxu0 %v3178
      %4919 = vmatprep.subr.bf16.mxu0 %v3181
      %4920 = vmatpush1.bf16.msra.mxu0 %v3180
      %4921 = vmatprep.subr.bf16.mxu0 %v3183
      %4922 = vmatpush1.bf16.msra.mxu0 %v3182
      %4923 = vmatprep.subr.bf16.mxu0 %v3185
      %4924 = vmatpush1.bf16.msra.mxu0 %v3184
      %4925 = vmatprep.subr.bf16.mxu0 %v3187
      %4926 = vmatpush1.bf16.msra.mxu0 %v3186
      %4927 = vmatprep.mubr.bf16.mxu0 %v4162
      %4928 = vmatmul.mubr.bf16.gmra.mrb[0].mxu0 %v4161
      %v4929 = vpop.f32.mrb[0].mxu0
      %v4930 = vadd.f32 0.0, %v4929
      %v4931 = vpop.f32.mrb[0].mxu0
      %v4932 = vadd.f32 0.0, %v4931
      %v4933 = vpop.f32.mrb[0].mxu0
      %v4934 = vpop.f32.mrb[0].mxu0
      %4935 = vdwg.mxu0
      %v4936 = vpack.c.bf16 %v4930, %v4930
      %v4937 = vpack.c.bf16 %v4932, %v4932
      %v4939 = vsel %vm374, %v4936, 0
      %v4942 = vsel %vm374, %v4937, 0
      %4944 = vmatprep.subr.bf16.mxu0 %v4942
      %4945 = vmatpush1.bf16.msra.mxu0 %v4939
      %4946 = vmatprep.subr.bf16.mxu0 0
      %4947 = vmatpush1.bf16.msra.mxu0 0
      %4948 = vmatprep.subr.bf16.mxu0 0
      %4949 = vmatpush1.bf16.msra.mxu0 0
      %4950 = vmatprep.subr.bf16.mxu0 0
      %4951 = vmatpush1.bf16.msra.mxu0 0
      %4952 = vmatprep.subr.bf16.mxu0 0
      %4953 = vmatpush1.bf16.msra.mxu0 0
      %4954 = vmatprep.subr.bf16.mxu0 0
      %4955 = vmatpush1.bf16.msra.mxu0 0
      %4956 = vmatprep.subr.bf16.mxu0 0
      %4957 = vmatpush1.bf16.msra.mxu0 0
      %4958 = vmatprep.subr.bf16.mxu0 0
      %4959 = vmatpush1.bf16.msra.mxu0 0
      %4960 = vmatprep.subr.bf16.mxu0 0
      %4961 = vmatpush1.bf16.msra.mxu0 0
      %4962 = vmatprep.subr.bf16.mxu0 0
      %4963 = vmatpush1.bf16.msra.mxu0 0
      %4964 = vmatprep.subr.bf16.mxu0 0
      %4965 = vmatpush1.bf16.msra.mxu0 0
      %4966 = vmatprep.subr.bf16.mxu0 0
      %4967 = vmatpush1.bf16.msra.mxu0 0
      %4968 = vmatprep.subr.bf16.mxu0 0
      %4969 = vmatpush1.bf16.msra.mxu0 0
      %4970 = vmatprep.subr.bf16.mxu0 0
      %4971 = vmatpush1.bf16.msra.mxu0 0
      %4972 = vmatprep.subr.bf16.mxu0 0
      %4973 = vmatpush1.bf16.msra.mxu0 0
      %4974 = vmatprep.subr.bf16.mxu0 0
      %4975 = vmatpush1.bf16.msra.mxu0 0
      %4976 = vmatprep.mubr.bf16.mxu0 0
      %4977 = vmatmul.mubr.bf16.gmra.mrb[0].mxu0 %v3266
      %v4978 = vpop.f32.mrb[0].mxu0
      %v4979 = vadd.f32 0.0, %v4978
      %v4980 = vpop.f32.mrb[0].mxu0
      %v4981 = vadd.f32 0.0, %v4980
      %v4982 = vpop.f32.mrb[0].mxu0
      %v4983 = vpop.f32.mrb[0].mxu0
      %4984 = vdwg.mxu0
      %v4985 = vadd.f32 %v4893, %v4979
      %v4986 = vadd.f32 %v4894, %v4981
      %v4987 = vadd.f32 %v4985, %v3321
      %v4988 = vadd.f32 %v4986, %v3321
      %v4989 = vmax.f32 %v4987, 0.0
      %v4990 = vmax.f32 %v4988, 0.0
      %v4991 = vld [vmem:[%s9] sm:$0xff]
      %v4992 = vld [vmem:[%s9 + $0x8] sm:$0xff]
      %v4993 = vld [vmem:[%s9 + $0x10] sm:$0xff]
      %v4994 = vld [vmem:[%s9 + $0x18] sm:$0xff]
      %v4995 = vld [vmem:[%s9 + $0x20] sm:$0xff]
      %v4996 = vld [vmem:[%s9 + $0x28] sm:$0xff]
      %v4997 = vld [vmem:[%s9 + $0x30] sm:$0xff]
      %v4998 = vld [vmem:[%s9 + $0x38] sm:$0xff]
      %v4999 = vld [vmem:[%s9 + $0x40] sm:$0xff]
      %v5000 = vld [vmem:[%s9 + $0x48] sm:$0xff]
      %v5001 = vld [vmem:[%s9 + $0x50] sm:$0xff]
      %v5002 = vld [vmem:[%s9 + $0x58] sm:$0xff]
      %v5003 = vld [vmem:[%s9 + $0x60] sm:$0xff]
      %v5004 = vld [vmem:[%s9 + $0x68] sm:$0xff]
      %v5005 = vld [vmem:[%s9 + $0x70] sm:$0xff]
      %v5006 = vld [vmem:[%s9 + $0x78] sm:$0xff]
      %v5007 = vld [vmem:[%s9 + $0x80] sm:$0xff]
      %v5008 = vld [vmem:[%s9 + $0x88] sm:$0xff]
      %v5009 = vld [vmem:[%s9 + $0x90] sm:$0xff]
      %v5010 = vld [vmem:[%s9 + $0x98] sm:$0xff]
      %v5011 = vld [vmem:[%s9 + $0xa0] sm:$0xff]
      %v5012 = vld [vmem:[%s9 + $0xa8] sm:$0xff]
      %v5013 = vld [vmem:[%s9 + $0xb0] sm:$0xff]
      %v5014 = vld [vmem:[%s9 + $0xb8] sm:$0xff]
      %v5015 = vld [vmem:[%s9 + $0xc0] sm:$0xff]
      %v5016 = vld [vmem:[%s9 + $0xc8] sm:$0xff]
      %v5017 = vld [vmem:[%s9 + $0xd0] sm:$0xff]
      %v5018 = vld [vmem:[%s9 + $0xd8] sm:$0xff]
      %v5019 = vld [vmem:[%s9 + $0xe0] sm:$0xff]
      %v5020 = vld [vmem:[%s9 + $0xe8] sm:$0xff]
      %v5021 = vld [vmem:[%s9 + $0xf0] sm:$0xff]
      %v5022 = vld [vmem:[%s9 + $0xf8] sm:$0xff]
      %5023 = vmatprep.subr.mxu0 0.0
      %5024 = vmatpush1.msra.mxu0 %v4991
      %5025 = vmatprep.subr.mxu0 0.0
      %5026 = vmatpush1.msra.mxu0 %v4992
      %5027 = vmatprep.subr.mxu0 0.0
      %5028 = vmatpush1.msra.mxu0 %v4993
      %5029 = vmatprep.subr.mxu0 0.0
      %5030 = vmatpush1.msra.mxu0 %v4994
      %5031 = vmatprep.subr.mxu0 0.0
      %5032 = vmatpush1.msra.mxu0 %v4995
      %5033 = vmatprep.subr.mxu0 0.0
      %5034 = vmatpush1.msra.mxu0 %v4996
      %5035 = vmatprep.subr.mxu0 0.0
      %5036 = vmatpush1.msra.mxu0 %v4997
      %5037 = vmatprep.subr.mxu0 0.0
      %5038 = vmatpush1.msra.mxu0 %v4998
      %5039 = vmatprep.subr.mxu0 0.0
      %5040 = vmatpush1.msra.mxu0 %v4999
      %5041 = vmatprep.subr.mxu0 0.0
      %5042 = vmatpush1.msra.mxu0 %v5000
      %5043 = vmatprep.subr.mxu0 0.0
      %5044 = vmatpush1.msra.mxu0 %v5001
      %5045 = vmatprep.subr.mxu0 0.0
      %5046 = vmatpush1.msra.mxu0 %v5002
      %5047 = vmatprep.subr.mxu0 0.0
      %5048 = vmatpush1.msra.mxu0 %v5003
      %5049 = vmatprep.subr.mxu0 0.0
      %5050 = vmatpush1.msra.mxu0 %v5004
      %5051 = vmatprep.subr.mxu0 0.0
      %5052 = vmatpush1.msra.mxu0 %v5005
      %5053 = vmatprep.subr.mxu0 0.0
      %5054 = vmatpush1.msra.mxu0 %v5006
      %5055 = vmatprep.subr.mxu0 0.0
      %5056 = vmatpush1.msra.mxu0 %v5007
      %5057 = vmatprep.subr.mxu0 0.0
      %5058 = vmatpush1.msra.mxu0 %v5008
      %5059 = vmatprep.subr.mxu0 0.0
      %5060 = vmatpush1.msra.mxu0 %v5009
      %5061 = vmatprep.subr.mxu0 0.0
      %5062 = vmatpush1.msra.mxu0 %v5010
      %5063 = vmatprep.subr.mxu0 0.0
      %5064 = vmatpush1.msra.mxu0 %v5011
      %5065 = vmatprep.subr.mxu0 0.0
      %5066 = vmatpush1.msra.mxu0 %v5012
      %5067 = vmatprep.subr.mxu0 0.0
      %5068 = vmatpush1.msra.mxu0 %v5013
      %5069 = vmatprep.subr.mxu0 0.0
      %5070 = vmatpush1.msra.mxu0 %v5014
      %5071 = vmatprep.subr.mxu0 0.0
      %5072 = vmatpush1.msra.mxu0 %v5015
      %5073 = vmatprep.subr.mxu0 0.0
      %5074 = vmatpush1.msra.mxu0 %v5016
      %5075 = vmatprep.subr.mxu0 0.0
      %5076 = vmatpush1.msra.mxu0 %v5017
      %5077 = vmatprep.subr.mxu0 0.0
      %5078 = vmatpush1.msra.mxu0 %v5018
      %5079 = vmatprep.subr.mxu0 0.0
      %5080 = vmatpush1.msra.mxu0 %v5019
      %5081 = vmatprep.subr.mxu0 0.0
      %5082 = vmatpush1.msra.mxu0 %v5020
      %5083 = vmatprep.subr.mxu0 0.0
      %5084 = vmatpush1.msra.mxu0 %v5021
      %5085 = vmatprep.subr.mxu0 0.0
      %5086 = vmatpush1.msra.mxu0 %v5022
      %5087 = vmatprep.mubr.f32.mxu0 %v4990
      %5088 = vmatmul.mubr.f32.gmra.mrb[0].mxu0 %v4989
      %v5089 = vpop.f32.mrb[0].mxu0
      %v5090 = vadd.f32 0.0, %v5089
      %v5091 = vpop.f32.mrb[0].mxu0
      %5092 = vdwg.mxu0
      %s5093 = scalar_lea.vmem %s9, 256
      %v5094 = vld [vmem:[%s5093] sm:$0xff]
      %v5095 = vld [vmem:[%s5093 + $0x8] sm:$0xff]
      %v5096 = vld [vmem:[%s5093 + $0x10] sm:$0xff]
      %v5097 = vld [vmem:[%s5093 + $0x18] sm:$0xff]
      %v5098 = vld [vmem:[%s5093 + $0x20] sm:$0xff]
      %v5099 = vld [vmem:[%s5093 + $0x28] sm:$0xff]
      %v5100 = vld [vmem:[%s5093 + $0x30] sm:$0xff]
      %v5101 = vld [vmem:[%s5093 + $0x38] sm:$0xff]
      %v5102 = vld [vmem:[%s5093 + $0x40] sm:$0xff]
      %v5103 = vld [vmem:[%s5093 + $0x48] sm:$0xff]
      %v5104 = vld [vmem:[%s5093 + $0x50] sm:$0xff]
      %v5105 = vld [vmem:[%s5093 + $0x58] sm:$0xff]
      %v5106 = vld [vmem:[%s5093 + $0x60] sm:$0xff]
      %v5107 = vld [vmem:[%s5093 + $0x68] sm:$0xff]
      %v5108 = vld [vmem:[%s5093 + $0x70] sm:$0xff]
      %v5109 = vld [vmem:[%s5093 + $0x78] sm:$0xff]
      %v5110 = vld [vmem:[%s5093 + $0x80] sm:$0xff]
      %v5111 = vld [vmem:[%s5093 + $0x88] sm:$0xff]
      %v5112 = vld [vmem:[%s5093 + $0x90] sm:$0xff]
      %v5113 = vld [vmem:[%s5093 + $0x98] sm:$0xff]
      %v5114 = vld [vmem:[%s5093 + $0xa0] sm:$0xff]
      %v5115 = vld [vmem:[%s5093 + $0xa8] sm:$0xff]
      %v5116 = vld [vmem:[%s5093 + $0xb0] sm:$0xff]
      %v5117 = vld [vmem:[%s5093 + $0xb8] sm:$0xff]
      %v5118 = vld [vmem:[%s5093 + $0xc0] sm:$0xff]
      %v5119 = vld [vmem:[%s5093 + $0xc8] sm:$0xff]
      %v5120 = vld [vmem:[%s5093 + $0xd0] sm:$0xff]
      %v5121 = vld [vmem:[%s5093 + $0xd8] sm:$0xff]
      %v5122 = vld [vmem:[%s5093 + $0xe0] sm:$0xff]
      %v5123 = vld [vmem:[%s5093 + $0xe8] sm:$0xff]
      %v5124 = vld [vmem:[%s5093 + $0xf0] sm:$0xff]
      %v5125 = vld [vmem:[%s5093 + $0xf8] sm:$0xff]
      %5126 = vmatprep.subr.mxu0 0.0
      %5127 = vmatpush1.msra.mxu0 %v5094
      %5128 = vmatprep.subr.mxu0 0.0
      %5129 = vmatpush1.msra.mxu0 %v5095
      %5130 = vmatprep.subr.mxu0 0.0
      %5131 = vmatpush1.msra.mxu0 %v5096
      %5132 = vmatprep.subr.mxu0 0.0
      %5133 = vmatpush1.msra.mxu0 %v5097
      %5134 = vmatprep.subr.mxu0 0.0
      %5135 = vmatpush1.msra.mxu0 %v5098
      %5136 = vmatprep.subr.mxu0 0.0
      %5137 = vmatpush1.msra.mxu0 %v5099
      %5138 = vmatprep.subr.mxu0 0.0
      %5139 = vmatpush1.msra.mxu0 %v5100
      %5140 = vmatprep.subr.mxu0 0.0
      %5141 = vmatpush1.msra.mxu0 %v5101
      %5142 = vmatprep.subr.mxu0 0.0
      %5143 = vmatpush1.msra.mxu0 %v5102
      %5144 = vmatprep.subr.mxu0 0.0
      %5145 = vmatpush1.msra.mxu0 %v5103
      %5146 = vmatprep.subr.mxu0 0.0
      %5147 = vmatpush1.msra.mxu0 %v5104
      %5148 = vmatprep.subr.mxu0 0.0
      %5149 = vmatpush1.msra.mxu0 %v5105
      %5150 = vmatprep.subr.mxu0 0.0
      %5151 = vmatpush1.msra.mxu0 %v5106
      %5152 = vmatprep.subr.mxu0 0.0
      %5153 = vmatpush1.msra.mxu0 %v5107
      %5154 = vmatprep.subr.mxu0 0.0
      %5155 = vmatpush1.msra.mxu0 %v5108
      %5156 = vmatprep.subr.mxu0 0.0
      %5157 = vmatpush1.msra.mxu0 %v5109
      %5158 = vmatprep.subr.mxu0 0.0
      %5159 = vmatpush1.msra.mxu0 %v5110
      %5160 = vmatprep.subr.mxu0 0.0
      %5161 = vmatpush1.msra.mxu0 %v5111
      %5162 = vmatprep.subr.mxu0 0.0
      %5163 = vmatpush1.msra.mxu0 %v5112
      %5164 = vmatprep.subr.mxu0 0.0
      %5165 = vmatpush1.msra.mxu0 %v5113
      %5166 = vmatprep.subr.mxu0 0.0
      %5167 = vmatpush1.msra.mxu0 %v5114
      %5168 = vmatprep.subr.mxu0 0.0
      %5169 = vmatpush1.msra.mxu0 %v5115
      %5170 = vmatprep.subr.mxu0 0.0
      %5171 = vmatpush1.msra.mxu0 %v5116
      %5172 = vmatprep.subr.mxu0 0.0
      %5173 = vmatpush1.msra.mxu0 %v5117
      %5174 = vmatprep.subr.mxu0 0.0
      %5175 = vmatpush1.msra.mxu0 %v5118
      %5176 = vmatprep.subr.mxu0 0.0
      %5177 = vmatpush1.msra.mxu0 %v5119
      %5178 = vmatprep.subr.mxu0 0.0
      %5179 = vmatpush1.msra.mxu0 %v5120
      %5180 = vmatprep.subr.mxu0 0.0
      %5181 = vmatpush1.msra.mxu0 %v5121
      %5182 = vmatprep.subr.mxu0 0.0
      %5183 = vmatpush1.msra.mxu0 %v5122
      %5184 = vmatprep.subr.mxu0 0.0
      %5185 = vmatpush1.msra.mxu0 %v5123
      %5186 = vmatprep.subr.mxu0 0.0
      %5187 = vmatpush1.msra.mxu0 %v5124
      %5188 = vmatprep.subr.mxu0 0.0
      %5189 = vmatpush1.msra.mxu0 %v5125
      %5190 = vmatprep.mubr.f32.mxu0 %v4990
      %5191 = vmatmul.mubr.f32.gmra.mrb[0].mxu0 %v4989
      %v5192 = vpop.f32.mrb[0].mxu0
      %v5193 = vadd.f32 0.0, %v5192
      %v5194 = vpop.f32.mrb[0].mxu0
      %5195 = vdwg.mxu0
      %v5196 = vmax.f32 %v5090, %v5193
      %s5197 = scalar_lea.vmem %s9, 512
      %v5198 = vld [vmem:[%s5197] sm:$0xff]
      %v5199 = vld [vmem:[%s5197 + $0x8] sm:$0xff]
      %v5200 = vld [vmem:[%s5197 + $0x10] sm:$0xff]
      %v5201 = vld [vmem:[%s5197 + $0x18] sm:$0xff]
      %v5202 = vld [vmem:[%s5197 + $0x20] sm:$0xff]
      %v5203 = vld [vmem:[%s5197 + $0x28] sm:$0xff]
      %v5204 = vld [vmem:[%s5197 + $0x30] sm:$0xff]
      %v5205 = vld [vmem:[%s5197 + $0x38] sm:$0xff]
      %v5206 = vld [vmem:[%s5197 + $0x40] sm:$0xff]
      %v5207 = vld [vmem:[%s5197 + $0x48] sm:$0xff]
      %v5208 = vld [vmem:[%s5197 + $0x50] sm:$0xff]
      %v5209 = vld [vmem:[%s5197 + $0x58] sm:$0xff]
      %v5210 = vld [vmem:[%s5197 + $0x60] sm:$0xff]
      %v5211 = vld [vmem:[%s5197 + $0x68] sm:$0xff]
      %v5212 = vld [vmem:[%s5197 + $0x70] sm:$0xff]
      %v5213 = vld [vmem:[%s5197 + $0x78] sm:$0xff]
      %v5214 = vld [vmem:[%s5197 + $0x80] sm:$0xff]
      %v5215 = vld [vmem:[%s5197 + $0x88] sm:$0xff]
      %v5216 = vld [vmem:[%s5197 + $0x90] sm:$0xff]
      %v5217 = vld [vmem:[%s5197 + $0x98] sm:$0xff]
      %v5218 = vld [vmem:[%s5197 + $0xa0] sm:$0xff]
      %v5219 = vld [vmem:[%s5197 + $0xa8] sm:$0xff]
      %v5220 = vld [vmem:[%s5197 + $0xb0] sm:$0xff]
      %v5221 = vld [vmem:[%s5197 + $0xb8] sm:$0xff]
      %v5222 = vld [vmem:[%s5197 + $0xc0] sm:$0xff]
      %v5223 = vld [vmem:[%s5197 + $0xc8] sm:$0xff]
      %v5224 = vld [vmem:[%s5197 + $0xd0] sm:$0xff]
      %v5225 = vld [vmem:[%s5197 + $0xd8] sm:$0xff]
      %v5226 = vld [vmem:[%s5197 + $0xe0] sm:$0xff]
      %v5227 = vld [vmem:[%s5197 + $0xe8] sm:$0xff]
      %v5228 = vld [vmem:[%s5197 + $0xf0] sm:$0xff]
      %v5229 = vld [vmem:[%s5197 + $0xf8] sm:$0xff]
      %5230 = vmatprep.subr.mxu0 0.0
      %5231 = vmatpush1.msra.mxu0 %v5198
      %5232 = vmatprep.subr.mxu0 0.0
      %5233 = vmatpush1.msra.mxu0 %v5199
      %5234 = vmatprep.subr.mxu0 0.0
      %5235 = vmatpush1.msra.mxu0 %v5200
      %5236 = vmatprep.subr.mxu0 0.0
      %5237 = vmatpush1.msra.mxu0 %v5201
      %5238 = vmatprep.subr.mxu0 0.0
      %5239 = vmatpush1.msra.mxu0 %v5202
      %5240 = vmatprep.subr.mxu0 0.0
      %5241 = vmatpush1.msra.mxu0 %v5203
      %5242 = vmatprep.subr.mxu0 0.0
      %5243 = vmatpush1.msra.mxu0 %v5204
      %5244 = vmatprep.subr.mxu0 0.0
      %5245 = vmatpush1.msra.mxu0 %v5205
      %5246 = vmatprep.subr.mxu0 0.0
      %5247 = vmatpush1.msra.mxu0 %v5206
      %5248 = vmatprep.subr.mxu0 0.0
      %5249 = vmatpush1.msra.mxu0 %v5207
      %5250 = vmatprep.subr.mxu0 0.0
      %5251 = vmatpush1.msra.mxu0 %v5208
      %5252 = vmatprep.subr.mxu0 0.0
      %5253 = vmatpush1.msra.mxu0 %v5209
      %5254 = vmatprep.subr.mxu0 0.0
      %5255 = vmatpush1.msra.mxu0 %v5210
      %5256 = vmatprep.subr.mxu0 0.0
      %5257 = vmatpush1.msra.mxu0 %v5211
      %5258 = vmatprep.subr.mxu0 0.0
      %5259 = vmatpush1.msra.mxu0 %v5212
      %5260 = vmatprep.subr.mxu0 0.0
      %5261 = vmatpush1.msra.mxu0 %v5213
      %5262 = vmatprep.subr.mxu0 0.0
      %5263 = vmatpush1.msra.mxu0 %v5214
      %5264 = vmatprep.subr.mxu0 0.0
      %5265 = vmatpush1.msra.mxu0 %v5215
      %5266 = vmatprep.subr.mxu0 0.0
      %5267 = vmatpush1.msra.mxu0 %v5216
      %5268 = vmatprep.subr.mxu0 0.0
      %5269 = vmatpush1.msra.mxu0 %v5217
      %5270 = vmatprep.subr.mxu0 0.0
      %5271 = vmatpush1.msra.mxu0 %v5218
      %5272 = vmatprep.subr.mxu0 0.0
      %5273 = vmatpush1.msra.mxu0 %v5219
      %5274 = vmatprep.subr.mxu0 0.0
      %5275 = vmatpush1.msra.mxu0 %v5220
      %5276 = vmatprep.subr.mxu0 0.0
      %5277 = vmatpush1.msra.mxu0 %v5221
      %5278 = vmatprep.subr.mxu0 0.0
      %5279 = vmatpush1.msra.mxu0 %v5222
      %5280 = vmatprep.subr.mxu0 0.0
      %5281 = vmatpush1.msra.mxu0 %v5223
      %5282 = vmatprep.subr.mxu0 0.0
      %5283 = vmatpush1.msra.mxu0 %v5224
      %5284 = vmatprep.subr.mxu0 0.0
      %5285 = vmatpush1.msra.mxu0 %v5225
      %5286 = vmatprep.subr.mxu0 0.0
      %5287 = vmatpush1.msra.mxu0 %v5226
      %5288 = vmatprep.subr.mxu0 0.0
      %5289 = vmatpush1.msra.mxu0 %v5227
      %5290 = vmatprep.subr.mxu0 0.0
      %5291 = vmatpush1.msra.mxu0 %v5228
      %5292 = vmatprep.subr.mxu0 0.0
      %5293 = vmatpush1.msra.mxu0 %v5229
      %5294 = vmatprep.mubr.f32.mxu0 %v4990
      %5295 = vmatmul.mubr.f32.gmra.mrb[0].mxu0 %v4989
      %v5296 = vpop.f32.mrb[0].mxu0
      %v5297 = vadd.f32 0.0, %v5296
      %v5298 = vpop.f32.mrb[0].mxu0
      %5299 = vdwg.mxu0
      %v5300 = vmax.f32 %v5196, %v5297
      %s5301 = scalar_lea.vmem %s9, 768
      %v5302 = vld [vmem:[%s5301] sm:$0xff]
      %v5303 = vld [vmem:[%s5301 + $0x8] sm:$0xff]
      %v5304 = vld [vmem:[%s5301 + $0x10] sm:$0xff]
      %v5305 = vld [vmem:[%s5301 + $0x18] sm:$0xff]
      %v5306 = vld [vmem:[%s5301 + $0x20] sm:$0xff]
      %v5307 = vld [vmem:[%s5301 + $0x28] sm:$0xff]
      %v5308 = vld [vmem:[%s5301 + $0x30] sm:$0xff]
      %v5309 = vld [vmem:[%s5301 + $0x38] sm:$0xff]
      %v5310 = vld [vmem:[%s5301 + $0x40] sm:$0xff]
      %v5311 = vld [vmem:[%s5301 + $0x48] sm:$0xff]
      %v5312 = vld [vmem:[%s5301 + $0x50] sm:$0xff]
      %v5313 = vld [vmem:[%s5301 + $0x58] sm:$0xff]
      %v5314 = vld [vmem:[%s5301 + $0x60] sm:$0xff]
      %v5315 = vld [vmem:[%s5301 + $0x68] sm:$0xff]
      %v5316 = vld [vmem:[%s5301 + $0x70] sm:$0xff]
      %v5317 = vld [vmem:[%s5301 + $0x78] sm:$0xff]
      %v5318 = vld [vmem:[%s5301 + $0x80] sm:$0xff]
      %v5319 = vld [vmem:[%s5301 + $0x88] sm:$0xff]
      %v5320 = vld [vmem:[%s5301 + $0x90] sm:$0xff]
      %v5321 = vld [vmem:[%s5301 + $0x98] sm:$0xff]
      %v5322 = vld [vmem:[%s5301 + $0xa0] sm:$0xff]
      %v5323 = vld [vmem:[%s5301 + $0xa8] sm:$0xff]
      %v5324 = vld [vmem:[%s5301 + $0xb0] sm:$0xff]
      %v5325 = vld [vmem:[%s5301 + $0xb8] sm:$0xff]
      %v5326 = vld [vmem:[%s5301 + $0xc0] sm:$0xff]
      %v5327 = vld [vmem:[%s5301 + $0xc8] sm:$0xff]
      %v5328 = vld [vmem:[%s5301 + $0xd0] sm:$0xff]
      %v5329 = vld [vmem:[%s5301 + $0xd8] sm:$0xff]
      %v5330 = vld [vmem:[%s5301 + $0xe0] sm:$0xff]
      %v5331 = vld [vmem:[%s5301 + $0xe8] sm:$0xff]
      %v5332 = vld [vmem:[%s5301 + $0xf0] sm:$0xff]
      %v5333 = vld [vmem:[%s5301 + $0xf8] sm:$0xff]
      %5334 = vmatprep.subr.mxu0 0.0
      %5335 = vmatpush1.msra.mxu0 %v5302
      %5336 = vmatprep.subr.mxu0 0.0
      %5337 = vmatpush1.msra.mxu0 %v5303
      %5338 = vmatprep.subr.mxu0 0.0
      %5339 = vmatpush1.msra.mxu0 %v5304
      %5340 = vmatprep.subr.mxu0 0.0
      %5341 = vmatpush1.msra.mxu0 %v5305
      %5342 = vmatprep.subr.mxu0 0.0
      %5343 = vmatpush1.msra.mxu0 %v5306
      %5344 = vmatprep.subr.mxu0 0.0
      %5345 = vmatpush1.msra.mxu0 %v5307
      %5346 = vmatprep.subr.mxu0 0.0
      %5347 = vmatpush1.msra.mxu0 %v5308
      %5348 = vmatprep.subr.mxu0 0.0
      %5349 = vmatpush1.msra.mxu0 %v5309
      %5350 = vmatprep.subr.mxu0 0.0
      %5351 = vmatpush1.msra.mxu0 %v5310
      %5352 = vmatprep.subr.mxu0 0.0
      %5353 = vmatpush1.msra.mxu0 %v5311
      %5354 = vmatprep.subr.mxu0 0.0
      %5355 = vmatpush1.msra.mxu0 %v5312
      %5356 = vmatprep.subr.mxu0 0.0
      %5357 = vmatpush1.msra.mxu0 %v5313
      %5358 = vmatprep.subr.mxu0 0.0
      %5359 = vmatpush1.msra.mxu0 %v5314
      %5360 = vmatprep.subr.mxu0 0.0
      %5361 = vmatpush1.msra.mxu0 %v5315
      %5362 = vmatprep.subr.mxu0 0.0
      %5363 = vmatpush1.msra.mxu0 %v5316
      %5364 = vmatprep.subr.mxu0 0.0
      %5365 = vmatpush1.msra.mxu0 %v5317
      %5366 = vmatprep.subr.mxu0 0.0
      %5367 = vmatpush1.msra.mxu0 %v5318
      %5368 = vmatprep.subr.mxu0 0.0
      %5369 = vmatpush1.msra.mxu0 %v5319
      %5370 = vmatprep.subr.mxu0 0.0
      %5371 = vmatpush1.msra.mxu0 %v5320
      %5372 = vmatprep.subr.mxu0 0.0
      %5373 = vmatpush1.msra.mxu0 %v5321
      %5374 = vmatprep.subr.mxu0 0.0
      %5375 = vmatpush1.msra.mxu0 %v5322
      %5376 = vmatprep.subr.mxu0 0.0
      %5377 = vmatpush1.msra.mxu0 %v5323
      %5378 = vmatprep.subr.mxu0 0.0
      %5379 = vmatpush1.msra.mxu0 %v5324
      %5380 = vmatprep.subr.mxu0 0.0
      %5381 = vmatpush1.msra.mxu0 %v5325
      %5382 = vmatprep.subr.mxu0 0.0
      %5383 = vmatpush1.msra.mxu0 %v5326
      %5384 = vmatprep.subr.mxu0 0.0
      %5385 = vmatpush1.msra.mxu0 %v5327
      %5386 = vmatprep.subr.mxu0 0.0
      %5387 = vmatpush1.msra.mxu0 %v5328
      %5388 = vmatprep.subr.mxu0 0.0
      %5389 = vmatpush1.msra.mxu0 %v5329
      %5390 = vmatprep.subr.mxu0 0.0
      %5391 = vmatpush1.msra.mxu0 %v5330
      %5392 = vmatprep.subr.mxu0 0.0
      %5393 = vmatpush1.msra.mxu0 %v5331
      %5394 = vmatprep.subr.mxu0 0.0
      %5395 = vmatpush1.msra.mxu0 %v5332
      %5396 = vmatprep.subr.mxu0 0.0
      %5397 = vmatpush1.msra.mxu0 %v5333
      %5398 = vmatprep.mubr.f32.mxu0 %v4990
      %5399 = vmatmul.mubr.f32.gmra.mrb[0].mxu0 %v4989
      %v5400 = vpop.f32.mrb[0].mxu0
      %v5401 = vadd.f32 0.0, %v5400
      %v5402 = vpop.f32.mrb[0].mxu0
      %5403 = vdwg.mxu0
      %v5404 = vmax.f32 %v5300, %v5401
      %vm5405 = vcmask 523264
      %5406 = vst.msk [vmem:[%s357] sm:$0xff] %vm5405, %v5404
      %p5407 = scmp.lt.s32.totalorder %s21, 1
      %s5408 = scalar_select %p5407, %s21, 1
      %s5409 = smul.addr %s5408, 8
      %s5410 = scalar_lea.vmem %s10, %s5409
      // Predicated region
      $region61: #{embedding_block_forward.1} parent=59 // pred_check
        %p5411 = pneg %p254
      $region62: #{embedding_block_forward.1} parent=59 // pred_check_branch
        %5413 = sbr.rel (%p5411) target = $region64
      $region63: #{embedding_block_forward.1} parent=59 // pred_region
        _
      $region64: #{embedding_block_forward.1} parent=59 // pred_fallthru
        _
    $region60: #{embedding_block_forward.1} parent=5 // pred_fallthru
      _
    %p5414 = scmp.le.s32.totalorder 2, %s16
    // Predicated region
    $region65: #{embedding_block_forward.1} parent=5 // pred_check
      %p5415 = pneg %p5414
    $region66: #{embedding_block_forward.1} parent=5 // pred_check_branch
      %5417 = sbr.rel (%p5415) target = $region68
    $region67: #{embedding_block_forward.1} parent=5 // pred_region
      %s5418 = ssub.s32 %s16, 2
      // Predicated region
      $region69: #{embedding_block_forward.1} parent=67 // pred_check
        %p5419 = pneg %p260
      $region70: #{embedding_block_forward.1} parent=67 // pred_check_branch
        %5421 = sbr.rel (%p5419) target = $region72
      $region71: #{embedding_block_forward.1} parent=67 // pred_region
        %p5422 = scmp.lt.s32.totalorder %s22, 1
        %s5423 = scalar_select %p5422, %s22, 1
        %s5424 = smul.addr %s5423, 8
        %s5425 = scalar_lea.vmem %s10, %s5424
      $region72: #{embedding_block_forward.1} parent=67 // pred_fallthru
        _
    $region68: #{embedding_block_forward.1} parent=5 // pred_fallthru
      _
  $region6: #{embedding_block_forward.1} parent=0 // loop_footer
    %s20 = sadd.s32 1, %s16
  $region7: #{embedding_block_forward.1} parent=0 // loop_footer_branch
    %15 = sbr.rel target = $region3
  $region8: #{embedding_block_forward.1} parent=0 // loop_exit
    _

</llo_original>
